<compile_context>
chip_gen: v7x
topology: tpu7x:2x2x1
jax: 0.10.0
libtpu: 0.0.40
codegen_flags: <defaults>
</compile_context>

<pallas_src>
import math

import jax
import jax.numpy as jnp
from jax.experimental import pallas as pl
from jax.experimental.pallas import tpu as pltpu


def _autopad(k, p=None, d=1):
    if d > 1:
        k = d * (k - 1) + 1 if isinstance(k, int) else [d * (x - 1) + 1 for x in k]
    if p is None:
        p = k // 2 if isinstance(k, int) else [x // 2 for x in k]
    return p


def _round_up(x, m):
    return ((x + m - 1) // m) * m


# ----------------------- parameter preparation (run once) -----------------------
def prepare_conv_bn_params(weight, gamma, beta, run_mean, run_var, eps=1e-5):
    """Fold eval-mode BatchNorm into the conv weight, pad C_out to a lane-dense
    multiple of 128 and cast to bf16.  Done once at parameter-load time."""
    c_out, c_in, kh, kw = weight.shape
    assert kh == kw, "only square kernels supported"
    inv_std = 1.0 / jnp.sqrt(run_var.astype(jnp.float32) + eps)
    scale = gamma.astype(jnp.float32) * inv_std                       # (C_out,)
    shift = beta.astype(jnp.float32) - run_mean.astype(jnp.float32) * scale
    c_out_pad = _round_up(c_out, 128)
    w = jnp.transpose(weight.astype(jnp.float32), (2, 3, 1, 0))       # (kh,kw,Cin,Cout)
    w = (w * scale).reshape(kh * kw, c_in, c_out)                     # fold BN scale
    w = jnp.pad(w, ((0, 0), (0, 0), (0, c_out_pad - c_out))).astype(jnp.bfloat16)
    shift = jnp.pad(shift.reshape(1, c_out), ((0, 0), (0, c_out_pad - c_out)))
    return w, shift                                                   # bf16, f32


# --------------------------------- Pallas kernel ---------------------------------
def _make_conv_bn_silu_kernel(k, s, halo, tr, w_out, c_in, c_out_pad):
    """Kernel factory.  One grid step computes `tr` output rows of one image:
    builds the k*k shifted patches from the haloed input tile (in-VMEM im2col),
    does k*k small GEMMs against the resident folded weight, applies BN shift +
    SiLU in f32 and stores a bf16 lane-dense NHWC tile."""

    def _body(x_full, w_ref, shift_ref, o_ref):
        acc = jnp.zeros((tr * w_out, c_out_pad), jnp.float32)
        for ki in range(k):
            for kj in range(k):
                if s == 1:
                    patch = x_full[ki:ki + tr, kj:kj + w_out, :]
                else:
                    patch = x_full[ki:ki + (tr - 1) * s + 1:s,
                                   kj:kj + (w_out - 1) * s + 1:s, :]
                patch = patch.reshape(tr * w_out, c_in)
                acc = acc + jnp.dot(patch, w_ref[ki * k + kj],
                                    preferred_element_type=jnp.float32)
        y = acc + shift_ref[...]                    # BN affine (scale folded into W)
        y = y * jax.nn.sigmoid(y)                   # SiLU, f32 epilogue
        o_ref[...] = y.reshape(1, tr, w_out, c_out_pad).astype(o_ref.dtype)

    if halo > 0:
        def kernel(x0_ref, x1_ref, w_ref, shift_ref, o_ref):
            # current row block + first `halo` rows of the next block
            x_full = jnp.concatenate([x0_ref[0], x1_ref[0, :halo]], axis=0)
            _body(x_full, w_ref, shift_ref, o_ref)
    else:
        def kernel(x0_ref, w_ref, shift_ref, o_ref):
            _body(x0_ref[0], w_ref, shift_ref, o_ref)
    return kernel


def _vmem_budget_bytes(n_x_refs, tr_in, w_p, c_in, taps, c_out_pad, tr, w_out):
    """Rough resident-VMEM estimate (tiled-layout padded), for vmem_limit_bytes."""
    def tile(rows, cols, itemsize):
        return _round_up(max(rows, 1), 8) * _round_up(max(cols, 1), 128) * itemsize
    x_tile = tr_in * tile(w_p, c_in, 2)             # bf16 input rows
    w_bytes = taps * tile(c_in, c_out_pad, 2)       # resident folded weight
    o_tile = tr * tile(w_out, c_out_pad, 2)         # bf16 output tile
    acc = tile(tr * w_out, c_out_pad, 4)            # f32 accumulator + temporaries
    return 2 * n_x_refs * x_tile + w_bytes + 2 * o_tile + 3 * acc + tile(1, c_out_pad, 4)


# ------------------------------------ wrapper ------------------------------------
def conv_bn_silu(x_nchw, w_folded, bn_shift, *, c_out, k, s=1, p=None, d=1,
                 target_pixels=512):
    """Forward of Conv(c1, c2, k, s): SiLU(BN(Conv2d(x))), BN in eval mode.

    x_nchw: (N, C_in, H, W).  w_folded/bn_shift come from prepare_conv_bn_params.
    Returns (N, C_out, H_out, W_out) float32 (module semantics).
    """
    assert d == 1, "dilation > 1 not implemented"   # TODO(synk): dilated convs
    p = _autopad(k, p, d)
    N, c_in, H, W = x_nchw.shape
    taps, c_in_w, c_out_pad = w_folded.shape
    assert taps == k * k and c_in_w == c_in, "weight does not match (k, C_in)"
    assert c_out <= c_out_pad

    H_out = (H + 2 * p - k) // s + 1
    W_out = (W + 2 * p - k) // s + 1
    halo = max(k - s, 0)                            # extra input rows per row block

    # Row-block size: ~target_pixels GEMM rows per grid step, capped at the image.
    tr = max(1, min(H_out, max(1, target_pixels // max(W_out, 1))))
    n_rb = pl.cdiv(H_out, tr)
    tr_in = tr * s
    n_in_blocks = n_rb + (1 if halo > 0 else 0)     # +1 zero block for halo indexing
    H_p = _round_up(max(n_in_blocks * tr_in, H + 2 * p), tr_in)
    W_p = W + 2 * p

    # Glue: NCHW -> NHWC bf16, spatial zero-pad (top/left = p, bottom to H_p).
    # TODO(synk): keep activations NHWC bf16 across the whole HGNetV2 block to
    # drop both wrapper transposes and the final f32 cast.
    x = jnp.transpose(x_nchw, (0, 2, 3, 1)).astype(jnp.bfloat16)
    x = jnp.pad(x, ((0, 0), (p, H_p - H - p), (p, p), (0, 0)))

    # Input specs: current row block (+ next block for the halo rows).
    x_spec = pl.BlockSpec((1, tr_in, W_p, c_in), lambda n, j: (n, j, 0, 0))
    in_specs = [x_spec]
    operands = [x]
    if halo > 0:
        in_specs.append(pl.BlockSpec((1, tr_in, W_p, c_in),
                                     lambda n, j: (n, j + 1, 0, 0)))
        operands.append(x)
    # Folded weight + shift: constant index_map -> single DMA, resident in VMEM.
    # TODO(synk): add a C_out "parallel" grid axis / weight tiling for very deep
    # stages where taps*C_in*C_out_pad*2B no longer fits comfortably in VMEM.
    in_specs += [
        pl.BlockSpec((taps, c_in, c_out_pad), lambda n, j: (0, 0, 0)),
        pl.BlockSpec((1, c_out_pad), lambda n, j: (0, 0)),
    ]
    operands += [w_folded, bn_shift]

    kernel = _make_conv_bn_silu_kernel(k, s, halo, tr, W_out, c_in, c_out_pad)

    est = _vmem_budget_bytes(len(operands) - 2, tr_in, W_p, c_in, taps,
                             c_out_pad, tr, W_out)
    vmem_limit = None
    if est > (12 << 20):                            # above v5e's 16 MiB default margin
        vmem_limit = int(min(_round_up(est + (4 << 20), 1 << 20), 56 << 20))

    out = pl.pallas_call(
        kernel,
        out_shape=jax.ShapeDtypeStruct((N, n_rb * tr, W_out, c_out_pad), jnp.bfloat16),
        grid_spec=pltpu.PrefetchScalarGridSpec(
            num_scalar_prefetch=0,
            grid=(N, n_rb),
            in_specs=in_specs,
            out_specs=pl.BlockSpec((1, tr, W_out, c_out_pad),
                                   lambda n, j: (n, j, 0, 0)),
        ),
        compiler_params=pltpu.CompilerParams(
            dimension_semantics=("parallel", "parallel"),
            vmem_limit_bytes=vmem_limit),
    )(*operands)

    out = out[:, :H_out, :, :c_out]                 # drop row / lane padding
    return jnp.transpose(out, (0, 3, 1, 2)).astype(jnp.float32)   # back to NCHW f32


# --------------------------- pure-JAX references ---------------------------
def _reference_f32(x_nchw, weight, gamma, beta, run_mean, run_var, k, s, p, eps=1e-5):
    """Full-precision module semantics: SiLU(BN(Conv2d(x)))."""
    y = jax.lax.conv_general_dilated(
        x_nchw.astype(jnp.float32), weight.astype(jnp.float32),
        window_strides=(s, s), padding=[(p, p), (p, p)],
        dimension_numbers=("NCHW", "OIHW", "NCHW"),
        precision=jax.lax.Precision.HIGHEST)
    scale = (gamma / jnp.sqrt(run_var + eps)).reshape(1, -1, 1, 1)
    shift = (beta - run_mean * gamma / jnp.sqrt(run_var + eps)).reshape(1, -1, 1, 1)
    y = y * scale + shift
    return y * jax.nn.sigmoid(y)


def _reference_quantized(x_nchw, weight, gamma, beta, run_mean, run_var, k, s, p,
                         eps=1e-5):
    """Same bf16 operand / bf16-output quantization as the kernel (tight check)."""
    inv_std = 1.0 / jnp.sqrt(run_var.astype(jnp.float32) + eps)
    scale = gamma.astype(jnp.float32) * inv_std
    shift = (beta.astype(jnp.float32)
             - run_mean.astype(jnp.float32) * scale).reshape(1, -1, 1, 1)
    w_folded = (weight.astype(jnp.float32) * scale.reshape(-1, 1, 1, 1)
                ).astype(jnp.bfloat16).astype(jnp.float32)
    x_q = x_nchw.astype(jnp.bfloat16).astype(jnp.float32)
    y = jax.lax.conv_general_dilated(
        x_q, w_folded, window_strides=(s, s), padding=[(p, p), (p, p)],
        dimension_numbers=("NCHW", "OIHW", "NCHW"),
        precision=jax.lax.Precision.HIGHEST)
    y = y + shift
    y = y * jax.nn.sigmoid(y)
    return y.astype(jnp.bfloat16).astype(jnp.float32)


if __name__ == "__main__":
    key = jax.random.PRNGKey(0)
    kp1, kp2, kx1, kx2 = jax.random.split(key, 4)

    def make_params(pkey, c_in, c_out, k):
        kw, kg, kb, km, kv = jax.random.split(pkey, 5)
        bound = 1.0 / math.sqrt(c_in * k * k)
        weight = jax.random.uniform(kw, (c_out, c_in, k, k), jnp.float32, -bound, bound)
        gamma = jax.random.uniform(kg, (c_out,), jnp.float32, 0.5, 1.5)
        beta = jax.random.uniform(kb, (c_out,), jnp.float32, -0.5, 0.5)
        run_mean = jax.random.uniform(km, (c_out,), jnp.float32, -0.5, 0.5)
        run_var = jax.random.uniform(kv, (c_out,), jnp.float32, 0.5, 1.5)
        return weight, gamma, beta, run_mean, run_var

    # (c_in, c_out, k, s, N, H, W): Conv(4,8,k=3,s=1) and a pointwise Conv(8,16,k=1)
    cases = [
        (4, 8, 3, 1, 2, 16, 16, kp1, kx1),
        (8, 16, 1, 1, 2, 16, 16, kp2, kx2),
    ]
    for c_in, c_out, k, s, N, H, W, pkey, xkey in cases:
        p = _autopad(k, None, 1)
        weight, gamma, beta, rm, rv = make_params(pkey, c_in, c_out, k)
        x = jax.random.normal(xkey, (N, c_in, H, W), jnp.float32)

        # parameter prep is done once (not per forward call)
        w_folded, bn_shift = prepare_conv_bn_params(weight, gamma, beta, rm, rv)

        out = conv_bn_silu(x, w_folded, bn_shift, c_out=c_out, k=k, s=s)
        out = jax.block_until_ready(out)

        ref_q = _reference_quantized(x, weight, gamma, beta, rm, rv, k, s, p)
        ref_f = _reference_f32(x, weight, gamma, beta, rm, rv, k, s, p)
        assert out.shape == ref_f.shape, f"shape mismatch {out.shape} vs {ref_f.shape}"
        # tight: identical bf16 quantization path -> accumulation-order / final
        # bf16-rounding noise only
        assert jnp.allclose(out, ref_q, rtol=2e-2, atol=2e-2), \
            f"mismatch vs bf16-quantized reference (k={k})"
        # loose: full f32 module semantics (bf16 operand/output precision budget)
        assert jnp.allclose(out, ref_f, rtol=3e-2, atol=3e-2), \
            f"mismatch vs f32 reference (k={k})"

    print("KERNEL_OK")
</pallas_src>

<mosaic_0001>
module attributes {stable_mosaic.version = 11 : i64} {
  func.func @kernel(%arg0: i32, %arg1: i32, %arg2: memref<1x16x18x4xbf16, #tpu.memory_space<vmem>>, %arg3: memref<1x16x18x4xbf16, #tpu.memory_space<vmem>>, %arg4: memref<9x4x128xbf16, #tpu.memory_space<vmem>>, %arg5: memref<1x128xf32, #tpu.memory_space<vmem>>, %arg6: memref<1x16x16x128xbf16, #tpu.memory_space<vmem>>) attributes {dimension_semantics = [#tpu.dimension_semantics<parallel>, #tpu.dimension_semantics<parallel>], iteration_bounds = array<i64: 2, 1>, scalar_prefetch = 0 : i64, scratch_operands = 0 : i64, tpu.core_type = #tpu.core_type<tc>, window_params = [{transform_indices = @transform_0, window_bounds = array<i64: 1, 16, 18, 4>}, {transform_indices = @transform_1, window_bounds = array<i64: 1, 16, 18, 4>}, {pipeline_mode = #tpu.pipeline_mode<synchronous>, transform_indices = @transform_2, window_bounds = array<i64: 9, 4, 128>}, {pipeline_mode = #tpu.pipeline_mode<synchronous>, transform_indices = @transform_3, window_bounds = array<i64: 1, 128>}, {transform_indices = @transform_4, window_bounds = array<i64: 1, 16, 16, 128>}]} {
    %c0 = arith.constant 0 : index
    %c0_0 = arith.constant 0 : index
    %c0_1 = arith.constant 0 : index
    %c0_2 = arith.constant 0 : index
    %0 = vector.load %arg2[%c0, %c0_0, %c0_1, %c0_2] : memref<1x16x18x4xbf16, #tpu.memory_space<vmem>>, vector<1x16x18x4xbf16>
    %1 = vector.shape_cast %0 : vector<1x16x18x4xbf16> to vector<16x18x4xbf16>
    %c0_3 = arith.constant 0 : index
    %c0_4 = arith.constant 0 : index
    %c0_5 = arith.constant 0 : index
    %c0_6 = arith.constant 0 : index
    %2 = vector.load %arg3[%c0_3, %c0_4, %c0_5, %c0_6] : memref<1x16x18x4xbf16, #tpu.memory_space<vmem>>, vector<1x2x18x4xbf16>
    %3 = vector.shape_cast %2 : vector<1x2x18x4xbf16> to vector<2x18x4xbf16>
    %4 = tpu.concatenate %1, %3 in 0 : vector<16x18x4xbf16>, vector<2x18x4xbf16> -> vector<18x18x4xbf16>
    %cst = arith.constant 0.000000e+00 : f32
    %5 = vector.broadcast %cst : f32 to vector<256x128xf32>
    %6 = vector.extract_strided_slice %4 {offsets = [0, 0, 0], sizes = [16, 16, 4], strides = [1, 1, 1]} : vector<18x18x4xbf16> to vector<16x16x4xbf16>
    %7 = vector.shape_cast %6 : vector<16x16x4xbf16> to vector<256x4xbf16>
    %c0_7 = arith.constant 0 : index
    %c0_8 = arith.constant 0 : index
    %c0_9 = arith.constant 0 : index
    %8 = vector.load %arg4[%c0_7, %c0_8, %c0_9] : memref<9x4x128xbf16, #tpu.memory_space<vmem>>, vector<1x4x128xbf16>
    %9 = vector.shape_cast %8 : vector<1x4x128xbf16> to vector<4x128xbf16>
    %cst_10 = arith.constant dense<0.000000e+00> : vector<256x128xf32>
    %10 = tpu.matmul %7, %9, %cst_10 {dimension_numbers = #tpu.dot_dimension_numbers<[1], [0], [0], [1], [0, 0, 1, 1], [], []>} : vector<256x4xbf16>, vector<4x128xbf16>, vector<256x128xf32> -> vector<256x128xf32>
    %11 = arith.addf %5, %10 : vector<256x128xf32>
    %12 = vector.extract_strided_slice %4 {offsets = [0, 1, 0], sizes = [16, 16, 4], strides = [1, 1, 1]} : vector<18x18x4xbf16> to vector<16x16x4xbf16>
    %13 = vector.shape_cast %12 : vector<16x16x4xbf16> to vector<256x4xbf16>
    %c1 = arith.constant 1 : index
    %c0_11 = arith.constant 0 : index
    %c0_12 = arith.constant 0 : index
    %14 = vector.load %arg4[%c1, %c0_11, %c0_12] : memref<9x4x128xbf16, #tpu.memory_space<vmem>>, vector<1x4x128xbf16>
    %15 = vector.shape_cast %14 : vector<1x4x128xbf16> to vector<4x128xbf16>
    %cst_13 = arith.constant dense<0.000000e+00> : vector<256x128xf32>
    %16 = tpu.matmul %13, %15, %cst_13 {dimension_numbers = #tpu.dot_dimension_numbers<[1], [0], [0], [1], [0, 0, 1, 1], [], []>} : vector<256x4xbf16>, vector<4x128xbf16>, vector<256x128xf32> -> vector<256x128xf32>
    %17 = arith.addf %11, %16 : vector<256x128xf32>
    %18 = vector.extract_strided_slice %4 {offsets = [0, 2, 0], sizes = [16, 16, 4], strides = [1, 1, 1]} : vector<18x18x4xbf16> to vector<16x16x4xbf16>
    %19 = vector.shape_cast %18 : vector<16x16x4xbf16> to vector<256x4xbf16>
    %c2 = arith.constant 2 : index
    %c0_14 = arith.constant 0 : index
    %c0_15 = arith.constant 0 : index
    %20 = vector.load %arg4[%c2, %c0_14, %c0_15] : memref<9x4x128xbf16, #tpu.memory_space<vmem>>, vector<1x4x128xbf16>
    %21 = vector.shape_cast %20 : vector<1x4x128xbf16> to vector<4x128xbf16>
    %cst_16 = arith.constant dense<0.000000e+00> : vector<256x128xf32>
    %22 = tpu.matmul %19, %21, %cst_16 {dimension_numbers = #tpu.dot_dimension_numbers<[1], [0], [0], [1], [0, 0, 1, 1], [], []>} : vector<256x4xbf16>, vector<4x128xbf16>, vector<256x128xf32> -> vector<256x128xf32>
    %23 = arith.addf %17, %22 : vector<256x128xf32>
    %24 = vector.extract_strided_slice %4 {offsets = [1, 0, 0], sizes = [16, 16, 4], strides = [1, 1, 1]} : vector<18x18x4xbf16> to vector<16x16x4xbf16>
    %25 = vector.shape_cast %24 : vector<16x16x4xbf16> to vector<256x4xbf16>
    %c3 = arith.constant 3 : index
    %c0_17 = arith.constant 0 : index
    %c0_18 = arith.constant 0 : index
    %26 = vector.load %arg4[%c3, %c0_17, %c0_18] : memref<9x4x128xbf16, #tpu.memory_space<vmem>>, vector<1x4x128xbf16>
    %27 = vector.shape_cast %26 : vector<1x4x128xbf16> to vector<4x128xbf16>
    %cst_19 = arith.constant dense<0.000000e+00> : vector<256x128xf32>
    %28 = tpu.matmul %25, %27, %cst_19 {dimension_numbers = #tpu.dot_dimension_numbers<[1], [0], [0], [1], [0, 0, 1, 1], [], []>} : vector<256x4xbf16>, vector<4x128xbf16>, vector<256x128xf32> -> vector<256x128xf32>
    %29 = arith.addf %23, %28 : vector<256x128xf32>
    %30 = vector.extract_strided_slice %4 {offsets = [1, 1, 0], sizes = [16, 16, 4], strides = [1, 1, 1]} : vector<18x18x4xbf16> to vector<16x16x4xbf16>
    %31 = vector.shape_cast %30 : vector<16x16x4xbf16> to vector<256x4xbf16>
    %c4 = arith.constant 4 : index
    %c0_20 = arith.constant 0 : index
    %c0_21 = arith.constant 0 : index
    %32 = vector.load %arg4[%c4, %c0_20, %c0_21] : memref<9x4x128xbf16, #tpu.memory_space<vmem>>, vector<1x4x128xbf16>
    %33 = vector.shape_cast %32 : vector<1x4x128xbf16> to vector<4x128xbf16>
    %cst_22 = arith.constant dense<0.000000e+00> : vector<256x128xf32>
    %34 = tpu.matmul %31, %33, %cst_22 {dimension_numbers = #tpu.dot_dimension_numbers<[1], [0], [0], [1], [0, 0, 1, 1], [], []>} : vector<256x4xbf16>, vector<4x128xbf16>, vector<256x128xf32> -> vector<256x128xf32>
    %35 = arith.addf %29, %34 : vector<256x128xf32>
    %36 = vector.extract_strided_slice %4 {offsets = [1, 2, 0], sizes = [16, 16, 4], strides = [1, 1, 1]} : vector<18x18x4xbf16> to vector<16x16x4xbf16>
    %37 = vector.shape_cast %36 : vector<16x16x4xbf16> to vector<256x4xbf16>
    %c5 = arith.constant 5 : index
    %c0_23 = arith.constant 0 : index
    %c0_24 = arith.constant 0 : index
    %38 = vector.load %arg4[%c5, %c0_23, %c0_24] : memref<9x4x128xbf16, #tpu.memory_space<vmem>>, vector<1x4x128xbf16>
    %39 = vector.shape_cast %38 : vector<1x4x128xbf16> to vector<4x128xbf16>
    %cst_25 = arith.constant dense<0.000000e+00> : vector<256x128xf32>
    %40 = tpu.matmul %37, %39, %cst_25 {dimension_numbers = #tpu.dot_dimension_numbers<[1], [0], [0], [1], [0, 0, 1, 1], [], []>} : vector<256x4xbf16>, vector<4x128xbf16>, vector<256x128xf32> -> vector<256x128xf32>
    %41 = arith.addf %35, %40 : vector<256x128xf32>
    %42 = vector.extract_strided_slice %4 {offsets = [2, 0, 0], sizes = [16, 16, 4], strides = [1, 1, 1]} : vector<18x18x4xbf16> to vector<16x16x4xbf16>
    %43 = vector.shape_cast %42 : vector<16x16x4xbf16> to vector<256x4xbf16>
    %c6 = arith.constant 6 : index
    %c0_26 = arith.constant 0 : index
    %c0_27 = arith.constant 0 : index
    %44 = vector.load %arg4[%c6, %c0_26, %c0_27] : memref<9x4x128xbf16, #tpu.memory_space<vmem>>, vector<1x4x128xbf16>
    %45 = vector.shape_cast %44 : vector<1x4x128xbf16> to vector<4x128xbf16>
    %cst_28 = arith.constant dense<0.000000e+00> : vector<256x128xf32>
    %46 = tpu.matmul %43, %45, %cst_28 {dimension_numbers = #tpu.dot_dimension_numbers<[1], [0], [0], [1], [0, 0, 1, 1], [], []>} : vector<256x4xbf16>, vector<4x128xbf16>, vector<256x128xf32> -> vector<256x128xf32>
    %47 = arith.addf %41, %46 : vector<256x128xf32>
    %48 = vector.extract_strided_slice %4 {offsets = [2, 1, 0], sizes = [16, 16, 4], strides = [1, 1, 1]} : vector<18x18x4xbf16> to vector<16x16x4xbf16>
    %49 = vector.shape_cast %48 : vector<16x16x4xbf16> to vector<256x4xbf16>
    %c7 = arith.constant 7 : index
    %c0_29 = arith.constant 0 : index
    %c0_30 = arith.constant 0 : index
    %50 = vector.load %arg4[%c7, %c0_29, %c0_30] : memref<9x4x128xbf16, #tpu.memory_space<vmem>>, vector<1x4x128xbf16>
    %51 = vector.shape_cast %50 : vector<1x4x128xbf16> to vector<4x128xbf16>
    %cst_31 = arith.constant dense<0.000000e+00> : vector<256x128xf32>
    %52 = tpu.matmul %49, %51, %cst_31 {dimension_numbers = #tpu.dot_dimension_numbers<[1], [0], [0], [1], [0, 0, 1, 1], [], []>} : vector<256x4xbf16>, vector<4x128xbf16>, vector<256x128xf32> -> vector<256x128xf32>
    %53 = arith.addf %47, %52 : vector<256x128xf32>
    %54 = vector.extract_strided_slice %4 {offsets = [2, 2, 0], sizes = [16, 16, 4], strides = [1, 1, 1]} : vector<18x18x4xbf16> to vector<16x16x4xbf16>
    %55 = vector.shape_cast %54 : vector<16x16x4xbf16> to vector<256x4xbf16>
    %c8 = arith.constant 8 : index
    %c0_32 = arith.constant 0 : index
    %c0_33 = arith.constant 0 : index
    %56 = vector.load %arg4[%c8, %c0_32, %c0_33] : memref<9x4x128xbf16, #tpu.memory_space<vmem>>, vector<1x4x128xbf16>
    %57 = vector.shape_cast %56 : vector<1x4x128xbf16> to vector<4x128xbf16>
    %cst_34 = arith.constant dense<0.000000e+00> : vector<256x128xf32>
    %58 = tpu.matmul %55, %57, %cst_34 {dimension_numbers = #tpu.dot_dimension_numbers<[1], [0], [0], [1], [0, 0, 1, 1], [], []>} : vector<256x4xbf16>, vector<4x128xbf16>, vector<256x128xf32> -> vector<256x128xf32>
    %59 = arith.addf %53, %58 : vector<256x128xf32>
    %c0_35 = arith.constant 0 : index
    %c0_36 = arith.constant 0 : index
    %60 = vector.load %arg5[%c0_35, %c0_36] : memref<1x128xf32, #tpu.memory_space<vmem>>, vector<1x128xf32>
    %61 = vector.broadcast %60 : vector<1x128xf32> to vector<256x128xf32>
    %62 = arith.addf %59, %61 : vector<256x128xf32>
    %63 = arith.negf %62 : vector<256x128xf32>
    %64 = math.exp %63 : vector<256x128xf32>
    %cst_37 = arith.constant 1.000000e+00 : f32
    %65 = vector.broadcast %cst_37 : f32 to vector<256x128xf32>
    %66 = arith.addf %65, %64 : vector<256x128xf32>
    %67 = arith.divf %65, %66 : vector<256x128xf32>
    %68 = arith.mulf %62, %67 : vector<256x128xf32>
    %69 = vector.shape_cast %68 : vector<256x128xf32> to vector<1x16x16x128xf32>
    %70 = arith.truncf %69 : vector<1x16x16x128xf32> to vector<1x16x16x128xbf16>
    %c0_38 = arith.constant 0 : index
    %c0_39 = arith.constant 0 : index
    %c0_40 = arith.constant 0 : index
    %c0_41 = arith.constant 0 : index
    %71 = vector.load %arg6[%c0_38, %c0_39, %c0_40, %c0_41] : memref<1x16x16x128xbf16, #tpu.memory_space<vmem>>, vector<1x16x16x128xbf16>
    tpu.vector_store %arg6[%c0_38, %c0_39, %c0_40, %c0_41], %70 {strides = array<i32>} : memref<1x16x16x128xbf16, #tpu.memory_space<vmem>>, vector<1x16x16x128xbf16>,
    return
  }
  func.func @transform_0(%arg0: i32, %arg1: i32) -> (i32, i32, i32, i32) {
    %c0_i32 = arith.constant 0 : i32
    %c0_i32_0 = arith.constant 0 : i32
    %c0_i32_1 = arith.constant 0 : i32
    return %arg0, %arg1, %c0_i32, %c0_i32_0 : i32, i32, i32, i32
  }
  func.func @transform_1(%arg0: i32, %arg1: i32) -> (i32, i32, i32, i32) {
    %c1_i32 = arith.constant 1 : i32
    %0 = arith.addi %arg1, %c1_i32 : i32
    %c0_i32 = arith.constant 0 : i32
    %c0_i32_0 = arith.constant 0 : i32
    %c0_i32_1 = arith.constant 0 : i32
    return %arg0, %0, %c0_i32, %c0_i32_0 : i32, i32, i32, i32
  }
  func.func @transform_2(%arg0: i32, %arg1: i32) -> (i32, i32, i32) {
    %c0_i32 = arith.constant 0 : i32
    %c0_i32_0 = arith.constant 0 : i32
    %c0_i32_1 = arith.constant 0 : i32
    %c0_i32_2 = arith.constant 0 : i32
    return %c0_i32, %c0_i32_0, %c0_i32_1 : i32, i32, i32
  }
  func.func @transform_3(%arg0: i32, %arg1: i32) -> (i32, i32) {
    %c0_i32 = arith.constant 0 : i32
    %c0_i32_0 = arith.constant 0 : i32
    %c0_i32_1 = arith.constant 0 : i32
    return %c0_i32, %c0_i32_0 : i32, i32
  }
  func.func @transform_4(%arg0: i32, %arg1: i32) -> (i32, i32, i32, i32) {
    %c0_i32 = arith.constant 0 : i32
    %c0_i32_0 = arith.constant 0 : i32
    %c0_i32_1 = arith.constant 0 : i32
    return %arg0, %arg1, %c0_i32, %c0_i32_0 : i32, i32, i32, i32
  }
}

</mosaic_0001>

<llo_original>
// kernel: tpu_custom_call.1
$region0: #{tpu_custom_call.1}
  #allocation0 [shape = 'u32[]', space=smem, size = 0x4, offset = 0x4, fixed_abs, tag = 'smem constant byte address 0x4 - core index']
  #allocation1 [shape = 'u32[144,128]{1,0:T(1,128)}', space=vmem, size = 0x12000, scoped, tag = 'internal scratch']
  %s0 = inlined_call_operand.vmem [shape: bf16[2,32,18,4], index: 0, kind: input, shape index: {}]
  %s1 = inlined_call_operand.vmem [shape: bf16[2,32,18,4], index: 1, kind: input, shape index: {}]
  %s2 = inlined_call_operand.vmem [shape: bf16[9,4,128], index: 2, kind: input, shape index: {}]
  %s3 = inlined_call_operand.vmem [shape: f32[1,128], index: 3, kind: input, shape index: {}]
  %s4 = inlined_call_operand.hbm [shape: bf16[2,16,16,128], index: 4, kind: output, shape index: {}]
  %s5 = sld [smem:[#allocation0]]
  $region49: #{tpu_custom_call.1} parent=0
    _
  %s7 = ssub.s32 1, %s5
  %s8 = scalar_select 0, %s7, %s5
  $region1: #{tpu_custom_call.1} parent=0
    #allocation2 [shape = 'u8[131072]{0}', space=vmem, size = 0x20000, scoped, tag = 'output window, operand 0']
    #allocation3 [shape = 's32[2]{0}', space=sflag, size = 0x8, scoped, tag = 'scoped memory for tpu_custom_call.1']
    %9 = vsyncpa [#allocation3], 0
    %s10 = scalar_lea.sflag [#allocation3], 1
    %11 = vsyncpa %s10, 0
    loop: start=0, step=1, limit=4
    $region2: #{tpu_custom_call.1} parent=1 // loop_pre_header
      _
    $region3: #{tpu_custom_call.1} parent=1 // loop_header
      %s13 = sphi 0, %s17
      %p14 = scmp.ge.s32.totalorder %s13, 4
      %s20 = sphi 0, %s32
      %s21 = sphi 0, %s28
      %s22 = sphi 0, %s20
      %s23 = sphi 0, %s21
      %s24 = sphi 0, %s22
      %s25 = sphi 0, %s23
      %s37 = sphi 0, %s39
      %s40 = sphi 0, %s37
      %s41 = sphi 0, %s40
      %s57 = sphi 0, %s41
      %s67 = sphi 0, %s69
      %s70 = sphi 0, %s67
      %s71 = sphi 0, %s70
      %s87 = sphi 0, %s71
      %s91 = sphi 0, %s91
      %s93 = sphi 0, %s91
      %s94 = sphi 0, %s93
      %s108 = sphi 0, %s94
      %s112 = sphi 0, %s112
      %s114 = sphi 0, %s112
      %s115 = sphi 0, %s114
      %s129 = sphi 0, %s115
      %s137 = sphi 0, %s139
      %s140 = sphi 0, %s137
      %s141 = sphi 0, %s140
      %s157 = sphi 0, %s141
    $region4: #{tpu_custom_call.1} parent=1 // loop_header_branch
      %16 = sbr.rel (%p14) target = $region8
    $region5: #{tpu_custom_call.1} parent=1 // loop_body
      %s18 = ssub.s32 %s13, 1
      %s19 = ssub.s32 %s13, 2
      %s26 = sadd.s32 1, %s21
      %p27 = scmp.ge.s32.totalorder %s26, 1
      %s28 = scalar_select %p27, 0, %s26
      %s29 = sadd.s32 1, %s20
      %s30 = scalar_select %p27, %s29, %s20
      %p31 = scmp.ge.s32.totalorder %s30, 2
      %s32 = scalar_select %p31, 0, %s30
      %s33 = ssub.s32 %s20, %s32
      %s34 = ssub.s32 %s21, %s28
      %s35 = sor.u32 %s33, %s34
      %p36 = scmp.eq.s32.totalorder %s35, 0
      %s38 = sadd.s32 %s37, 1
      %s39 = scalar_select %p36, %s37, %s38
      %p42 = pneg %p36
      %p43 = scmp.eq.s32.totalorder %s13, 1
      %p44 = por %p42, %p43
      %p45 = scmp.ne.s32.totalorder %s37, %s40
      %p46 = scmp.eq.s32.totalorder %s13, 0
      %p47 = por %p45, %p46
      %p48 = scmp.ne.s32.totalorder %s37, %s40
      %p49 = scmp.eq.s32.totalorder %s18, 1
      %p50 = por %p48, %p49
      %p51 = scmp.ne.s32.totalorder %s40, %s41
      %p52 = scmp.eq.s32.totalorder %s18, 0
      %p53 = por %p51, %p52
      %p54 = scmp.ne.s32.totalorder %s40, %s41
      %p55 = scmp.eq.s32.totalorder %s19, 1
      %p56 = por %p54, %p55
      %p58 = scmp.ne.s32.totalorder %s41, %s57
      %p59 = scmp.eq.s32.totalorder %s19, 0
      %p60 = por %p58, %p59
      %s61 = sadd.s32 %s21, 1
      %s62 = sadd.s32 %s28, 1
      %s63 = ssub.s32 %s20, %s32
      %s64 = ssub.s32 %s61, %s62
      %s65 = sor.u32 %s63, %s64
      %p66 = scmp.eq.s32.totalorder %s65, 0
      %s68 = sadd.s32 %s67, 1
      %s69 = scalar_select %p66, %s67, %s68
      %p72 = pneg %p66
      %p73 = scmp.eq.s32.totalorder %s13, 1
      %p74 = por %p72, %p73
      %p75 = scmp.ne.s32.totalorder %s67, %s70
      %p76 = scmp.eq.s32.totalorder %s13, 0
      %p77 = por %p75, %p76
      %p78 = scmp.ne.s32.totalorder %s67, %s70
      %p79 = scmp.eq.s32.totalorder %s18, 1
      %p80 = por %p78, %p79
      %p81 = scmp.ne.s32.totalorder %s70, %s71
      %p82 = scmp.eq.s32.totalorder %s18, 0
      %p83 = por %p81, %p82
      %p84 = scmp.ne.s32.totalorder %s70, %s71
      %p85 = scmp.eq.s32.totalorder %s19, 1
      %p86 = por %p84, %p85
      %p88 = scmp.ne.s32.totalorder %s71, %s87
      %p89 = scmp.eq.s32.totalorder %s19, 0
      %p90 = por %p88, %p89
      %s92 = sadd.s32 %s91, 1
      %p95 = scmp.eq.s32.totalorder %s13, 1
      %p96 = scmp.ne.s32.totalorder %s91, %s93
      %p97 = scmp.eq.s32.totalorder %s13, 0
      %p98 = por %p96, %p97
      %p99 = scmp.ne.s32.totalorder %s91, %s93
      %p100 = scmp.eq.s32.totalorder %s18, 1
      %p101 = por %p99, %p100
      %p102 = scmp.ne.s32.totalorder %s93, %s94
      %p103 = scmp.eq.s32.totalorder %s18, 0
      %p104 = por %p102, %p103
      %p105 = scmp.ne.s32.totalorder %s93, %s94
      %p106 = scmp.eq.s32.totalorder %s19, 1
      %p107 = por %p105, %p106
      %p109 = scmp.ne.s32.totalorder %s94, %s108
      %p110 = scmp.eq.s32.totalorder %s19, 0
      %p111 = por %p109, %p110
      %s113 = sadd.s32 %s112, 1
      %p116 = scmp.eq.s32.totalorder %s13, 1
      %p117 = scmp.ne.s32.totalorder %s112, %s114
      %p118 = scmp.eq.s32.totalorder %s13, 0
      %p119 = por %p117, %p118
      %p120 = scmp.ne.s32.totalorder %s112, %s114
      %p121 = scmp.eq.s32.totalorder %s18, 1
      %p122 = por %p120, %p121
      %p123 = scmp.ne.s32.totalorder %s114, %s115
      %p124 = scmp.eq.s32.totalorder %s18, 0
      %p125 = por %p123, %p124
      %p126 = scmp.ne.s32.totalorder %s114, %s115
      %p127 = scmp.eq.s32.totalorder %s19, 1
      %p128 = por %p126, %p127
      %p130 = scmp.ne.s32.totalorder %s115, %s129
      %p131 = scmp.eq.s32.totalorder %s19, 0
      %p132 = por %p130, %p131
      %s133 = ssub.s32 %s20, %s32
      %s134 = ssub.s32 %s21, %s28
      %s135 = sor.u32 %s133, %s134
      %p136 = scmp.eq.s32.totalorder %s135, 0
      %s138 = sadd.s32 %s137, 1
      %s139 = scalar_select %p136, %s137, %s138
      %p142 = pneg %p136
      %p143 = scmp.eq.s32.totalorder %s13, 1
      %p144 = por %p142, %p143
      %p145 = scmp.ne.s32.totalorder %s137, %s140
      %p146 = scmp.eq.s32.totalorder %s13, 0
      %p147 = por %p145, %p146
      %p148 = scmp.ne.s32.totalorder %s137, %s140
      %p149 = scmp.eq.s32.totalorder %s18, 1
      %p150 = por %p148, %p149
      %p151 = scmp.ne.s32.totalorder %s140, %s141
      %p152 = scmp.eq.s32.totalorder %s18, 0
      %p153 = por %p151, %p152
      %p154 = scmp.ne.s32.totalorder %s140, %s141
      %p155 = scmp.eq.s32.totalorder %s19, 1
      %p156 = por %p154, %p155
      %p158 = scmp.ne.s32.totalorder %s141, %s157
      %p159 = scmp.eq.s32.totalorder %s19, 0
      %p160 = por %p158, %p159
      %p161 = scmp.le.s32.totalorder 1, %s13
      %p162 = scmp.lt.s32.totalorder %s13, 3
      %p163 = pnand %p161, %p162
      %p164 = pneg %p163
      // Predicated region
      $region9: #{tpu_custom_call.1} parent=5 // pred_check
        _
      $region10: #{tpu_custom_call.1} parent=5 // pred_check_branch
        %166 = sbr.rel (%p163) target = $region12
      $region11: #{tpu_custom_call.1} parent=5 // pred_region
        %s167 = ssub.s32 %s13, 1
        // Predicated region
        $region13: #{tpu_custom_call.1} parent=11 // pred_check
          %p168 = pneg %p104
        $region14: #{tpu_custom_call.1} parent=11 // pred_check_branch
          %170 = sbr.rel (%p168) target = $region16
        $region15: #{tpu_custom_call.1} parent=11 // pred_region
          _
        $region16: #{tpu_custom_call.1} parent=11 // pred_fallthru
          _
        // Predicated region
        $region17: #{tpu_custom_call.1} parent=11 // pred_check
          %p171 = pneg %p125
        $region18: #{tpu_custom_call.1} parent=11 // pred_check_branch
          %173 = sbr.rel (%p171) target = $region20
        $region19: #{tpu_custom_call.1} parent=11 // pred_region
          _
        $region20: #{tpu_custom_call.1} parent=11 // pred_fallthru
          _
      $region12: #{tpu_custom_call.1} parent=5 // pred_fallthru
        _
      %p174 = scmp.lt.s32.totalorder %s13, 2
      // Predicated region
      $region21: #{tpu_custom_call.1} parent=5 // pred_check
        %p175 = pneg %p174
      $region22: #{tpu_custom_call.1} parent=5 // pred_check_branch
        %177 = sbr.rel (%p175) target = $region24
      $region23: #{tpu_custom_call.1} parent=5 // pred_region
        // Predicated region
        $region25: #{tpu_custom_call.1} parent=23 // pred_check
          %p178 = pneg %p47
        $region26: #{tpu_custom_call.1} parent=23 // pred_check_branch
          %180 = sbr.rel (%p178) target = $region28
        $region27: #{tpu_custom_call.1} parent=23 // pred_region
          %s181 = smul.u32 16, %s21
          %p182 = scmp.lt.s32.totalorder %s20, 1
          %s183 = scalar_select %p182, %s20, 1
          %p184 = scmp.lt.s32.totalorder %s181, 31
          %s185 = scalar_select %p184, %s181, 31
          %s186 = smul.addr %s185, 3
          %s187 = smul.addr %s183, 96
          %s188 = sadd.s32 %s186, %s187
          %s189 = smul.addr %s188, 4
          %s190 = scalar_lea.vmem %s0, %s189
          %s191 = smul.u32 16, %s21
        $region28: #{tpu_custom_call.1} parent=23 // pred_fallthru
          _
        // Predicated region
        $region29: #{tpu_custom_call.1} parent=23 // pred_check
          %p192 = pneg %p77
        $region30: #{tpu_custom_call.1} parent=23 // pred_check_branch
          %194 = sbr.rel (%p192) target = $region32
        $region31: #{tpu_custom_call.1} parent=23 // pred_region
          %s195 = sadd.s32 %s21, 1
          %s196 = smul.u32 16, %s195
          %p197 = scmp.lt.s32.totalorder %s20, 1
          %s198 = scalar_select %p197, %s20, 1
          %p199 = scmp.lt.s32.totalorder %s196, 31
          %s200 = scalar_select %p199, %s196, 31
          %s201 = smul.addr %s200, 3
          %s202 = smul.addr %s198, 96
          %s203 = sadd.s32 %s201, %s202
          %s204 = smul.addr %s203, 4
          %s205 = scalar_lea.vmem %s1, %s204
          %s206 = sadd.s32 %s21, 1
          %s207 = smul.u32 16, %s206
        $region32: #{tpu_custom_call.1} parent=23 // pred_fallthru
          _
      $region24: #{tpu_custom_call.1} parent=5 // pred_fallthru
        _
      %p208 = scmp.le.s32.totalorder 1, %s13
      %p209 = scmp.lt.s32.totalorder %s13, 3
      %p210 = pnand %p208, %p209
      %p211 = pneg %p210
      // Predicated region
      $region33: #{tpu_custom_call.1} parent=5 // pred_check
        _
      $region34: #{tpu_custom_call.1} parent=5 // pred_check_branch
        %213 = sbr.rel (%p210) target = $region36
      $region35: #{tpu_custom_call.1} parent=5 // pred_region
        %s214 = ssub.s32 %s13, 1
        %s215 = smul.u32 16, %s23
        %p216 = scmp.lt.s32.totalorder %s22, 1
        %s217 = scalar_select %p216, %s22, 1
        %p218 = scmp.lt.s32.totalorder %s215, 31
        %s219 = scalar_select %p218, %s215, 31
        %s220 = smul.addr %s219, 3
        %s221 = smul.addr %s217, 96
        %s222 = sadd.s32 %s220, %s221
        %s223 = smul.addr %s222, 4
        %s224 = scalar_lea.vmem %s0, %s223
        %p225 = pneg %p53
        %p226 = pneg %p50
        %s227 = sadd.s32 %s23, 1
        %s228 = smul.u32 16, %s227
        %p229 = scmp.lt.s32.totalorder %s22, 1
        %s230 = scalar_select %p229, %s22, 1
        %p231 = scmp.lt.s32.totalorder %s228, 31
        %s232 = scalar_select %p231, %s228, 31
        %s233 = smul.addr %s232, 3
        %s234 = smul.addr %s230, 96
        %s235 = sadd.s32 %s233, %s234
        %s236 = smul.addr %s235, 4
        %s237 = scalar_lea.vmem %s1, %s236
        %p238 = pneg %p83
        %p239 = pneg %p80
        %p240 = pneg %p104
        %p241 = pneg %p101
        %p242 = pneg %p125
        %p243 = pneg %p122
        %p244 = pneg %p153
        %p245 = pneg %p150
        %s246 = sand.u32 %s140, 1
        %s247 = scalar_lea.sflag [#allocation3], %s246
        %s248 = sand.u32 %s140, 1
        %s249 = smul.addr %s248, 128
        %s250 = scalar_lea.vmem [#allocation2], %s249
        %s251 = smul.u32 16, %s23
        %p252 = scmp.lt.s32.totalorder %s22, 1
        %s253 = scalar_select %p252, %s22, 1
        %p254 = scmp.lt.s32.totalorder %s251, 31
        %s255 = scalar_select %p254, %s251, 31
        %s256 = smul.addr %s255, 3
        %s257 = smul.addr %s253, 96
        %s258 = sadd.s32 %s256, %s257
        %s259 = smul.addr %s258, 4
        %s260 = scalar_lea.vmem %s0, %s259
        %s261 = smul.u32 16, %s23
        %s262 = sadd.s32 %s23, 1
        %s263 = smul.u32 16, %s262
        %p264 = scmp.lt.s32.totalorder %s22, 1
        %s265 = scalar_select %p264, %s22, 1
        %p266 = scmp.lt.s32.totalorder %s263, 31
        %s267 = scalar_select %p266, %s263, 31
        %s268 = smul.addr %s267, 3
        %s269 = smul.addr %s265, 96
        %s270 = sadd.s32 %s268, %s269
        %s271 = smul.addr %s270, 4
        %s272 = scalar_lea.vmem %s1, %s271
        %s273 = sadd.s32 %s23, 1
        %s274 = smul.u32 16, %s273
        %s275 = smul.u32 16, %s23
        %v277 = vld [vmem:[%s260] sm:$0xf]
        %v278 = vld [vmem:[%s260 + $0x4] sm:$0xf]
        %v279 = vld [vmem:[%s260 + $0x8] sm:$0x1]
        %v280 = vld [vmem:[%s260 + $0xc] sm:$0xf]
        %v281 = vld [vmem:[%s260 + $0x10] sm:$0xf]
        %v282 = vld [vmem:[%s260 + $0x14] sm:$0x1]
        %v283 = vld [vmem:[%s260 + $0x18] sm:$0xf]
        %v284 = vld [vmem:[%s260 + $0x1c] sm:$0xf]
        %v285 = vld [vmem:[%s260 + $0x20] sm:$0x1]
        %v286 = vld [vmem:[%s260 + $0x24] sm:$0xf]
        %v287 = vld [vmem:[%s260 + $0x28] sm:$0xf]
        %v288 = vld [vmem:[%s260 + $0x2c] sm:$0x1]
        %v289 = vld [vmem:[%s260 + $0x30] sm:$0xf]
        %v290 = vld [vmem:[%s260 + $0x34] sm:$0xf]
        %v291 = vld [vmem:[%s260 + $0x38] sm:$0x1]
        %v292 = vld [vmem:[%s260 + $0x3c] sm:$0xf]
        %v293 = vld [vmem:[%s260 + $0x40] sm:$0xf]
        %v294 = vld [vmem:[%s260 + $0x44] sm:$0x1]
        %v295 = vld [vmem:[%s260 + $0x48] sm:$0xf]
        %v296 = vld [vmem:[%s260 + $0x4c] sm:$0xf]
        %v297 = vld [vmem:[%s260 + $0x50] sm:$0x1]
        %v298 = vld [vmem:[%s260 + $0x54] sm:$0xf]
        %v299 = vld [vmem:[%s260 + $0x58] sm:$0xf]
        %v300 = vld [vmem:[%s260 + $0x5c] sm:$0x1]
        %v301 = vld [vmem:[%s260 + $0x60] sm:$0xf]
        %v302 = vld [vmem:[%s260 + $0x64] sm:$0xf]
        %v303 = vld [vmem:[%s260 + $0x68] sm:$0x1]
        %v304 = vld [vmem:[%s260 + $0x6c] sm:$0xf]
        %v305 = vld [vmem:[%s260 + $0x70] sm:$0xf]
        %v306 = vld [vmem:[%s260 + $0x74] sm:$0x1]
        %v307 = vld [vmem:[%s260 + $0x78] sm:$0xf]
        %v308 = vld [vmem:[%s260 + $0x7c] sm:$0xf]
        %v309 = vld [vmem:[%s260 + $0x80] sm:$0x1]
        %v310 = vld [vmem:[%s260 + $0x84] sm:$0xf]
        %v311 = vld [vmem:[%s260 + $0x88] sm:$0xf]
        %v312 = vld [vmem:[%s260 + $0x8c] sm:$0x1]
        %v313 = vld [vmem:[%s260 + $0x90] sm:$0xf]
        %v314 = vld [vmem:[%s260 + $0x94] sm:$0xf]
        %v315 = vld [vmem:[%s260 + $0x98] sm:$0x1]
        %v316 = vld [vmem:[%s260 + $0x9c] sm:$0xf]
        %v317 = vld [vmem:[%s260 + $0xa0] sm:$0xf]
        %v318 = vld [vmem:[%s260 + $0xa4] sm:$0x1]
        %v319 = vld [vmem:[%s260 + $0xa8] sm:$0xf]
        %v320 = vld [vmem:[%s260 + $0xac] sm:$0xf]
        %v321 = vld [vmem:[%s260 + $0xb0] sm:$0x1]
        %v322 = vld [vmem:[%s260 + $0xb4] sm:$0xf]
        %v323 = vld [vmem:[%s260 + $0xb8] sm:$0xf]
        %v324 = vld [vmem:[%s260 + $0xbc] sm:$0x1]
        %v325 = vld [vmem:[%s272] sm:$0xf]
        %v326 = vld [vmem:[%s272 + $0x4] sm:$0xf]
        %v327 = vld [vmem:[%s272 + $0x8] sm:$0x1]
        %v328 = vld [vmem:[%s272 + $0xc] sm:$0xf]
        %v329 = vld [vmem:[%s272 + $0x10] sm:$0xf]
        %v330 = vld [vmem:[%s272 + $0x14] sm:$0x1]
        %v331 = vld [vmem:[%s2] sm:$0x3]
        %vm332 = vsmask.f32 3328
        %vm333 = vsmask.f32 7440
        %vm334 = vmor %vm332, %vm333
        %v336 = vshrl.u32 %v277, 16
        %v338 = vrot.slane %v336, 4
        %v339 = vshll.u32 %v277, 16
        %v341 = vrot.slane %v339, 5
        %v342 = vor.u32 %v338, %v341
        %v343 = vrot.slane %v342, 4
        %v345 = vshll.u32 %v278, 16
        %v347 = vrot.slane %v345, 5
        %v348 = vsel %vm334, %v343, %v347
        %v349 = vshrl.u32 %v278, 16
        %v351 = vrot.slane %v349, 4
        %v352 = vor.u32 %v351, %v347
        %v353 = vrot.slane %v352, 4
        %v355 = vshll.u32 %v279, 16
        %v357 = vrot.slane %v355, 5
        %v358 = vsel %vm334, %v353, %v357
        %v360 = vshrl.u32 %v280, 16
        %v362 = vrot.slane %v360, 4
        %v363 = vshll.u32 %v280, 16
        %v365 = vrot.slane %v363, 5
        %v366 = vor.u32 %v362, %v365
        %v367 = vrot.slane %v366, 4
        %v369 = vshll.u32 %v281, 16
        %v371 = vrot.slane %v369, 5
        %v372 = vsel %vm334, %v367, %v371
        %v373 = vshrl.u32 %v281, 16
        %v375 = vrot.slane %v373, 4
        %v376 = vor.u32 %v375, %v371
        %v377 = vrot.slane %v376, 4
        %v379 = vshll.u32 %v282, 16
        %v381 = vrot.slane %v379, 5
        %v382 = vsel %vm334, %v377, %v381
        %v384 = vshrl.u32 %v283, 16
        %v386 = vrot.slane %v384, 4
        %v387 = vshll.u32 %v283, 16
        %v389 = vrot.slane %v387, 5
        %v390 = vor.u32 %v386, %v389
        %v391 = vrot.slane %v390, 4
        %v393 = vshll.u32 %v284, 16
        %v395 = vrot.slane %v393, 5
        %v396 = vsel %vm334, %v391, %v395
        %v397 = vshrl.u32 %v284, 16
        %v399 = vrot.slane %v397, 4
        %v400 = vor.u32 %v399, %v395
        %v401 = vrot.slane %v400, 4
        %v403 = vshll.u32 %v285, 16
        %v405 = vrot.slane %v403, 5
        %v406 = vsel %vm334, %v401, %v405
        %v408 = vshrl.u32 %v286, 16
        %v410 = vrot.slane %v408, 4
        %v411 = vshll.u32 %v286, 16
        %v413 = vrot.slane %v411, 5
        %v414 = vor.u32 %v410, %v413
        %v415 = vrot.slane %v414, 4
        %v417 = vshll.u32 %v287, 16
        %v419 = vrot.slane %v417, 5
        %v420 = vsel %vm334, %v415, %v419
        %v421 = vshrl.u32 %v287, 16
        %v423 = vrot.slane %v421, 4
        %v424 = vor.u32 %v423, %v419
        %v425 = vrot.slane %v424, 4
        %v427 = vshll.u32 %v288, 16
        %v429 = vrot.slane %v427, 5
        %v430 = vsel %vm334, %v425, %v429
        %v432 = vshrl.u32 %v289, 16
        %v434 = vrot.slane %v432, 4
        %v435 = vshll.u32 %v289, 16
        %v437 = vrot.slane %v435, 5
        %v438 = vor.u32 %v434, %v437
        %v439 = vrot.slane %v438, 4
        %v441 = vshll.u32 %v290, 16
        %v443 = vrot.slane %v441, 5
        %v444 = vsel %vm334, %v439, %v443
        %v445 = vshrl.u32 %v290, 16
        %v447 = vrot.slane %v445, 4
        %v448 = vor.u32 %v447, %v443
        %v449 = vrot.slane %v448, 4
        %v451 = vshll.u32 %v291, 16
        %v453 = vrot.slane %v451, 5
        %v454 = vsel %vm334, %v449, %v453
        %v456 = vshrl.u32 %v292, 16
        %v458 = vrot.slane %v456, 4
        %v459 = vshll.u32 %v292, 16
        %v461 = vrot.slane %v459, 5
        %v462 = vor.u32 %v458, %v461
        %v463 = vrot.slane %v462, 4
        %v465 = vshll.u32 %v293, 16
        %v467 = vrot.slane %v465, 5
        %v468 = vsel %vm334, %v463, %v467
        %v469 = vshrl.u32 %v293, 16
        %v471 = vrot.slane %v469, 4
        %v472 = vor.u32 %v471, %v467
        %v473 = vrot.slane %v472, 4
        %v475 = vshll.u32 %v294, 16
        %v477 = vrot.slane %v475, 5
        %v478 = vsel %vm334, %v473, %v477
        %v480 = vshrl.u32 %v295, 16
        %v482 = vrot.slane %v480, 4
        %v483 = vshll.u32 %v295, 16
        %v485 = vrot.slane %v483, 5
        %v486 = vor.u32 %v482, %v485
        %v487 = vrot.slane %v486, 4
        %v489 = vshll.u32 %v296, 16
        %v491 = vrot.slane %v489, 5
        %v492 = vsel %vm334, %v487, %v491
        %v493 = vshrl.u32 %v296, 16
        %v495 = vrot.slane %v493, 4
        %v496 = vor.u32 %v495, %v491
        %v497 = vrot.slane %v496, 4
        %v499 = vshll.u32 %v297, 16
        %v501 = vrot.slane %v499, 5
        %v502 = vsel %vm334, %v497, %v501
        %v504 = vshrl.u32 %v298, 16
        %v506 = vrot.slane %v504, 4
        %v507 = vshll.u32 %v298, 16
        %v509 = vrot.slane %v507, 5
        %v510 = vor.u32 %v506, %v509
        %v511 = vrot.slane %v510, 4
        %v513 = vshll.u32 %v299, 16
        %v515 = vrot.slane %v513, 5
        %v516 = vsel %vm334, %v511, %v515
        %v517 = vshrl.u32 %v299, 16
        %v519 = vrot.slane %v517, 4
        %v520 = vor.u32 %v519, %v515
        %v521 = vrot.slane %v520, 4
        %v523 = vshll.u32 %v300, 16
        %v525 = vrot.slane %v523, 5
        %v526 = vsel %vm334, %v521, %v525
        %v528 = vshrl.u32 %v301, 16
        %v530 = vrot.slane %v528, 4
        %v531 = vshll.u32 %v301, 16
        %v533 = vrot.slane %v531, 5
        %v534 = vor.u32 %v530, %v533
        %v535 = vrot.slane %v534, 4
        %v537 = vshll.u32 %v302, 16
        %v539 = vrot.slane %v537, 5
        %v540 = vsel %vm334, %v535, %v539
        %v541 = vshrl.u32 %v302, 16
        %v543 = vrot.slane %v541, 4
        %v544 = vor.u32 %v543, %v539
        %v545 = vrot.slane %v544, 4
        %v547 = vshll.u32 %v303, 16
        %v549 = vrot.slane %v547, 5
        %v550 = vsel %vm334, %v545, %v549
        %v552 = vshrl.u32 %v304, 16
        %v554 = vrot.slane %v552, 4
        %v555 = vshll.u32 %v304, 16
        %v557 = vrot.slane %v555, 5
        %v558 = vor.u32 %v554, %v557
        %v559 = vrot.slane %v558, 4
        %v561 = vshll.u32 %v305, 16
        %v563 = vrot.slane %v561, 5
        %v564 = vsel %vm334, %v559, %v563
        %v565 = vshrl.u32 %v305, 16
        %v567 = vrot.slane %v565, 4
        %v568 = vor.u32 %v567, %v563
        %v569 = vrot.slane %v568, 4
        %v571 = vshll.u32 %v306, 16
        %v573 = vrot.slane %v571, 5
        %v574 = vsel %vm334, %v569, %v573
        %v576 = vshrl.u32 %v307, 16
        %v578 = vrot.slane %v576, 4
        %v579 = vshll.u32 %v307, 16
        %v581 = vrot.slane %v579, 5
        %v582 = vor.u32 %v578, %v581
        %v583 = vrot.slane %v582, 4
        %v585 = vshll.u32 %v308, 16
        %v587 = vrot.slane %v585, 5
        %v588 = vsel %vm334, %v583, %v587
        %v589 = vshrl.u32 %v308, 16
        %v591 = vrot.slane %v589, 4
        %v592 = vor.u32 %v591, %v587
        %v593 = vrot.slane %v592, 4
        %v595 = vshll.u32 %v309, 16
        %v597 = vrot.slane %v595, 5
        %v598 = vsel %vm334, %v593, %v597
        %v600 = vshrl.u32 %v310, 16
        %v602 = vrot.slane %v600, 4
        %v603 = vshll.u32 %v310, 16
        %v605 = vrot.slane %v603, 5
        %v606 = vor.u32 %v602, %v605
        %v607 = vrot.slane %v606, 4
        %v609 = vshll.u32 %v311, 16
        %v611 = vrot.slane %v609, 5
        %v612 = vsel %vm334, %v607, %v611
        %v613 = vshrl.u32 %v311, 16
        %v615 = vrot.slane %v613, 4
        %v616 = vor.u32 %v615, %v611
        %v617 = vrot.slane %v616, 4
        %v619 = vshll.u32 %v312, 16
        %v621 = vrot.slane %v619, 5
        %v622 = vsel %vm334, %v617, %v621
        %v624 = vshrl.u32 %v313, 16
        %v626 = vrot.slane %v624, 4
        %v627 = vshll.u32 %v313, 16
        %v629 = vrot.slane %v627, 5
        %v630 = vor.u32 %v626, %v629
        %v631 = vrot.slane %v630, 4
        %v633 = vshll.u32 %v314, 16
        %v635 = vrot.slane %v633, 5
        %v636 = vsel %vm334, %v631, %v635
        %v637 = vshrl.u32 %v314, 16
        %v639 = vrot.slane %v637, 4
        %v640 = vor.u32 %v639, %v635
        %v641 = vrot.slane %v640, 4
        %v643 = vshll.u32 %v315, 16
        %v645 = vrot.slane %v643, 5
        %v646 = vsel %vm334, %v641, %v645
        %v648 = vshrl.u32 %v316, 16
        %v650 = vrot.slane %v648, 4
        %v651 = vshll.u32 %v316, 16
        %v653 = vrot.slane %v651, 5
        %v654 = vor.u32 %v650, %v653
        %v655 = vrot.slane %v654, 4
        %v657 = vshll.u32 %v317, 16
        %v659 = vrot.slane %v657, 5
        %v660 = vsel %vm334, %v655, %v659
        %v661 = vshrl.u32 %v317, 16
        %v663 = vrot.slane %v661, 4
        %v664 = vor.u32 %v663, %v659
        %v665 = vrot.slane %v664, 4
        %v667 = vshll.u32 %v318, 16
        %v669 = vrot.slane %v667, 5
        %v670 = vsel %vm334, %v665, %v669
        %v672 = vshrl.u32 %v319, 16
        %v674 = vrot.slane %v672, 4
        %v675 = vshll.u32 %v319, 16
        %v677 = vrot.slane %v675, 5
        %v678 = vor.u32 %v674, %v677
        %v679 = vrot.slane %v678, 4
        %v681 = vshll.u32 %v320, 16
        %v683 = vrot.slane %v681, 5
        %v684 = vsel %vm334, %v679, %v683
        %v685 = vshrl.u32 %v320, 16
        %v687 = vrot.slane %v685, 4
        %v688 = vor.u32 %v687, %v683
        %v689 = vrot.slane %v688, 4
        %v691 = vshll.u32 %v321, 16
        %v693 = vrot.slane %v691, 5
        %v694 = vsel %vm334, %v689, %v693
        %v696 = vshrl.u32 %v322, 16
        %v698 = vrot.slane %v696, 4
        %v699 = vshll.u32 %v322, 16
        %v701 = vrot.slane %v699, 5
        %v702 = vor.u32 %v698, %v701
        %v703 = vrot.slane %v702, 4
        %v705 = vshll.u32 %v323, 16
        %v707 = vrot.slane %v705, 5
        %v708 = vsel %vm334, %v703, %v707
        %v709 = vshrl.u32 %v323, 16
        %v711 = vrot.slane %v709, 4
        %v712 = vor.u32 %v711, %v707
        %v713 = vrot.slane %v712, 4
        %v715 = vshll.u32 %v324, 16
        %v717 = vrot.slane %v715, 5
        %v718 = vsel %vm334, %v713, %v717
        %s719 = scalar_lea.vmem %s2, 2
        %v720 = vld [vmem:[%s719] sm:$0x3]
        %v721 = vunpack.c.l.b16 %v348
        %v722 = vunpack.c.l.b16 %v358
        %v723 = vunpack.c.l.b16 %v372
        %v724 = vunpack.c.l.b16 %v382
        %v725 = vunpack.c.l.b16 %v396
        %v726 = vunpack.c.l.b16 %v406
        %v727 = vunpack.c.l.b16 %v420
        %v728 = vunpack.c.l.b16 %v430
        %v729 = vunpack.c.l.b16 %v444
        %v730 = vunpack.c.l.b16 %v454
        %v731 = vunpack.c.l.b16 %v468
        %v732 = vunpack.c.l.b16 %v478
        %v733 = vunpack.c.l.b16 %v492
        %v734 = vunpack.c.l.b16 %v502
        %v735 = vunpack.c.l.b16 %v516
        %v736 = vunpack.c.l.b16 %v526
        %v737 = vunpack.c.l.b16 %v540
        %v738 = vunpack.c.l.b16 %v550
        %v739 = vunpack.c.l.b16 %v564
        %v740 = vunpack.c.l.b16 %v574
        %v741 = vunpack.c.l.b16 %v588
        %v742 = vunpack.c.l.b16 %v598
        %v743 = vunpack.c.l.b16 %v612
        %v744 = vunpack.c.l.b16 %v622
        %v745 = vunpack.c.l.b16 %v636
        %v746 = vunpack.c.l.b16 %v646
        %v747 = vunpack.c.l.b16 %v660
        %v748 = vunpack.c.l.b16 %v670
        %v749 = vunpack.c.l.b16 %v684
        %v750 = vunpack.c.l.b16 %v694
        %v751 = vunpack.c.l.b16 %v708
        %v752 = vunpack.c.l.b16 %v718
        %v753 = vpack.c.b16 %v722, %v721
        %v754 = vpack.c.b16 %v724, %v723
        %v755 = vpack.c.b16 %v726, %v725
        %v756 = vpack.c.b16 %v728, %v727
        %v757 = vpack.c.b16 %v730, %v729
        %v758 = vpack.c.b16 %v732, %v731
        %v759 = vpack.c.b16 %v734, %v733
        %v760 = vpack.c.b16 %v736, %v735
        %v761 = vpack.c.b16 %v738, %v737
        %v762 = vpack.c.b16 %v740, %v739
        %v763 = vpack.c.b16 %v742, %v741
        %v764 = vpack.c.b16 %v744, %v743
        %v765 = vpack.c.b16 %v746, %v745
        %v766 = vpack.c.b16 %v748, %v747
        %v767 = vpack.c.b16 %v750, %v749
        %v768 = vpack.c.b16 %v752, %v751
        %vm769 = vcmask 31744
        %v771 = vsel %vm769, %v753, 0
        %v774 = vsel %vm769, %v754, 0
        %v777 = vsel %vm769, %v755, 0
        %v780 = vsel %vm769, %v756, 0
        %v783 = vsel %vm769, %v757, 0
        %v786 = vsel %vm769, %v758, 0
        %v789 = vsel %vm769, %v759, 0
        %v792 = vsel %vm769, %v760, 0
        %v795 = vsel %vm769, %v761, 0
        %v798 = vsel %vm769, %v762, 0
        %v801 = vsel %vm769, %v763, 0
        %v804 = vsel %vm769, %v764, 0
        %v807 = vsel %vm769, %v765, 0
        %v810 = vsel %vm769, %v766, 0
        %v813 = vsel %vm769, %v767, 0
        %v816 = vsel %vm769, %v768, 0
        %vm818 = vcmask 1041408
        %v820 = vsel %vm818, %v720, 0
        %822 = vmatprep.subr.bf16.mxu0 0
        %823 = vmatpush1.bf16.msra.mxu0 %v820
        %824 = vmatprep.subr.bf16.mxu0 0
        %825 = vmatpush1.bf16.msra.mxu0 0
        %826 = vmatprep.subr.bf16.mxu0 0
        %827 = vmatpush1.bf16.msra.mxu0 0
        %828 = vmatprep.subr.bf16.mxu0 0
        %829 = vmatpush1.bf16.msra.mxu0 0
        %830 = vmatprep.subr.bf16.mxu0 0
        %831 = vmatpush1.bf16.msra.mxu0 0
        %832 = vmatprep.subr.bf16.mxu0 0
        %833 = vmatpush1.bf16.msra.mxu0 0
        %834 = vmatprep.subr.bf16.mxu0 0
        %835 = vmatpush1.bf16.msra.mxu0 0
        %836 = vmatprep.subr.bf16.mxu0 0
        %837 = vmatpush1.bf16.msra.mxu0 0
        %838 = vmatprep.subr.bf16.mxu0 0
        %839 = vmatpush1.bf16.msra.mxu0 0
        %840 = vmatprep.subr.bf16.mxu0 0
        %841 = vmatpush1.bf16.msra.mxu0 0
        %842 = vmatprep.subr.bf16.mxu0 0
        %843 = vmatpush1.bf16.msra.mxu0 0
        %844 = vmatprep.subr.bf16.mxu0 0
        %845 = vmatpush1.bf16.msra.mxu0 0
        %846 = vmatprep.subr.bf16.mxu0 0
        %847 = vmatpush1.bf16.msra.mxu0 0
        %848 = vmatprep.subr.bf16.mxu0 0
        %849 = vmatpush1.bf16.msra.mxu0 0
        %850 = vmatprep.subr.bf16.mxu0 0
        %851 = vmatpush1.bf16.msra.mxu0 0
        %852 = vmatprep.subr.bf16.mxu0 0
        %853 = vmatpush1.bf16.msra.mxu0 0
        %854 = vmatprep.mubr.bf16.mxu0 0
        %855 = vmatmul.mubr.bf16.gmra.mrb[0].mxu0 %v771
        %v856 = vpop.f32.mrb[0].mxu0
        %v857 = vadd.f32 0.0, %v856
        %v858 = vpop.f32.mrb[0].mxu0
        %v859 = vpop.f32.mrb[0].mxu0
        %v860 = vadd.f32 0.0, %v859
        %v861 = vpop.f32.mrb[0].mxu0
        %862 = vmatprep.mubr.bf16.mxu0 0
        %863 = vmatmul.mubr.bf16.gmra.mrb[0].mxu0 %v774
        %v864 = vpop.f32.mrb[0].mxu0
        %v865 = vadd.f32 0.0, %v864
        %v866 = vpop.f32.mrb[0].mxu0
        %v867 = vpop.f32.mrb[0].mxu0
        %v868 = vadd.f32 0.0, %v867
        %v869 = vpop.f32.mrb[0].mxu0
        %870 = vmatprep.mubr.bf16.mxu0 0
        %871 = vmatmul.mubr.bf16.gmra.mrb[0].mxu0 %v777
        %v872 = vpop.f32.mrb[0].mxu0
        %v873 = vadd.f32 0.0, %v872
        %v874 = vpop.f32.mrb[0].mxu0
        %v875 = vpop.f32.mrb[0].mxu0
        %v876 = vadd.f32 0.0, %v875
        %v877 = vpop.f32.mrb[0].mxu0
        %878 = vmatprep.mubr.bf16.mxu0 0
        %879 = vmatmul.mubr.bf16.gmra.mrb[0].mxu0 %v780
        %v880 = vpop.f32.mrb[0].mxu0
        %v881 = vadd.f32 0.0, %v880
        %v882 = vpop.f32.mrb[0].mxu0
        %v883 = vpop.f32.mrb[0].mxu0
        %v884 = vadd.f32 0.0, %v883
        %v885 = vpop.f32.mrb[0].mxu0
        %886 = vmatprep.mubr.bf16.mxu0 0
        %887 = vmatmul.mubr.bf16.gmra.mrb[0].mxu0 %v783
        %v888 = vpop.f32.mrb[0].mxu0
        %v889 = vadd.f32 0.0, %v888
        %v890 = vpop.f32.mrb[0].mxu0
        %v891 = vpop.f32.mrb[0].mxu0
        %v892 = vadd.f32 0.0, %v891
        %v893 = vpop.f32.mrb[0].mxu0
        %894 = vmatprep.mubr.bf16.mxu0 0
        %895 = vmatmul.mubr.bf16.gmra.mrb[0].mxu0 %v786
        %v896 = vpop.f32.mrb[0].mxu0
        %v897 = vadd.f32 0.0, %v896
        %v898 = vpop.f32.mrb[0].mxu0
        %v899 = vpop.f32.mrb[0].mxu0
        %v900 = vadd.f32 0.0, %v899
        %v901 = vpop.f32.mrb[0].mxu0
        %902 = vmatprep.mubr.bf16.mxu0 0
        %903 = vmatmul.mubr.bf16.gmra.mrb[0].mxu0 %v789
        %v904 = vpop.f32.mrb[0].mxu0
        %v905 = vadd.f32 0.0, %v904
        %v906 = vpop.f32.mrb[0].mxu0
        %v907 = vpop.f32.mrb[0].mxu0
        %v908 = vadd.f32 0.0, %v907
        %v909 = vpop.f32.mrb[0].mxu0
        %910 = vmatprep.mubr.bf16.mxu0 0
        %911 = vmatmul.mubr.bf16.gmra.mrb[0].mxu0 %v792
        %v912 = vpop.f32.mrb[0].mxu0
        %v913 = vadd.f32 0.0, %v912
        %v914 = vpop.f32.mrb[0].mxu0
        %v915 = vpop.f32.mrb[0].mxu0
        %v916 = vadd.f32 0.0, %v915
        %v917 = vpop.f32.mrb[0].mxu0
        %918 = vmatprep.mubr.bf16.mxu0 0
        %919 = vmatmul.mubr.bf16.gmra.mrb[0].mxu0 %v795
        %v920 = vpop.f32.mrb[0].mxu0
        %v921 = vadd.f32 0.0, %v920
        %v922 = vpop.f32.mrb[0].mxu0
        %v923 = vpop.f32.mrb[0].mxu0
        %v924 = vadd.f32 0.0, %v923
        %v925 = vpop.f32.mrb[0].mxu0
        %926 = vmatprep.mubr.bf16.mxu0 0
        %927 = vmatmul.mubr.bf16.gmra.mrb[0].mxu0 %v798
        %v928 = vpop.f32.mrb[0].mxu0
        %v929 = vadd.f32 0.0, %v928
        %v930 = vpop.f32.mrb[0].mxu0
        %v931 = vpop.f32.mrb[0].mxu0
        %v932 = vadd.f32 0.0, %v931
        %v933 = vpop.f32.mrb[0].mxu0
        %934 = vmatprep.mubr.bf16.mxu0 0
        %935 = vmatmul.mubr.bf16.gmra.mrb[0].mxu0 %v801
        %v936 = vpop.f32.mrb[0].mxu0
        %v937 = vadd.f32 0.0, %v936
        %v938 = vpop.f32.mrb[0].mxu0
        %v939 = vpop.f32.mrb[0].mxu0
        %v940 = vadd.f32 0.0, %v939
        %v941 = vpop.f32.mrb[0].mxu0
        %942 = vmatprep.mubr.bf16.mxu0 0
        %943 = vmatmul.mubr.bf16.gmra.mrb[0].mxu0 %v804
        %v944 = vpop.f32.mrb[0].mxu0
        %v945 = vadd.f32 0.0, %v944
        %v946 = vpop.f32.mrb[0].mxu0
        %v947 = vpop.f32.mrb[0].mxu0
        %v948 = vadd.f32 0.0, %v947
        %v949 = vpop.f32.mrb[0].mxu0
        %950 = vmatprep.mubr.bf16.mxu0 0
        %951 = vmatmul.mubr.bf16.gmra.mrb[0].mxu0 %v807
        %v952 = vpop.f32.mrb[0].mxu0
        %v953 = vadd.f32 0.0, %v952
        %v954 = vpop.f32.mrb[0].mxu0
        %v955 = vpop.f32.mrb[0].mxu0
        %v956 = vadd.f32 0.0, %v955
        %v957 = vpop.f32.mrb[0].mxu0
        %958 = vmatprep.mubr.bf16.mxu0 0
        %959 = vmatmul.mubr.bf16.gmra.mrb[0].mxu0 %v810
        %v960 = vpop.f32.mrb[0].mxu0
        %v961 = vadd.f32 0.0, %v960
        %v962 = vpop.f32.mrb[0].mxu0
        %v963 = vpop.f32.mrb[0].mxu0
        %v964 = vadd.f32 0.0, %v963
        %v965 = vpop.f32.mrb[0].mxu0
        %966 = vmatprep.mubr.bf16.mxu0 0
        %967 = vmatmul.mubr.bf16.gmra.mrb[0].mxu0 %v813
        %v968 = vpop.f32.mrb[0].mxu0
        %v969 = vadd.f32 0.0, %v968
        %v970 = vpop.f32.mrb[0].mxu0
        %v971 = vpop.f32.mrb[0].mxu0
        %v972 = vadd.f32 0.0, %v971
        %v973 = vpop.f32.mrb[0].mxu0
        %974 = vmatprep.mubr.bf16.mxu0 0
        %975 = vmatmul.mubr.bf16.gmra.mrb[0].mxu0 %v816
        %v976 = vpop.f32.mrb[0].mxu0
        %v977 = vadd.f32 0.0, %v976
        %v978 = vpop.f32.mrb[0].mxu0
        %v979 = vpop.f32.mrb[0].mxu0
        %v980 = vadd.f32 0.0, %v979
        %v981 = vpop.f32.mrb[0].mxu0
        %982 = vdwg.mxu0
        %v1015 = vunpack.c.l.b16 %v277
        %v1016 = vunpack.c.l.b16 %v278
        %v1017 = vunpack.c.l.b16 %v280
        %v1018 = vunpack.c.l.b16 %v281
        %v1019 = vunpack.c.l.b16 %v283
        %v1020 = vunpack.c.l.b16 %v284
        %v1021 = vunpack.c.l.b16 %v286
        %v1022 = vunpack.c.l.b16 %v287
        %v1023 = vunpack.c.l.b16 %v289
        %v1024 = vunpack.c.l.b16 %v290
        %v1025 = vunpack.c.l.b16 %v292
        %v1026 = vunpack.c.l.b16 %v293
        %v1027 = vunpack.c.l.b16 %v295
        %v1028 = vunpack.c.l.b16 %v296
        %v1029 = vunpack.c.l.b16 %v298
        %v1030 = vunpack.c.l.b16 %v299
        %v1031 = vunpack.c.l.b16 %v301
        %v1032 = vunpack.c.l.b16 %v302
        %v1033 = vunpack.c.l.b16 %v304
        %v1034 = vunpack.c.l.b16 %v305
        %v1035 = vunpack.c.l.b16 %v307
        %v1036 = vunpack.c.l.b16 %v308
        %v1037 = vunpack.c.l.b16 %v310
        %v1038 = vunpack.c.l.b16 %v311
        %v1039 = vunpack.c.l.b16 %v313
        %v1040 = vunpack.c.l.b16 %v314
        %v1041 = vunpack.c.l.b16 %v316
        %v1042 = vunpack.c.l.b16 %v317
        %v1043 = vunpack.c.l.b16 %v319
        %v1044 = vunpack.c.l.b16 %v320
        %v1045 = vunpack.c.l.b16 %v322
        %v1046 = vunpack.c.l.b16 %v323
        %v1047 = vpack.c.b16 %v1016, %v1015
        %v1048 = vpack.c.b16 %v1018, %v1017
        %v1049 = vpack.c.b16 %v1020, %v1019
        %v1050 = vpack.c.b16 %v1022, %v1021
        %v1051 = vpack.c.b16 %v1024, %v1023
        %v1052 = vpack.c.b16 %v1026, %v1025
        %v1053 = vpack.c.b16 %v1028, %v1027
        %v1054 = vpack.c.b16 %v1030, %v1029
        %v1055 = vpack.c.b16 %v1032, %v1031
        %v1056 = vpack.c.b16 %v1034, %v1033
        %v1057 = vpack.c.b16 %v1036, %v1035
        %v1058 = vpack.c.b16 %v1038, %v1037
        %v1059 = vpack.c.b16 %v1040, %v1039
        %v1060 = vpack.c.b16 %v1042, %v1041
        %v1061 = vpack.c.b16 %v1044, %v1043
        %v1062 = vpack.c.b16 %v1046, %v1045
        %v1064 = vsel %vm769, %v1047, 0
        %v1067 = vsel %vm769, %v1048, 0
        %v1070 = vsel %vm769, %v1049, 0
        %v1073 = vsel %vm769, %v1050, 0
        %v1076 = vsel %vm769, %v1051, 0
        %v1079 = vsel %vm769, %v1052, 0
        %v1082 = vsel %vm769, %v1053, 0
        %v1085 = vsel %vm769, %v1054, 0
        %v1088 = vsel %vm769, %v1055, 0
        %v1091 = vsel %vm769, %v1056, 0
        %v1094 = vsel %vm769, %v1057, 0
        %v1097 = vsel %vm769, %v1058, 0
        %v1100 = vsel %vm769, %v1059, 0
        %v1103 = vsel %vm769, %v1060, 0
        %v1106 = vsel %vm769, %v1061, 0
        %v1109 = vsel %vm769, %v1062, 0
        %v1112 = vsel %vm818, %v331, 0
        %1114 = vmatprep.subr.bf16.mxu0 0
        %1115 = vmatpush1.bf16.msra.mxu0 %v1112
        %1116 = vmatprep.subr.bf16.mxu0 0
        %1117 = vmatpush1.bf16.msra.mxu0 0
        %1118 = vmatprep.subr.bf16.mxu0 0
        %1119 = vmatpush1.bf16.msra.mxu0 0
        %1120 = vmatprep.subr.bf16.mxu0 0
        %1121 = vmatpush1.bf16.msra.mxu0 0
        %1122 = vmatprep.subr.bf16.mxu0 0
        %1123 = vmatpush1.bf16.msra.mxu0 0
        %1124 = vmatprep.subr.bf16.mxu0 0
        %1125 = vmatpush1.bf16.msra.mxu0 0
        %1126 = vmatprep.subr.bf16.mxu0 0
        %1127 = vmatpush1.bf16.msra.mxu0 0
        %1128 = vmatprep.subr.bf16.mxu0 0
        %1129 = vmatpush1.bf16.msra.mxu0 0
        %1130 = vmatprep.subr.bf16.mxu0 0
        %1131 = vmatpush1.bf16.msra.mxu0 0
        %1132 = vmatprep.subr.bf16.mxu0 0
        %1133 = vmatpush1.bf16.msra.mxu0 0
        %1134 = vmatprep.subr.bf16.mxu0 0
        %1135 = vmatpush1.bf16.msra.mxu0 0
        %1136 = vmatprep.subr.bf16.mxu0 0
        %1137 = vmatpush1.bf16.msra.mxu0 0
        %1138 = vmatprep.subr.bf16.mxu0 0
        %1139 = vmatpush1.bf16.msra.mxu0 0
        %1140 = vmatprep.subr.bf16.mxu0 0
        %1141 = vmatpush1.bf16.msra.mxu0 0
        %1142 = vmatprep.subr.bf16.mxu0 0
        %1143 = vmatpush1.bf16.msra.mxu0 0
        %1144 = vmatprep.subr.bf16.mxu0 0
        %1145 = vmatpush1.bf16.msra.mxu0 0
        %1146 = vmatprep.mubr.bf16.mxu0 0
        %1147 = vmatmul.mubr.bf16.gmra.mrb[0].mxu0 %v1064
        %v1148 = vpop.f32.mrb[0].mxu0
        %v1149 = vadd.f32 %v857, %v1148
        %v1150 = vpop.f32.mrb[0].mxu0
        %v1151 = vpop.f32.mrb[0].mxu0
        %v1152 = vadd.f32 %v860, %v1151
        %v1153 = vpop.f32.mrb[0].mxu0
        %1154 = vmatprep.mubr.bf16.mxu0 0
        %1155 = vmatmul.mubr.bf16.gmra.mrb[0].mxu0 %v1067
        %v1156 = vpop.f32.mrb[0].mxu0
        %v1157 = vadd.f32 %v865, %v1156
        %v1158 = vpop.f32.mrb[0].mxu0
        %v1159 = vpop.f32.mrb[0].mxu0
        %v1160 = vadd.f32 %v868, %v1159
        %v1161 = vpop.f32.mrb[0].mxu0
        %1162 = vmatprep.mubr.bf16.mxu0 0
        %1163 = vmatmul.mubr.bf16.gmra.mrb[0].mxu0 %v1070
        %v1164 = vpop.f32.mrb[0].mxu0
        %v1165 = vadd.f32 %v873, %v1164
        %v1166 = vpop.f32.mrb[0].mxu0
        %v1167 = vpop.f32.mrb[0].mxu0
        %v1168 = vadd.f32 %v876, %v1167
        %v1169 = vpop.f32.mrb[0].mxu0
        %1170 = vmatprep.mubr.bf16.mxu0 0
        %1171 = vmatmul.mubr.bf16.gmra.mrb[0].mxu0 %v1073
        %v1172 = vpop.f32.mrb[0].mxu0
        %v1173 = vadd.f32 %v881, %v1172
        %v1174 = vpop.f32.mrb[0].mxu0
        %v1175 = vpop.f32.mrb[0].mxu0
        %v1176 = vadd.f32 %v884, %v1175
        %v1177 = vpop.f32.mrb[0].mxu0
        %1178 = vmatprep.mubr.bf16.mxu0 0
        %1179 = vmatmul.mubr.bf16.gmra.mrb[0].mxu0 %v1076
        %v1180 = vpop.f32.mrb[0].mxu0
        %v1181 = vadd.f32 %v889, %v1180
        %v1182 = vpop.f32.mrb[0].mxu0
        %v1183 = vpop.f32.mrb[0].mxu0
        %v1184 = vadd.f32 %v892, %v1183
        %v1185 = vpop.f32.mrb[0].mxu0
        %1186 = vmatprep.mubr.bf16.mxu0 0
        %1187 = vmatmul.mubr.bf16.gmra.mrb[0].mxu0 %v1079
        %v1188 = vpop.f32.mrb[0].mxu0
        %v1189 = vadd.f32 %v897, %v1188
        %v1190 = vpop.f32.mrb[0].mxu0
        %v1191 = vpop.f32.mrb[0].mxu0
        %v1192 = vadd.f32 %v900, %v1191
        %v1193 = vpop.f32.mrb[0].mxu0
        %1194 = vmatprep.mubr.bf16.mxu0 0
        %1195 = vmatmul.mubr.bf16.gmra.mrb[0].mxu0 %v1082
        %v1196 = vpop.f32.mrb[0].mxu0
        %v1197 = vadd.f32 %v905, %v1196
        %v1198 = vpop.f32.mrb[0].mxu0
        %v1199 = vpop.f32.mrb[0].mxu0
        %v1200 = vadd.f32 %v908, %v1199
        %v1201 = vpop.f32.mrb[0].mxu0
        %1202 = vmatprep.mubr.bf16.mxu0 0
        %1203 = vmatmul.mubr.bf16.gmra.mrb[0].mxu0 %v1085
        %v1204 = vpop.f32.mrb[0].mxu0
        %v1205 = vadd.f32 %v913, %v1204
        %v1206 = vpop.f32.mrb[0].mxu0
        %v1207 = vpop.f32.mrb[0].mxu0
        %v1208 = vadd.f32 %v916, %v1207
        %v1209 = vpop.f32.mrb[0].mxu0
        %1210 = vmatprep.mubr.bf16.mxu0 0
        %1211 = vmatmul.mubr.bf16.gmra.mrb[0].mxu0 %v1088
        %v1212 = vpop.f32.mrb[0].mxu0
        %v1213 = vadd.f32 %v921, %v1212
        %v1214 = vpop.f32.mrb[0].mxu0
        %v1215 = vpop.f32.mrb[0].mxu0
        %v1216 = vadd.f32 %v924, %v1215
        %v1217 = vpop.f32.mrb[0].mxu0
        %1218 = vmatprep.mubr.bf16.mxu0 0
        %1219 = vmatmul.mubr.bf16.gmra.mrb[0].mxu0 %v1091
        %v1220 = vpop.f32.mrb[0].mxu0
        %v1221 = vadd.f32 %v929, %v1220
        %v1222 = vpop.f32.mrb[0].mxu0
        %v1223 = vpop.f32.mrb[0].mxu0
        %v1224 = vadd.f32 %v932, %v1223
        %v1225 = vpop.f32.mrb[0].mxu0
        %1226 = vmatprep.mubr.bf16.mxu0 0
        %1227 = vmatmul.mubr.bf16.gmra.mrb[0].mxu0 %v1094
        %v1228 = vpop.f32.mrb[0].mxu0
        %v1229 = vadd.f32 %v937, %v1228
        %v1230 = vpop.f32.mrb[0].mxu0
        %v1231 = vpop.f32.mrb[0].mxu0
        %v1232 = vadd.f32 %v940, %v1231
        %v1233 = vpop.f32.mrb[0].mxu0
        %1234 = vmatprep.mubr.bf16.mxu0 0
        %1235 = vmatmul.mubr.bf16.gmra.mrb[0].mxu0 %v1097
        %v1236 = vpop.f32.mrb[0].mxu0
        %v1237 = vadd.f32 %v945, %v1236
        %v1238 = vpop.f32.mrb[0].mxu0
        %v1239 = vpop.f32.mrb[0].mxu0
        %v1240 = vadd.f32 %v948, %v1239
        %v1241 = vpop.f32.mrb[0].mxu0
        %1242 = vmatprep.mubr.bf16.mxu0 0
        %1243 = vmatmul.mubr.bf16.gmra.mrb[0].mxu0 %v1100
        %v1244 = vpop.f32.mrb[0].mxu0
        %v1245 = vadd.f32 %v953, %v1244
        %v1246 = vpop.f32.mrb[0].mxu0
        %v1247 = vpop.f32.mrb[0].mxu0
        %v1248 = vadd.f32 %v956, %v1247
        %v1249 = vpop.f32.mrb[0].mxu0
        %1250 = vmatprep.mubr.bf16.mxu0 0
        %1251 = vmatmul.mubr.bf16.gmra.mrb[0].mxu0 %v1103
        %v1252 = vpop.f32.mrb[0].mxu0
        %v1253 = vadd.f32 %v961, %v1252
        %v1254 = vpop.f32.mrb[0].mxu0
        %v1255 = vpop.f32.mrb[0].mxu0
        %v1256 = vadd.f32 %v964, %v1255
        %v1257 = vpop.f32.mrb[0].mxu0
        %1258 = vmatprep.mubr.bf16.mxu0 0
        %1259 = vmatmul.mubr.bf16.gmra.mrb[0].mxu0 %v1106
        %v1260 = vpop.f32.mrb[0].mxu0
        %v1261 = vadd.f32 %v969, %v1260
        %v1262 = vpop.f32.mrb[0].mxu0
        %v1263 = vpop.f32.mrb[0].mxu0
        %v1264 = vadd.f32 %v972, %v1263
        %v1265 = vpop.f32.mrb[0].mxu0
        %1266 = vmatprep.mubr.bf16.mxu0 0
        %1267 = vmatmul.mubr.bf16.gmra.mrb[0].mxu0 %v1109
        %v1268 = vpop.f32.mrb[0].mxu0
        %v1269 = vadd.f32 %v977, %v1268
        %v1270 = vpop.f32.mrb[0].mxu0
        %v1271 = vpop.f32.mrb[0].mxu0
        %v1272 = vadd.f32 %v980, %v1271
        %v1273 = vpop.f32.mrb[0].mxu0
        %1274 = vdwg.mxu0
        %vm1291 = vcmask 1042432
        %vm1292 = vcmask 1046532
        %vm1293 = vmor %vm1291, %vm1292
        %v1294 = vrot.slane %v277, 5
        %v1295 = vrot.slane %v1294, 4
        %v1296 = vrot.slane %v278, 5
        %v1297 = vsel %vm1293, %v1295, %v1296
        %v1298 = vrot.slane %v1296, 4
        %v1299 = vrot.slane %v279, 5
        %v1300 = vsel %vm1293, %v1298, %v1299
        %v1301 = vrot.slane %v280, 5
        %v1302 = vrot.slane %v1301, 4
        %v1303 = vrot.slane %v281, 5
        %v1304 = vsel %vm1293, %v1302, %v1303
        %v1305 = vrot.slane %v1303, 4
        %v1306 = vrot.slane %v282, 5
        %v1307 = vsel %vm1293, %v1305, %v1306
        %v1308 = vrot.slane %v283, 5
        %v1309 = vrot.slane %v1308, 4
        %v1310 = vrot.slane %v284, 5
        %v1311 = vsel %vm1293, %v1309, %v1310
        %v1312 = vrot.slane %v1310, 4
        %v1313 = vrot.slane %v285, 5
        %v1314 = vsel %vm1293, %v1312, %v1313
        %v1315 = vrot.slane %v286, 5
        %v1316 = vrot.slane %v1315, 4
        %v1317 = vrot.slane %v287, 5
        %v1318 = vsel %vm1293, %v1316, %v1317
        %v1319 = vrot.slane %v1317, 4
        %v1320 = vrot.slane %v288, 5
        %v1321 = vsel %vm1293, %v1319, %v1320
        %v1322 = vrot.slane %v289, 5
        %v1323 = vrot.slane %v1322, 4
        %v1324 = vrot.slane %v290, 5
        %v1325 = vsel %vm1293, %v1323, %v1324
        %v1326 = vrot.slane %v1324, 4
        %v1327 = vrot.slane %v291, 5
        %v1328 = vsel %vm1293, %v1326, %v1327
        %v1329 = vrot.slane %v292, 5
        %v1330 = vrot.slane %v1329, 4
        %v1331 = vrot.slane %v293, 5
        %v1332 = vsel %vm1293, %v1330, %v1331
        %v1333 = vrot.slane %v1331, 4
        %v1334 = vrot.slane %v294, 5
        %v1335 = vsel %vm1293, %v1333, %v1334
        %v1336 = vrot.slane %v295, 5
        %v1337 = vrot.slane %v1336, 4
        %v1338 = vrot.slane %v296, 5
        %v1339 = vsel %vm1293, %v1337, %v1338
        %v1340 = vrot.slane %v1338, 4
        %v1341 = vrot.slane %v297, 5
        %v1342 = vsel %vm1293, %v1340, %v1341
        %v1343 = vrot.slane %v298, 5
        %v1344 = vrot.slane %v1343, 4
        %v1345 = vrot.slane %v299, 5
        %v1346 = vsel %vm1293, %v1344, %v1345
        %v1347 = vrot.slane %v1345, 4
        %v1348 = vrot.slane %v300, 5
        %v1349 = vsel %vm1293, %v1347, %v1348
        %v1350 = vrot.slane %v301, 5
        %v1351 = vrot.slane %v1350, 4
        %v1352 = vrot.slane %v302, 5
        %v1353 = vsel %vm1293, %v1351, %v1352
        %v1354 = vrot.slane %v1352, 4
        %v1355 = vrot.slane %v303, 5
        %v1356 = vsel %vm1293, %v1354, %v1355
        %v1357 = vrot.slane %v304, 5
        %v1358 = vrot.slane %v1357, 4
        %v1359 = vrot.slane %v305, 5
        %v1360 = vsel %vm1293, %v1358, %v1359
        %v1361 = vrot.slane %v1359, 4
        %v1362 = vrot.slane %v306, 5
        %v1363 = vsel %vm1293, %v1361, %v1362
        %v1364 = vrot.slane %v307, 5
        %v1365 = vrot.slane %v1364, 4
        %v1366 = vrot.slane %v308, 5
        %v1367 = vsel %vm1293, %v1365, %v1366
        %v1368 = vrot.slane %v1366, 4
        %v1369 = vrot.slane %v309, 5
        %v1370 = vsel %vm1293, %v1368, %v1369
        %v1371 = vrot.slane %v310, 5
        %v1372 = vrot.slane %v1371, 4
        %v1373 = vrot.slane %v311, 5
        %v1374 = vsel %vm1293, %v1372, %v1373
        %v1375 = vrot.slane %v1373, 4
        %v1376 = vrot.slane %v312, 5
        %v1377 = vsel %vm1293, %v1375, %v1376
        %v1378 = vrot.slane %v313, 5
        %v1379 = vrot.slane %v1378, 4
        %v1380 = vrot.slane %v314, 5
        %v1381 = vsel %vm1293, %v1379, %v1380
        %v1382 = vrot.slane %v1380, 4
        %v1383 = vrot.slane %v315, 5
        %v1384 = vsel %vm1293, %v1382, %v1383
        %v1385 = vrot.slane %v316, 5
        %v1386 = vrot.slane %v1385, 4
        %v1387 = vrot.slane %v317, 5
        %v1388 = vsel %vm1293, %v1386, %v1387
        %v1389 = vrot.slane %v1387, 4
        %v1390 = vrot.slane %v318, 5
        %v1391 = vsel %vm1293, %v1389, %v1390
        %v1392 = vrot.slane %v319, 5
        %v1393 = vrot.slane %v1392, 4
        %v1394 = vrot.slane %v320, 5
        %v1395 = vsel %vm1293, %v1393, %v1394
        %v1396 = vrot.slane %v1394, 4
        %v1397 = vrot.slane %v321, 5
        %v1398 = vsel %vm1293, %v1396, %v1397
        %v1399 = vrot.slane %v322, 5
        %v1400 = vrot.slane %v1399, 4
        %v1401 = vrot.slane %v323, 5
        %v1402 = vsel %vm1293, %v1400, %v1401
        %v1403 = vrot.slane %v1401, 4
        %v1404 = vrot.slane %v324, 5
        %v1405 = vsel %vm1293, %v1403, %v1404
        %s1406 = scalar_lea.vmem %s2, 4
        %v1407 = vld [vmem:[%s1406] sm:$0x3]
        %v1408 = vunpack.c.l.b16 %v1297
        %v1409 = vunpack.c.l.b16 %v1300
        %v1410 = vunpack.c.l.b16 %v1304
        %v1411 = vunpack.c.l.b16 %v1307
        %v1412 = vunpack.c.l.b16 %v1311
        %v1413 = vunpack.c.l.b16 %v1314
        %v1414 = vunpack.c.l.b16 %v1318
        %v1415 = vunpack.c.l.b16 %v1321
        %v1416 = vunpack.c.l.b16 %v1325
        %v1417 = vunpack.c.l.b16 %v1328
        %v1418 = vunpack.c.l.b16 %v1332
        %v1419 = vunpack.c.l.b16 %v1335
        %v1420 = vunpack.c.l.b16 %v1339
        %v1421 = vunpack.c.l.b16 %v1342
        %v1422 = vunpack.c.l.b16 %v1346
        %v1423 = vunpack.c.l.b16 %v1349
        %v1424 = vunpack.c.l.b16 %v1353
        %v1425 = vunpack.c.l.b16 %v1356
        %v1426 = vunpack.c.l.b16 %v1360
        %v1427 = vunpack.c.l.b16 %v1363
        %v1428 = vunpack.c.l.b16 %v1367
        %v1429 = vunpack.c.l.b16 %v1370
        %v1430 = vunpack.c.l.b16 %v1374
        %v1431 = vunpack.c.l.b16 %v1377
        %v1432 = vunpack.c.l.b16 %v1381
        %v1433 = vunpack.c.l.b16 %v1384
        %v1434 = vunpack.c.l.b16 %v1388
        %v1435 = vunpack.c.l.b16 %v1391
        %v1436 = vunpack.c.l.b16 %v1395
        %v1437 = vunpack.c.l.b16 %v1398
        %v1438 = vunpack.c.l.b16 %v1402
        %v1439 = vunpack.c.l.b16 %v1405
        %v1440 = vpack.c.b16 %v1409, %v1408
        %v1441 = vpack.c.b16 %v1411, %v1410
        %v1442 = vpack.c.b16 %v1413, %v1412
        %v1443 = vpack.c.b16 %v1415, %v1414
        %v1444 = vpack.c.b16 %v1417, %v1416
        %v1445 = vpack.c.b16 %v1419, %v1418
        %v1446 = vpack.c.b16 %v1421, %v1420
        %v1447 = vpack.c.b16 %v1423, %v1422
        %v1448 = vpack.c.b16 %v1425, %v1424
        %v1449 = vpack.c.b16 %v1427, %v1426
        %v1450 = vpack.c.b16 %v1429, %v1428
        %v1451 = vpack.c.b16 %v1431, %v1430
        %v1452 = vpack.c.b16 %v1433, %v1432
        %v1453 = vpack.c.b16 %v1435, %v1434
        %v1454 = vpack.c.b16 %v1437, %v1436
        %v1455 = vpack.c.b16 %v1439, %v1438
        %v1457 = vsel %vm769, %v1440, 0
        %v1460 = vsel %vm769, %v1441, 0
        %v1463 = vsel %vm769, %v1442, 0
        %v1466 = vsel %vm769, %v1443, 0
        %v1469 = vsel %vm769, %v1444, 0
        %v1472 = vsel %vm769, %v1445, 0
        %v1475 = vsel %vm769, %v1446, 0
        %v1478 = vsel %vm769, %v1447, 0
        %v1481 = vsel %vm769, %v1448, 0
        %v1484 = vsel %vm769, %v1449, 0
        %v1487 = vsel %vm769, %v1450, 0
        %v1490 = vsel %vm769, %v1451, 0
        %v1493 = vsel %vm769, %v1452, 0
        %v1496 = vsel %vm769, %v1453, 0
        %v1499 = vsel %vm769, %v1454, 0
        %v1502 = vsel %vm769, %v1455, 0
        %v1505 = vsel %vm818, %v1407, 0
        %1507 = vmatprep.subr.bf16.mxu0 0
        %1508 = vmatpush1.bf16.msra.mxu0 %v1505
        %1509 = vmatprep.subr.bf16.mxu0 0
        %1510 = vmatpush1.bf16.msra.mxu0 0
        %1511 = vmatprep.subr.bf16.mxu0 0
        %1512 = vmatpush1.bf16.msra.mxu0 0
        %1513 = vmatprep.subr.bf16.mxu0 0
        %1514 = vmatpush1.bf16.msra.mxu0 0
        %1515 = vmatprep.subr.bf16.mxu0 0
        %1516 = vmatpush1.bf16.msra.mxu0 0
        %1517 = vmatprep.subr.bf16.mxu0 0
        %1518 = vmatpush1.bf16.msra.mxu0 0
        %1519 = vmatprep.subr.bf16.mxu0 0
        %1520 = vmatpush1.bf16.msra.mxu0 0
        %1521 = vmatprep.subr.bf16.mxu0 0
        %1522 = vmatpush1.bf16.msra.mxu0 0
        %1523 = vmatprep.subr.bf16.mxu0 0
        %1524 = vmatpush1.bf16.msra.mxu0 0
        %1525 = vmatprep.subr.bf16.mxu0 0
        %1526 = vmatpush1.bf16.msra.mxu0 0
        %1527 = vmatprep.subr.bf16.mxu0 0
        %1528 = vmatpush1.bf16.msra.mxu0 0
        %1529 = vmatprep.subr.bf16.mxu0 0
        %1530 = vmatpush1.bf16.msra.mxu0 0
        %1531 = vmatprep.subr.bf16.mxu0 0
        %1532 = vmatpush1.bf16.msra.mxu0 0
        %1533 = vmatprep.subr.bf16.mxu0 0
        %1534 = vmatpush1.bf16.msra.mxu0 0
        %1535 = vmatprep.subr.bf16.mxu0 0
        %1536 = vmatpush1.bf16.msra.mxu0 0
        %1537 = vmatprep.subr.bf16.mxu0 0
        %1538 = vmatpush1.bf16.msra.mxu0 0
        %1539 = vmatprep.mubr.bf16.mxu0 0
        %1540 = vmatmul.mubr.bf16.gmra.mrb[0].mxu0 %v1457
        %v1541 = vpop.f32.mrb[0].mxu0
        %v1542 = vadd.f32 0.0, %v1541
        %v1543 = vpop.f32.mrb[0].mxu0
        %v1544 = vpop.f32.mrb[0].mxu0
        %v1545 = vadd.f32 0.0, %v1544
        %v1546 = vpop.f32.mrb[0].mxu0
        %1547 = vmatprep.mubr.bf16.mxu0 0
        %1548 = vmatmul.mubr.bf16.gmra.mrb[0].mxu0 %v1460
        %v1549 = vpop.f32.mrb[0].mxu0
        %v1550 = vadd.f32 0.0, %v1549
        %v1551 = vpop.f32.mrb[0].mxu0
        %v1552 = vpop.f32.mrb[0].mxu0
        %v1553 = vadd.f32 0.0, %v1552
        %v1554 = vpop.f32.mrb[0].mxu0
        %1555 = vmatprep.mubr.bf16.mxu0 0
        %1556 = vmatmul.mubr.bf16.gmra.mrb[0].mxu0 %v1463
        %v1557 = vpop.f32.mrb[0].mxu0
        %v1558 = vadd.f32 0.0, %v1557
        %v1559 = vpop.f32.mrb[0].mxu0
        %v1560 = vpop.f32.mrb[0].mxu0
        %v1561 = vadd.f32 0.0, %v1560
        %v1562 = vpop.f32.mrb[0].mxu0
        %1563 = vmatprep.mubr.bf16.mxu0 0
        %1564 = vmatmul.mubr.bf16.gmra.mrb[0].mxu0 %v1466
        %v1565 = vpop.f32.mrb[0].mxu0
        %v1566 = vadd.f32 0.0, %v1565
        %v1567 = vpop.f32.mrb[0].mxu0
        %v1568 = vpop.f32.mrb[0].mxu0
        %v1569 = vadd.f32 0.0, %v1568
        %v1570 = vpop.f32.mrb[0].mxu0
        %1571 = vmatprep.mubr.bf16.mxu0 0
        %1572 = vmatmul.mubr.bf16.gmra.mrb[0].mxu0 %v1469
        %v1573 = vpop.f32.mrb[0].mxu0
        %v1574 = vadd.f32 0.0, %v1573
        %v1575 = vpop.f32.mrb[0].mxu0
        %v1576 = vpop.f32.mrb[0].mxu0
        %v1577 = vadd.f32 0.0, %v1576
        %v1578 = vpop.f32.mrb[0].mxu0
        %1579 = vmatprep.mubr.bf16.mxu0 0
        %1580 = vmatmul.mubr.bf16.gmra.mrb[0].mxu0 %v1472
        %v1581 = vpop.f32.mrb[0].mxu0
        %v1582 = vadd.f32 0.0, %v1581
        %v1583 = vpop.f32.mrb[0].mxu0
        %v1584 = vpop.f32.mrb[0].mxu0
        %v1585 = vadd.f32 0.0, %v1584
        %v1586 = vpop.f32.mrb[0].mxu0
        %1587 = vmatprep.mubr.bf16.mxu0 0
        %1588 = vmatmul.mubr.bf16.gmra.mrb[0].mxu0 %v1475
        %v1589 = vpop.f32.mrb[0].mxu0
        %v1590 = vadd.f32 0.0, %v1589
        %v1591 = vpop.f32.mrb[0].mxu0
        %v1592 = vpop.f32.mrb[0].mxu0
        %v1593 = vadd.f32 0.0, %v1592
        %v1594 = vpop.f32.mrb[0].mxu0
        %1595 = vmatprep.mubr.bf16.mxu0 0
        %1596 = vmatmul.mubr.bf16.gmra.mrb[0].mxu0 %v1478
        %v1597 = vpop.f32.mrb[0].mxu0
        %v1598 = vadd.f32 0.0, %v1597
        %v1599 = vpop.f32.mrb[0].mxu0
        %v1600 = vpop.f32.mrb[0].mxu0
        %v1601 = vadd.f32 0.0, %v1600
        %v1602 = vpop.f32.mrb[0].mxu0
        %1603 = vmatprep.mubr.bf16.mxu0 0
        %1604 = vmatmul.mubr.bf16.gmra.mrb[0].mxu0 %v1481
        %v1605 = vpop.f32.mrb[0].mxu0
        %v1606 = vadd.f32 0.0, %v1605
        %v1607 = vpop.f32.mrb[0].mxu0
        %v1608 = vpop.f32.mrb[0].mxu0
        %v1609 = vadd.f32 0.0, %v1608
        %v1610 = vpop.f32.mrb[0].mxu0
        %1611 = vmatprep.mubr.bf16.mxu0 0
        %1612 = vmatmul.mubr.bf16.gmra.mrb[0].mxu0 %v1484
        %v1613 = vpop.f32.mrb[0].mxu0
        %v1614 = vadd.f32 0.0, %v1613
        %v1615 = vpop.f32.mrb[0].mxu0
        %v1616 = vpop.f32.mrb[0].mxu0
        %v1617 = vadd.f32 0.0, %v1616
        %v1618 = vpop.f32.mrb[0].mxu0
        %1619 = vmatprep.mubr.bf16.mxu0 0
        %1620 = vmatmul.mubr.bf16.gmra.mrb[0].mxu0 %v1487
        %v1621 = vpop.f32.mrb[0].mxu0
        %v1622 = vadd.f32 0.0, %v1621
        %v1623 = vpop.f32.mrb[0].mxu0
        %v1624 = vpop.f32.mrb[0].mxu0
        %v1625 = vadd.f32 0.0, %v1624
        %v1626 = vpop.f32.mrb[0].mxu0
        %1627 = vmatprep.mubr.bf16.mxu0 0
        %1628 = vmatmul.mubr.bf16.gmra.mrb[0].mxu0 %v1490
        %v1629 = vpop.f32.mrb[0].mxu0
        %v1630 = vadd.f32 0.0, %v1629
        %v1631 = vpop.f32.mrb[0].mxu0
        %v1632 = vpop.f32.mrb[0].mxu0
        %v1633 = vadd.f32 0.0, %v1632
        %v1634 = vpop.f32.mrb[0].mxu0
        %1635 = vmatprep.mubr.bf16.mxu0 0
        %1636 = vmatmul.mubr.bf16.gmra.mrb[0].mxu0 %v1493
        %v1637 = vpop.f32.mrb[0].mxu0
        %v1638 = vadd.f32 0.0, %v1637
        %v1639 = vpop.f32.mrb[0].mxu0
        %v1640 = vpop.f32.mrb[0].mxu0
        %v1641 = vadd.f32 0.0, %v1640
        %v1642 = vpop.f32.mrb[0].mxu0
        %1643 = vmatprep.mubr.bf16.mxu0 0
        %1644 = vmatmul.mubr.bf16.gmra.mrb[0].mxu0 %v1496
        %v1645 = vpop.f32.mrb[0].mxu0
        %v1646 = vadd.f32 0.0, %v1645
        %v1647 = vpop.f32.mrb[0].mxu0
        %v1648 = vpop.f32.mrb[0].mxu0
        %v1649 = vadd.f32 0.0, %v1648
        %v1650 = vpop.f32.mrb[0].mxu0
        %1651 = vmatprep.mubr.bf16.mxu0 0
        %1652 = vmatmul.mubr.bf16.gmra.mrb[0].mxu0 %v1499
        %v1653 = vpop.f32.mrb[0].mxu0
        %v1654 = vadd.f32 0.0, %v1653
        %v1655 = vpop.f32.mrb[0].mxu0
        %v1656 = vpop.f32.mrb[0].mxu0
        %v1657 = vadd.f32 0.0, %v1656
        %v1658 = vpop.f32.mrb[0].mxu0
        %1659 = vmatprep.mubr.bf16.mxu0 0
        %1660 = vmatmul.mubr.bf16.gmra.mrb[0].mxu0 %v1502
        %v1661 = vpop.f32.mrb[0].mxu0
        %v1662 = vadd.f32 0.0, %v1661
        %v1663 = vpop.f32.mrb[0].mxu0
        %v1664 = vpop.f32.mrb[0].mxu0
        %v1665 = vadd.f32 0.0, %v1664
        %v1666 = vpop.f32.mrb[0].mxu0
        %1667 = vdwg.mxu0
        %v1668 = vadd.f32 %v1149, %v1542
        %v1669 = vadd.f32 %v1152, %v1545
        %v1670 = vadd.f32 %v1157, %v1550
        %v1671 = vadd.f32 %v1160, %v1553
        %v1672 = vadd.f32 %v1165, %v1558
        %v1673 = vadd.f32 %v1168, %v1561
        %v1674 = vadd.f32 %v1173, %v1566
        %v1675 = vadd.f32 %v1176, %v1569
        %v1676 = vadd.f32 %v1181, %v1574
        %v1677 = vadd.f32 %v1184, %v1577
        %v1678 = vadd.f32 %v1189, %v1582
        %v1679 = vadd.f32 %v1192, %v1585
        %v1680 = vadd.f32 %v1197, %v1590
        %v1681 = vadd.f32 %v1200, %v1593
        %v1682 = vadd.f32 %v1205, %v1598
        %v1683 = vadd.f32 %v1208, %v1601
        %v1684 = vadd.f32 %v1213, %v1606
        %v1685 = vadd.f32 %v1216, %v1609
        %v1686 = vadd.f32 %v1221, %v1614
        %v1687 = vadd.f32 %v1224, %v1617
        %v1688 = vadd.f32 %v1229, %v1622
        %v1689 = vadd.f32 %v1232, %v1625
        %v1690 = vadd.f32 %v1237, %v1630
        %v1691 = vadd.f32 %v1240, %v1633
        %v1692 = vadd.f32 %v1245, %v1638
        %v1693 = vadd.f32 %v1248, %v1641
        %v1694 = vadd.f32 %v1253, %v1646
        %v1695 = vadd.f32 %v1256, %v1649
        %v1696 = vadd.f32 %v1261, %v1654
        %v1697 = vadd.f32 %v1264, %v1657
        %v1698 = vadd.f32 %v1269, %v1662
        %v1699 = vadd.f32 %v1272, %v1665
        %s1700 = scalar_lea.vmem %s2, 6
        %v1701 = vld [vmem:[%s1700] sm:$0x3]
        %v1704 = vunpack.c.l.b16 %v325
        %v1705 = vunpack.c.l.b16 %v326
        %v1706 = vpack.c.b16 %v1705, %v1704
        %v1708 = vsel %vm769, %v1706, 0
        %v1711 = vsel %vm818, %v1701, 0
        %1713 = vmatprep.subr.bf16.mxu0 0
        %1714 = vmatpush1.bf16.msra.mxu0 %v1711
        %1715 = vmatprep.subr.bf16.mxu0 0
        %1716 = vmatpush1.bf16.msra.mxu0 0
        %1717 = vmatprep.subr.bf16.mxu0 0
        %1718 = vmatpush1.bf16.msra.mxu0 0
        %1719 = vmatprep.subr.bf16.mxu0 0
        %1720 = vmatpush1.bf16.msra.mxu0 0
        %1721 = vmatprep.subr.bf16.mxu0 0
        %1722 = vmatpush1.bf16.msra.mxu0 0
        %1723 = vmatprep.subr.bf16.mxu0 0
        %1724 = vmatpush1.bf16.msra.mxu0 0
        %1725 = vmatprep.subr.bf16.mxu0 0
        %1726 = vmatpush1.bf16.msra.mxu0 0
        %1727 = vmatprep.subr.bf16.mxu0 0
        %1728 = vmatpush1.bf16.msra.mxu0 0
        %1729 = vmatprep.subr.bf16.mxu0 0
        %1730 = vmatpush1.bf16.msra.mxu0 0
        %1731 = vmatprep.subr.bf16.mxu0 0
        %1732 = vmatpush1.bf16.msra.mxu0 0
        %1733 = vmatprep.subr.bf16.mxu0 0
        %1734 = vmatpush1.bf16.msra.mxu0 0
        %1735 = vmatprep.subr.bf16.mxu0 0
        %1736 = vmatpush1.bf16.msra.mxu0 0
        %1737 = vmatprep.subr.bf16.mxu0 0
        %1738 = vmatpush1.bf16.msra.mxu0 0
        %1739 = vmatprep.subr.bf16.mxu0 0
        %1740 = vmatpush1.bf16.msra.mxu0 0
        %1741 = vmatprep.subr.bf16.mxu0 0
        %1742 = vmatpush1.bf16.msra.mxu0 0
        %1743 = vmatprep.subr.bf16.mxu0 0
        %1744 = vmatpush1.bf16.msra.mxu0 0
        %1745 = vmatprep.mubr.bf16.mxu0 0
        %1746 = vmatmul.mubr.bf16.gmra.mrb[0].mxu0 %v1067
        %v1747 = vpop.f32.mrb[0].mxu0
        %v1748 = vadd.f32 0.0, %v1747
        %v1749 = vpop.f32.mrb[0].mxu0
        %v1750 = vpop.f32.mrb[0].mxu0
        %v1751 = vadd.f32 0.0, %v1750
        %v1752 = vpop.f32.mrb[0].mxu0
        %1753 = vmatprep.mubr.bf16.mxu0 0
        %1754 = vmatmul.mubr.bf16.gmra.mrb[0].mxu0 %v1070
        %v1755 = vpop.f32.mrb[0].mxu0
        %v1756 = vadd.f32 0.0, %v1755
        %v1757 = vpop.f32.mrb[0].mxu0
        %v1758 = vpop.f32.mrb[0].mxu0
        %v1759 = vadd.f32 0.0, %v1758
        %v1760 = vpop.f32.mrb[0].mxu0
        %1761 = vmatprep.mubr.bf16.mxu0 0
        %1762 = vmatmul.mubr.bf16.gmra.mrb[0].mxu0 %v1073
        %v1763 = vpop.f32.mrb[0].mxu0
        %v1764 = vadd.f32 0.0, %v1763
        %v1765 = vpop.f32.mrb[0].mxu0
        %v1766 = vpop.f32.mrb[0].mxu0
        %v1767 = vadd.f32 0.0, %v1766
        %v1768 = vpop.f32.mrb[0].mxu0
        %1769 = vmatprep.mubr.bf16.mxu0 0
        %1770 = vmatmul.mubr.bf16.gmra.mrb[0].mxu0 %v1076
        %v1771 = vpop.f32.mrb[0].mxu0
        %v1772 = vadd.f32 0.0, %v1771
        %v1773 = vpop.f32.mrb[0].mxu0
        %v1774 = vpop.f32.mrb[0].mxu0
        %v1775 = vadd.f32 0.0, %v1774
        %v1776 = vpop.f32.mrb[0].mxu0
        %1777 = vmatprep.mubr.bf16.mxu0 0
        %1778 = vmatmul.mubr.bf16.gmra.mrb[0].mxu0 %v1079
        %v1779 = vpop.f32.mrb[0].mxu0
        %v1780 = vadd.f32 0.0, %v1779
        %v1781 = vpop.f32.mrb[0].mxu0
        %v1782 = vpop.f32.mrb[0].mxu0
        %v1783 = vadd.f32 0.0, %v1782
        %v1784 = vpop.f32.mrb[0].mxu0
        %1785 = vmatprep.mubr.bf16.mxu0 0
        %1786 = vmatmul.mubr.bf16.gmra.mrb[0].mxu0 %v1082
        %v1787 = vpop.f32.mrb[0].mxu0
        %v1788 = vadd.f32 0.0, %v1787
        %v1789 = vpop.f32.mrb[0].mxu0
        %v1790 = vpop.f32.mrb[0].mxu0
        %v1791 = vadd.f32 0.0, %v1790
        %v1792 = vpop.f32.mrb[0].mxu0
        %1793 = vmatprep.mubr.bf16.mxu0 0
        %1794 = vmatmul.mubr.bf16.gmra.mrb[0].mxu0 %v1085
        %v1795 = vpop.f32.mrb[0].mxu0
        %v1796 = vadd.f32 0.0, %v1795
        %v1797 = vpop.f32.mrb[0].mxu0
        %v1798 = vpop.f32.mrb[0].mxu0
        %v1799 = vadd.f32 0.0, %v1798
        %v1800 = vpop.f32.mrb[0].mxu0
        %1801 = vmatprep.mubr.bf16.mxu0 0
        %1802 = vmatmul.mubr.bf16.gmra.mrb[0].mxu0 %v1088
        %v1803 = vpop.f32.mrb[0].mxu0
        %v1804 = vadd.f32 0.0, %v1803
        %v1805 = vpop.f32.mrb[0].mxu0
        %v1806 = vpop.f32.mrb[0].mxu0
        %v1807 = vadd.f32 0.0, %v1806
        %v1808 = vpop.f32.mrb[0].mxu0
        %1809 = vmatprep.mubr.bf16.mxu0 0
        %1810 = vmatmul.mubr.bf16.gmra.mrb[0].mxu0 %v1091
        %v1811 = vpop.f32.mrb[0].mxu0
        %v1812 = vadd.f32 0.0, %v1811
        %v1813 = vpop.f32.mrb[0].mxu0
        %v1814 = vpop.f32.mrb[0].mxu0
        %v1815 = vadd.f32 0.0, %v1814
        %v1816 = vpop.f32.mrb[0].mxu0
        %1817 = vmatprep.mubr.bf16.mxu0 0
        %1818 = vmatmul.mubr.bf16.gmra.mrb[0].mxu0 %v1094
        %v1819 = vpop.f32.mrb[0].mxu0
        %v1820 = vadd.f32 0.0, %v1819
        %v1821 = vpop.f32.mrb[0].mxu0
        %v1822 = vpop.f32.mrb[0].mxu0
        %v1823 = vadd.f32 0.0, %v1822
        %v1824 = vpop.f32.mrb[0].mxu0
        %1825 = vmatprep.mubr.bf16.mxu0 0
        %1826 = vmatmul.mubr.bf16.gmra.mrb[0].mxu0 %v1097
        %v1827 = vpop.f32.mrb[0].mxu0
        %v1828 = vadd.f32 0.0, %v1827
        %v1829 = vpop.f32.mrb[0].mxu0
        %v1830 = vpop.f32.mrb[0].mxu0
        %v1831 = vadd.f32 0.0, %v1830
        %v1832 = vpop.f32.mrb[0].mxu0
        %1833 = vmatprep.mubr.bf16.mxu0 0
        %1834 = vmatmul.mubr.bf16.gmra.mrb[0].mxu0 %v1100
        %v1835 = vpop.f32.mrb[0].mxu0
        %v1836 = vadd.f32 0.0, %v1835
        %v1837 = vpop.f32.mrb[0].mxu0
        %v1838 = vpop.f32.mrb[0].mxu0
        %v1839 = vadd.f32 0.0, %v1838
        %v1840 = vpop.f32.mrb[0].mxu0
        %1841 = vmatprep.mubr.bf16.mxu0 0
        %1842 = vmatmul.mubr.bf16.gmra.mrb[0].mxu0 %v1103
        %v1843 = vpop.f32.mrb[0].mxu0
        %v1844 = vadd.f32 0.0, %v1843
        %v1845 = vpop.f32.mrb[0].mxu0
        %v1846 = vpop.f32.mrb[0].mxu0
        %v1847 = vadd.f32 0.0, %v1846
        %v1848 = vpop.f32.mrb[0].mxu0
        %1849 = vmatprep.mubr.bf16.mxu0 0
        %1850 = vmatmul.mubr.bf16.gmra.mrb[0].mxu0 %v1106
        %v1851 = vpop.f32.mrb[0].mxu0
        %v1852 = vadd.f32 0.0, %v1851
        %v1853 = vpop.f32.mrb[0].mxu0
        %v1854 = vpop.f32.mrb[0].mxu0
        %v1855 = vadd.f32 0.0, %v1854
        %v1856 = vpop.f32.mrb[0].mxu0
        %1857 = vmatprep.mubr.bf16.mxu0 0
        %1858 = vmatmul.mubr.bf16.gmra.mrb[0].mxu0 %v1109
        %v1859 = vpop.f32.mrb[0].mxu0
        %v1860 = vadd.f32 0.0, %v1859
        %v1861 = vpop.f32.mrb[0].mxu0
        %v1862 = vpop.f32.mrb[0].mxu0
        %v1863 = vadd.f32 0.0, %v1862
        %v1864 = vpop.f32.mrb[0].mxu0
        %1865 = vmatprep.mubr.bf16.mxu0 0
        %1866 = vmatmul.mubr.bf16.gmra.mrb[0].mxu0 %v1708
        %v1867 = vpop.f32.mrb[0].mxu0
        %v1868 = vadd.f32 0.0, %v1867
        %v1869 = vpop.f32.mrb[0].mxu0
        %v1870 = vpop.f32.mrb[0].mxu0
        %v1871 = vadd.f32 0.0, %v1870
        %v1872 = vpop.f32.mrb[0].mxu0
        %1873 = vdwg.mxu0
        %v1874 = vadd.f32 %v1668, %v1748
        %v1875 = vadd.f32 %v1669, %v1751
        %v1876 = vadd.f32 %v1670, %v1756
        %v1877 = vadd.f32 %v1671, %v1759
        %v1878 = vadd.f32 %v1672, %v1764
        %v1879 = vadd.f32 %v1673, %v1767
        %v1880 = vadd.f32 %v1674, %v1772
        %v1881 = vadd.f32 %v1675, %v1775
        %v1882 = vadd.f32 %v1676, %v1780
        %v1883 = vadd.f32 %v1677, %v1783
        %v1884 = vadd.f32 %v1678, %v1788
        %v1885 = vadd.f32 %v1679, %v1791
        %v1886 = vadd.f32 %v1680, %v1796
        %v1887 = vadd.f32 %v1681, %v1799
        %v1888 = vadd.f32 %v1682, %v1804
        %v1889 = vadd.f32 %v1683, %v1807
        %v1890 = vadd.f32 %v1684, %v1812
        %v1891 = vadd.f32 %v1685, %v1815
        %v1892 = vadd.f32 %v1686, %v1820
        %v1893 = vadd.f32 %v1687, %v1823
        %v1894 = vadd.f32 %v1688, %v1828
        %v1895 = vadd.f32 %v1689, %v1831
        %v1896 = vadd.f32 %v1690, %v1836
        %v1897 = vadd.f32 %v1691, %v1839
        %v1898 = vadd.f32 %v1692, %v1844
        %v1899 = vadd.f32 %v1693, %v1847
        %v1900 = vadd.f32 %v1694, %v1852
        %v1901 = vadd.f32 %v1695, %v1855
        %v1902 = vadd.f32 %v1696, %v1860
        %v1903 = vadd.f32 %v1697, %v1863
        %v1904 = vadd.f32 %v1698, %v1868
        %v1905 = vadd.f32 %v1699, %v1871
        %v1907 = vshrl.u32 %v325, 16
        %v1909 = vrot.slane %v1907, 4
        %v1910 = vshll.u32 %v325, 16
        %v1912 = vrot.slane %v1910, 5
        %v1913 = vor.u32 %v1909, %v1912
        %v1914 = vrot.slane %v1913, 4
        %v1916 = vshll.u32 %v326, 16
        %v1918 = vrot.slane %v1916, 5
        %v1919 = vsel %vm334, %v1914, %v1918
        %v1920 = vshrl.u32 %v326, 16
        %v1922 = vrot.slane %v1920, 4
        %v1923 = vor.u32 %v1922, %v1918
        %v1924 = vrot.slane %v1923, 4
        %v1926 = vshll.u32 %v327, 16
        %v1928 = vrot.slane %v1926, 5
        %v1929 = vsel %vm334, %v1924, %v1928
        %s1930 = scalar_lea.vmem %s2, 8
        %v1931 = vld [vmem:[%s1930] sm:$0x3]
        %v1932 = vunpack.c.l.b16 %v1919
        %v1933 = vunpack.c.l.b16 %v1929
        %v1934 = vpack.c.b16 %v1933, %v1932
        %v1936 = vsel %vm769, %v1934, 0
        %v1939 = vsel %vm818, %v1931, 0
        %1941 = vmatprep.subr.bf16.mxu0 0
        %1942 = vmatpush1.bf16.msra.mxu0 %v1939
        %1943 = vmatprep.subr.bf16.mxu0 0
        %1944 = vmatpush1.bf16.msra.mxu0 0
        %1945 = vmatprep.subr.bf16.mxu0 0
        %1946 = vmatpush1.bf16.msra.mxu0 0
        %1947 = vmatprep.subr.bf16.mxu0 0
        %1948 = vmatpush1.bf16.msra.mxu0 0
        %1949 = vmatprep.subr.bf16.mxu0 0
        %1950 = vmatpush1.bf16.msra.mxu0 0
        %1951 = vmatprep.subr.bf16.mxu0 0
        %1952 = vmatpush1.bf16.msra.mxu0 0
        %1953 = vmatprep.subr.bf16.mxu0 0
        %1954 = vmatpush1.bf16.msra.mxu0 0
        %1955 = vmatprep.subr.bf16.mxu0 0
        %1956 = vmatpush1.bf16.msra.mxu0 0
        %1957 = vmatprep.subr.bf16.mxu0 0
        %1958 = vmatpush1.bf16.msra.mxu0 0
        %1959 = vmatprep.subr.bf16.mxu0 0
        %1960 = vmatpush1.bf16.msra.mxu0 0
        %1961 = vmatprep.subr.bf16.mxu0 0
        %1962 = vmatpush1.bf16.msra.mxu0 0
        %1963 = vmatprep.subr.bf16.mxu0 0
        %1964 = vmatpush1.bf16.msra.mxu0 0
        %1965 = vmatprep.subr.bf16.mxu0 0
        %1966 = vmatpush1.bf16.msra.mxu0 0
        %1967 = vmatprep.subr.bf16.mxu0 0
        %1968 = vmatpush1.bf16.msra.mxu0 0
        %1969 = vmatprep.subr.bf16.mxu0 0
        %1970 = vmatpush1.bf16.msra.mxu0 0
        %1971 = vmatprep.subr.bf16.mxu0 0
        %1972 = vmatpush1.bf16.msra.mxu0 0
        %1973 = vmatprep.mubr.bf16.mxu0 0
        %1974 = vmatmul.mubr.bf16.gmra.mrb[0].mxu0 %v774
        %v1975 = vpop.f32.mrb[0].mxu0
        %v1976 = vadd.f32 0.0, %v1975
        %v1977 = vpop.f32.mrb[0].mxu0
        %v1978 = vpop.f32.mrb[0].mxu0
        %v1979 = vadd.f32 0.0, %v1978
        %v1980 = vpop.f32.mrb[0].mxu0
        %1981 = vmatprep.mubr.bf16.mxu0 0
        %1982 = vmatmul.mubr.bf16.gmra.mrb[0].mxu0 %v777
        %v1983 = vpop.f32.mrb[0].mxu0
        %v1984 = vadd.f32 0.0, %v1983
        %v1985 = vpop.f32.mrb[0].mxu0
        %v1986 = vpop.f32.mrb[0].mxu0
        %v1987 = vadd.f32 0.0, %v1986
        %v1988 = vpop.f32.mrb[0].mxu0
        %1989 = vmatprep.mubr.bf16.mxu0 0
        %1990 = vmatmul.mubr.bf16.gmra.mrb[0].mxu0 %v780
        %v1991 = vpop.f32.mrb[0].mxu0
        %v1992 = vadd.f32 0.0, %v1991
        %v1993 = vpop.f32.mrb[0].mxu0
        %v1994 = vpop.f32.mrb[0].mxu0
        %v1995 = vadd.f32 0.0, %v1994
        %v1996 = vpop.f32.mrb[0].mxu0
        %1997 = vmatprep.mubr.bf16.mxu0 0
        %1998 = vmatmul.mubr.bf16.gmra.mrb[0].mxu0 %v783
        %v1999 = vpop.f32.mrb[0].mxu0
        %v2000 = vadd.f32 0.0, %v1999
        %v2001 = vpop.f32.mrb[0].mxu0
        %v2002 = vpop.f32.mrb[0].mxu0
        %v2003 = vadd.f32 0.0, %v2002
        %v2004 = vpop.f32.mrb[0].mxu0
        %2005 = vmatprep.mubr.bf16.mxu0 0
        %2006 = vmatmul.mubr.bf16.gmra.mrb[0].mxu0 %v786
        %v2007 = vpop.f32.mrb[0].mxu0
        %v2008 = vadd.f32 0.0, %v2007
        %v2009 = vpop.f32.mrb[0].mxu0
        %v2010 = vpop.f32.mrb[0].mxu0
        %v2011 = vadd.f32 0.0, %v2010
        %v2012 = vpop.f32.mrb[0].mxu0
        %2013 = vmatprep.mubr.bf16.mxu0 0
        %2014 = vmatmul.mubr.bf16.gmra.mrb[0].mxu0 %v789
        %v2015 = vpop.f32.mrb[0].mxu0
        %v2016 = vadd.f32 0.0, %v2015
        %v2017 = vpop.f32.mrb[0].mxu0
        %v2018 = vpop.f32.mrb[0].mxu0
        %v2019 = vadd.f32 0.0, %v2018
        %v2020 = vpop.f32.mrb[0].mxu0
        %2021 = vmatprep.mubr.bf16.mxu0 0
        %2022 = vmatmul.mubr.bf16.gmra.mrb[0].mxu0 %v792
        %v2023 = vpop.f32.mrb[0].mxu0
        %v2024 = vadd.f32 0.0, %v2023
        %v2025 = vpop.f32.mrb[0].mxu0
        %v2026 = vpop.f32.mrb[0].mxu0
        %v2027 = vadd.f32 0.0, %v2026
        %v2028 = vpop.f32.mrb[0].mxu0
        %2029 = vmatprep.mubr.bf16.mxu0 0
        %2030 = vmatmul.mubr.bf16.gmra.mrb[0].mxu0 %v795
        %v2031 = vpop.f32.mrb[0].mxu0
        %v2032 = vadd.f32 0.0, %v2031
        %v2033 = vpop.f32.mrb[0].mxu0
        %v2034 = vpop.f32.mrb[0].mxu0
        %v2035 = vadd.f32 0.0, %v2034
        %v2036 = vpop.f32.mrb[0].mxu0
        %2037 = vmatprep.mubr.bf16.mxu0 0
        %2038 = vmatmul.mubr.bf16.gmra.mrb[0].mxu0 %v798
        %v2039 = vpop.f32.mrb[0].mxu0
        %v2040 = vadd.f32 0.0, %v2039
        %v2041 = vpop.f32.mrb[0].mxu0
        %v2042 = vpop.f32.mrb[0].mxu0
        %v2043 = vadd.f32 0.0, %v2042
        %v2044 = vpop.f32.mrb[0].mxu0
        %2045 = vmatprep.mubr.bf16.mxu0 0
        %2046 = vmatmul.mubr.bf16.gmra.mrb[0].mxu0 %v801
        %v2047 = vpop.f32.mrb[0].mxu0
        %v2048 = vadd.f32 0.0, %v2047
        %v2049 = vpop.f32.mrb[0].mxu0
        %v2050 = vpop.f32.mrb[0].mxu0
        %v2051 = vadd.f32 0.0, %v2050
        %v2052 = vpop.f32.mrb[0].mxu0
        %2053 = vmatprep.mubr.bf16.mxu0 0
        %2054 = vmatmul.mubr.bf16.gmra.mrb[0].mxu0 %v804
        %v2055 = vpop.f32.mrb[0].mxu0
        %v2056 = vadd.f32 0.0, %v2055
        %v2057 = vpop.f32.mrb[0].mxu0
        %v2058 = vpop.f32.mrb[0].mxu0
        %v2059 = vadd.f32 0.0, %v2058
        %v2060 = vpop.f32.mrb[0].mxu0
        %2061 = vmatprep.mubr.bf16.mxu0 0
        %2062 = vmatmul.mubr.bf16.gmra.mrb[0].mxu0 %v807
        %v2063 = vpop.f32.mrb[0].mxu0
        %v2064 = vadd.f32 0.0, %v2063
        %v2065 = vpop.f32.mrb[0].mxu0
        %v2066 = vpop.f32.mrb[0].mxu0
        %v2067 = vadd.f32 0.0, %v2066
        %v2068 = vpop.f32.mrb[0].mxu0
        %2069 = vmatprep.mubr.bf16.mxu0 0
        %2070 = vmatmul.mubr.bf16.gmra.mrb[0].mxu0 %v810
        %v2071 = vpop.f32.mrb[0].mxu0
        %v2072 = vadd.f32 0.0, %v2071
        %v2073 = vpop.f32.mrb[0].mxu0
        %v2074 = vpop.f32.mrb[0].mxu0
        %v2075 = vadd.f32 0.0, %v2074
        %v2076 = vpop.f32.mrb[0].mxu0
        %2077 = vmatprep.mubr.bf16.mxu0 0
        %2078 = vmatmul.mubr.bf16.gmra.mrb[0].mxu0 %v813
        %v2079 = vpop.f32.mrb[0].mxu0
        %v2080 = vadd.f32 0.0, %v2079
        %v2081 = vpop.f32.mrb[0].mxu0
        %v2082 = vpop.f32.mrb[0].mxu0
        %v2083 = vadd.f32 0.0, %v2082
        %v2084 = vpop.f32.mrb[0].mxu0
        %2085 = vmatprep.mubr.bf16.mxu0 0
        %2086 = vmatmul.mubr.bf16.gmra.mrb[0].mxu0 %v816
        %v2087 = vpop.f32.mrb[0].mxu0
        %v2088 = vadd.f32 0.0, %v2087
        %v2089 = vpop.f32.mrb[0].mxu0
        %v2090 = vpop.f32.mrb[0].mxu0
        %v2091 = vadd.f32 0.0, %v2090
        %v2092 = vpop.f32.mrb[0].mxu0
        %2093 = vmatprep.mubr.bf16.mxu0 0
        %2094 = vmatmul.mubr.bf16.gmra.mrb[0].mxu0 %v1936
        %v2095 = vpop.f32.mrb[0].mxu0
        %v2096 = vadd.f32 0.0, %v2095
        %v2097 = vpop.f32.mrb[0].mxu0
        %v2098 = vpop.f32.mrb[0].mxu0
        %v2099 = vadd.f32 0.0, %v2098
        %v2100 = vpop.f32.mrb[0].mxu0
        %2101 = vdwg.mxu0
        %v2102 = vadd.f32 %v1874, %v1976
        %v2103 = vadd.f32 %v1875, %v1979
        %v2104 = vadd.f32 %v1876, %v1984
        %v2105 = vadd.f32 %v1877, %v1987
        %v2106 = vadd.f32 %v1878, %v1992
        %v2107 = vadd.f32 %v1879, %v1995
        %v2108 = vadd.f32 %v1880, %v2000
        %v2109 = vadd.f32 %v1881, %v2003
        %v2110 = vadd.f32 %v1882, %v2008
        %v2111 = vadd.f32 %v1883, %v2011
        %v2112 = vadd.f32 %v1884, %v2016
        %v2113 = vadd.f32 %v1885, %v2019
        %v2114 = vadd.f32 %v1886, %v2024
        %v2115 = vadd.f32 %v1887, %v2027
        %v2116 = vadd.f32 %v1888, %v2032
        %v2117 = vadd.f32 %v1889, %v2035
        %v2118 = vadd.f32 %v1890, %v2040
        %v2119 = vadd.f32 %v1891, %v2043
        %v2120 = vadd.f32 %v1892, %v2048
        %v2121 = vadd.f32 %v1893, %v2051
        %v2122 = vadd.f32 %v1894, %v2056
        %v2123 = vadd.f32 %v1895, %v2059
        %v2124 = vadd.f32 %v1896, %v2064
        %v2125 = vadd.f32 %v1897, %v2067
        %v2126 = vadd.f32 %v1898, %v2072
        %v2127 = vadd.f32 %v1899, %v2075
        %v2128 = vadd.f32 %v1900, %v2080
        %v2129 = vadd.f32 %v1901, %v2083
        %v2130 = vadd.f32 %v1902, %v2088
        %v2131 = vadd.f32 %v1903, %v2091
        %v2132 = vadd.f32 %v1904, %v2096
        %v2133 = vadd.f32 %v1905, %v2099
        %v2135 = vrot.slane %v325, 5
        %v2136 = vrot.slane %v2135, 4
        %v2137 = vrot.slane %v326, 5
        %v2138 = vsel %vm1293, %v2136, %v2137
        %v2139 = vrot.slane %v2137, 4
        %v2140 = vrot.slane %v327, 5
        %v2141 = vsel %vm1293, %v2139, %v2140
        %s2142 = scalar_lea.vmem %s2, 10
        %v2143 = vld [vmem:[%s2142] sm:$0x3]
        %v2144 = vunpack.c.l.b16 %v2138
        %v2145 = vunpack.c.l.b16 %v2141
        %v2146 = vpack.c.b16 %v2145, %v2144
        %v2148 = vsel %vm769, %v2146, 0
        %v2151 = vsel %vm818, %v2143, 0
        %2153 = vmatprep.subr.bf16.mxu0 0
        %2154 = vmatpush1.bf16.msra.mxu0 %v2151
        %2155 = vmatprep.subr.bf16.mxu0 0
        %2156 = vmatpush1.bf16.msra.mxu0 0
        %2157 = vmatprep.subr.bf16.mxu0 0
        %2158 = vmatpush1.bf16.msra.mxu0 0
        %2159 = vmatprep.subr.bf16.mxu0 0
        %2160 = vmatpush1.bf16.msra.mxu0 0
        %2161 = vmatprep.subr.bf16.mxu0 0
        %2162 = vmatpush1.bf16.msra.mxu0 0
        %2163 = vmatprep.subr.bf16.mxu0 0
        %2164 = vmatpush1.bf16.msra.mxu0 0
        %2165 = vmatprep.subr.bf16.mxu0 0
        %2166 = vmatpush1.bf16.msra.mxu0 0
        %2167 = vmatprep.subr.bf16.mxu0 0
        %2168 = vmatpush1.bf16.msra.mxu0 0
        %2169 = vmatprep.subr.bf16.mxu0 0
        %2170 = vmatpush1.bf16.msra.mxu0 0
        %2171 = vmatprep.subr.bf16.mxu0 0
        %2172 = vmatpush1.bf16.msra.mxu0 0
        %2173 = vmatprep.subr.bf16.mxu0 0
        %2174 = vmatpush1.bf16.msra.mxu0 0
        %2175 = vmatprep.subr.bf16.mxu0 0
        %2176 = vmatpush1.bf16.msra.mxu0 0
        %2177 = vmatprep.subr.bf16.mxu0 0
        %2178 = vmatpush1.bf16.msra.mxu0 0
        %2179 = vmatprep.subr.bf16.mxu0 0
        %2180 = vmatpush1.bf16.msra.mxu0 0
        %2181 = vmatprep.subr.bf16.mxu0 0
        %2182 = vmatpush1.bf16.msra.mxu0 0
        %2183 = vmatprep.subr.bf16.mxu0 0
        %2184 = vmatpush1.bf16.msra.mxu0 0
        %2185 = vmatprep.mubr.bf16.mxu0 0
        %2186 = vmatmul.mubr.bf16.gmra.mrb[0].mxu0 %v1460
        %v2187 = vpop.f32.mrb[0].mxu0
        %v2188 = vadd.f32 0.0, %v2187
        %v2189 = vpop.f32.mrb[0].mxu0
        %v2190 = vpop.f32.mrb[0].mxu0
        %v2191 = vadd.f32 0.0, %v2190
        %v2192 = vpop.f32.mrb[0].mxu0
        %2193 = vmatprep.mubr.bf16.mxu0 0
        %2194 = vmatmul.mubr.bf16.gmra.mrb[0].mxu0 %v1463
        %v2195 = vpop.f32.mrb[0].mxu0
        %v2196 = vadd.f32 0.0, %v2195
        %v2197 = vpop.f32.mrb[0].mxu0
        %v2198 = vpop.f32.mrb[0].mxu0
        %v2199 = vadd.f32 0.0, %v2198
        %v2200 = vpop.f32.mrb[0].mxu0
        %2201 = vmatprep.mubr.bf16.mxu0 0
        %2202 = vmatmul.mubr.bf16.gmra.mrb[0].mxu0 %v1466
        %v2203 = vpop.f32.mrb[0].mxu0
        %v2204 = vadd.f32 0.0, %v2203
        %v2205 = vpop.f32.mrb[0].mxu0
        %v2206 = vpop.f32.mrb[0].mxu0
        %v2207 = vadd.f32 0.0, %v2206
        %v2208 = vpop.f32.mrb[0].mxu0
        %2209 = vmatprep.mubr.bf16.mxu0 0
        %2210 = vmatmul.mubr.bf16.gmra.mrb[0].mxu0 %v1469
        %v2211 = vpop.f32.mrb[0].mxu0
        %v2212 = vadd.f32 0.0, %v2211
        %v2213 = vpop.f32.mrb[0].mxu0
        %v2214 = vpop.f32.mrb[0].mxu0
        %v2215 = vadd.f32 0.0, %v2214
        %v2216 = vpop.f32.mrb[0].mxu0
        %2217 = vmatprep.mubr.bf16.mxu0 0
        %2218 = vmatmul.mubr.bf16.gmra.mrb[0].mxu0 %v1472
        %v2219 = vpop.f32.mrb[0].mxu0
        %v2220 = vadd.f32 0.0, %v2219
        %v2221 = vpop.f32.mrb[0].mxu0
        %v2222 = vpop.f32.mrb[0].mxu0
        %v2223 = vadd.f32 0.0, %v2222
        %v2224 = vpop.f32.mrb[0].mxu0
        %2225 = vmatprep.mubr.bf16.mxu0 0
        %2226 = vmatmul.mubr.bf16.gmra.mrb[0].mxu0 %v1475
        %v2227 = vpop.f32.mrb[0].mxu0
        %v2228 = vadd.f32 0.0, %v2227
        %v2229 = vpop.f32.mrb[0].mxu0
        %v2230 = vpop.f32.mrb[0].mxu0
        %v2231 = vadd.f32 0.0, %v2230
        %v2232 = vpop.f32.mrb[0].mxu0
        %2233 = vmatprep.mubr.bf16.mxu0 0
        %2234 = vmatmul.mubr.bf16.gmra.mrb[0].mxu0 %v1478
        %v2235 = vpop.f32.mrb[0].mxu0
        %v2236 = vadd.f32 0.0, %v2235
        %v2237 = vpop.f32.mrb[0].mxu0
        %v2238 = vpop.f32.mrb[0].mxu0
        %v2239 = vadd.f32 0.0, %v2238
        %v2240 = vpop.f32.mrb[0].mxu0
        %2241 = vmatprep.mubr.bf16.mxu0 0
        %2242 = vmatmul.mubr.bf16.gmra.mrb[0].mxu0 %v1481
        %v2243 = vpop.f32.mrb[0].mxu0
        %v2244 = vadd.f32 0.0, %v2243
        %v2245 = vpop.f32.mrb[0].mxu0
        %v2246 = vpop.f32.mrb[0].mxu0
        %v2247 = vadd.f32 0.0, %v2246
        %v2248 = vpop.f32.mrb[0].mxu0
        %2249 = vmatprep.mubr.bf16.mxu0 0
        %2250 = vmatmul.mubr.bf16.gmra.mrb[0].mxu0 %v1484
        %v2251 = vpop.f32.mrb[0].mxu0
        %v2252 = vadd.f32 0.0, %v2251
        %v2253 = vpop.f32.mrb[0].mxu0
        %v2254 = vpop.f32.mrb[0].mxu0
        %v2255 = vadd.f32 0.0, %v2254
        %v2256 = vpop.f32.mrb[0].mxu0
        %2257 = vmatprep.mubr.bf16.mxu0 0
        %2258 = vmatmul.mubr.bf16.gmra.mrb[0].mxu0 %v1487
        %v2259 = vpop.f32.mrb[0].mxu0
        %v2260 = vadd.f32 0.0, %v2259
        %v2261 = vpop.f32.mrb[0].mxu0
        %v2262 = vpop.f32.mrb[0].mxu0
        %v2263 = vadd.f32 0.0, %v2262
        %v2264 = vpop.f32.mrb[0].mxu0
        %2265 = vmatprep.mubr.bf16.mxu0 0
        %2266 = vmatmul.mubr.bf16.gmra.mrb[0].mxu0 %v1490
        %v2267 = vpop.f32.mrb[0].mxu0
        %v2268 = vadd.f32 0.0, %v2267
        %v2269 = vpop.f32.mrb[0].mxu0
        %v2270 = vpop.f32.mrb[0].mxu0
        %v2271 = vadd.f32 0.0, %v2270
        %v2272 = vpop.f32.mrb[0].mxu0
        %2273 = vmatprep.mubr.bf16.mxu0 0
        %2274 = vmatmul.mubr.bf16.gmra.mrb[0].mxu0 %v1493
        %v2275 = vpop.f32.mrb[0].mxu0
        %v2276 = vadd.f32 0.0, %v2275
        %v2277 = vpop.f32.mrb[0].mxu0
        %v2278 = vpop.f32.mrb[0].mxu0
        %v2279 = vadd.f32 0.0, %v2278
        %v2280 = vpop.f32.mrb[0].mxu0
        %2281 = vmatprep.mubr.bf16.mxu0 0
        %2282 = vmatmul.mubr.bf16.gmra.mrb[0].mxu0 %v1496
        %v2283 = vpop.f32.mrb[0].mxu0
        %v2284 = vadd.f32 0.0, %v2283
        %v2285 = vpop.f32.mrb[0].mxu0
        %v2286 = vpop.f32.mrb[0].mxu0
        %v2287 = vadd.f32 0.0, %v2286
        %v2288 = vpop.f32.mrb[0].mxu0
        %2289 = vmatprep.mubr.bf16.mxu0 0
        %2290 = vmatmul.mubr.bf16.gmra.mrb[0].mxu0 %v1499
        %v2291 = vpop.f32.mrb[0].mxu0
        %v2292 = vadd.f32 0.0, %v2291
        %v2293 = vpop.f32.mrb[0].mxu0
        %v2294 = vpop.f32.mrb[0].mxu0
        %v2295 = vadd.f32 0.0, %v2294
        %v2296 = vpop.f32.mrb[0].mxu0
        %2297 = vmatprep.mubr.bf16.mxu0 0
        %2298 = vmatmul.mubr.bf16.gmra.mrb[0].mxu0 %v1502
        %v2299 = vpop.f32.mrb[0].mxu0
        %v2300 = vadd.f32 0.0, %v2299
        %v2301 = vpop.f32.mrb[0].mxu0
        %v2302 = vpop.f32.mrb[0].mxu0
        %v2303 = vadd.f32 0.0, %v2302
        %v2304 = vpop.f32.mrb[0].mxu0
        %2305 = vmatprep.mubr.bf16.mxu0 0
        %2306 = vmatmul.mubr.bf16.gmra.mrb[0].mxu0 %v2148
        %v2307 = vpop.f32.mrb[0].mxu0
        %v2308 = vadd.f32 0.0, %v2307
        %v2309 = vpop.f32.mrb[0].mxu0
        %v2310 = vpop.f32.mrb[0].mxu0
        %v2311 = vadd.f32 0.0, %v2310
        %v2312 = vpop.f32.mrb[0].mxu0
        %2313 = vdwg.mxu0
        %v2314 = vadd.f32 %v2102, %v2188
        %v2315 = vadd.f32 %v2103, %v2191
        %v2316 = vadd.f32 %v2104, %v2196
        %v2317 = vadd.f32 %v2105, %v2199
        %v2318 = vadd.f32 %v2106, %v2204
        %v2319 = vadd.f32 %v2107, %v2207
        %v2320 = vadd.f32 %v2108, %v2212
        %v2321 = vadd.f32 %v2109, %v2215
        %v2322 = vadd.f32 %v2110, %v2220
        %v2323 = vadd.f32 %v2111, %v2223
        %v2324 = vadd.f32 %v2112, %v2228
        %v2325 = vadd.f32 %v2113, %v2231
        %v2326 = vadd.f32 %v2114, %v2236
        %v2327 = vadd.f32 %v2115, %v2239
        %v2328 = vadd.f32 %v2116, %v2244
        %v2329 = vadd.f32 %v2117, %v2247
        %v2330 = vadd.f32 %v2118, %v2252
        %v2331 = vadd.f32 %v2119, %v2255
        %v2332 = vadd.f32 %v2120, %v2260
        %v2333 = vadd.f32 %v2121, %v2263
        %v2334 = vadd.f32 %v2122, %v2268
        %v2335 = vadd.f32 %v2123, %v2271
        %v2336 = vadd.f32 %v2124, %v2276
        %v2337 = vadd.f32 %v2125, %v2279
        %v2338 = vadd.f32 %v2126, %v2284
        %v2339 = vadd.f32 %v2127, %v2287
        %v2340 = vadd.f32 %v2128, %v2292
        %v2341 = vadd.f32 %v2129, %v2295
        %v2342 = vadd.f32 %v2130, %v2300
        %v2343 = vadd.f32 %v2131, %v2303
        %v2344 = vadd.f32 %v2132, %v2308
        %v2345 = vadd.f32 %v2133, %v2311
        %s2346 = scalar_lea.vmem %s2, 12
        %v2347 = vld [vmem:[%s2346] sm:$0x3]
        %v2350 = vunpack.c.l.b16 %v328
        %v2351 = vunpack.c.l.b16 %v329
        %v2352 = vpack.c.b16 %v2351, %v2350
        %v2354 = vsel %vm769, %v2352, 0
        %v2357 = vsel %vm818, %v2347, 0
        %2359 = vmatprep.subr.bf16.mxu0 0
        %2360 = vmatpush1.bf16.msra.mxu0 %v2357
        %2361 = vmatprep.subr.bf16.mxu0 0
        %2362 = vmatpush1.bf16.msra.mxu0 0
        %2363 = vmatprep.subr.bf16.mxu0 0
        %2364 = vmatpush1.bf16.msra.mxu0 0
        %2365 = vmatprep.subr.bf16.mxu0 0
        %2366 = vmatpush1.bf16.msra.mxu0 0
        %2367 = vmatprep.subr.bf16.mxu0 0
        %2368 = vmatpush1.bf16.msra.mxu0 0
        %2369 = vmatprep.subr.bf16.mxu0 0
        %2370 = vmatpush1.bf16.msra.mxu0 0
        %2371 = vmatprep.subr.bf16.mxu0 0
        %2372 = vmatpush1.bf16.msra.mxu0 0
        %2373 = vmatprep.subr.bf16.mxu0 0
        %2374 = vmatpush1.bf16.msra.mxu0 0
        %2375 = vmatprep.subr.bf16.mxu0 0
        %2376 = vmatpush1.bf16.msra.mxu0 0
        %2377 = vmatprep.subr.bf16.mxu0 0
        %2378 = vmatpush1.bf16.msra.mxu0 0
        %2379 = vmatprep.subr.bf16.mxu0 0
        %2380 = vmatpush1.bf16.msra.mxu0 0
        %2381 = vmatprep.subr.bf16.mxu0 0
        %2382 = vmatpush1.bf16.msra.mxu0 0
        %2383 = vmatprep.subr.bf16.mxu0 0
        %2384 = vmatpush1.bf16.msra.mxu0 0
        %2385 = vmatprep.subr.bf16.mxu0 0
        %2386 = vmatpush1.bf16.msra.mxu0 0
        %2387 = vmatprep.subr.bf16.mxu0 0
        %2388 = vmatpush1.bf16.msra.mxu0 0
        %2389 = vmatprep.subr.bf16.mxu0 0
        %2390 = vmatpush1.bf16.msra.mxu0 0
        %2391 = vmatprep.mubr.bf16.mxu0 0
        %2392 = vmatmul.mubr.bf16.gmra.mrb[0].mxu0 %v1070
        %v2393 = vpop.f32.mrb[0].mxu0
        %v2394 = vadd.f32 0.0, %v2393
        %v2395 = vpop.f32.mrb[0].mxu0
        %v2396 = vpop.f32.mrb[0].mxu0
        %v2397 = vadd.f32 0.0, %v2396
        %v2398 = vpop.f32.mrb[0].mxu0
        %2399 = vmatprep.mubr.bf16.mxu0 0
        %2400 = vmatmul.mubr.bf16.gmra.mrb[0].mxu0 %v1073
        %v2401 = vpop.f32.mrb[0].mxu0
        %v2402 = vadd.f32 0.0, %v2401
        %v2403 = vpop.f32.mrb[0].mxu0
        %v2404 = vpop.f32.mrb[0].mxu0
        %v2405 = vadd.f32 0.0, %v2404
        %v2406 = vpop.f32.mrb[0].mxu0
        %2407 = vmatprep.mubr.bf16.mxu0 0
        %2408 = vmatmul.mubr.bf16.gmra.mrb[0].mxu0 %v1076
        %v2409 = vpop.f32.mrb[0].mxu0
        %v2410 = vadd.f32 0.0, %v2409
        %v2411 = vpop.f32.mrb[0].mxu0
        %v2412 = vpop.f32.mrb[0].mxu0
        %v2413 = vadd.f32 0.0, %v2412
        %v2414 = vpop.f32.mrb[0].mxu0
        %2415 = vmatprep.mubr.bf16.mxu0 0
        %2416 = vmatmul.mubr.bf16.gmra.mrb[0].mxu0 %v1079
        %v2417 = vpop.f32.mrb[0].mxu0
        %v2418 = vadd.f32 0.0, %v2417
        %v2419 = vpop.f32.mrb[0].mxu0
        %v2420 = vpop.f32.mrb[0].mxu0
        %v2421 = vadd.f32 0.0, %v2420
        %v2422 = vpop.f32.mrb[0].mxu0
        %2423 = vmatprep.mubr.bf16.mxu0 0
        %2424 = vmatmul.mubr.bf16.gmra.mrb[0].mxu0 %v1082
        %v2425 = vpop.f32.mrb[0].mxu0
        %v2426 = vadd.f32 0.0, %v2425
        %v2427 = vpop.f32.mrb[0].mxu0
        %v2428 = vpop.f32.mrb[0].mxu0
        %v2429 = vadd.f32 0.0, %v2428
        %v2430 = vpop.f32.mrb[0].mxu0
        %2431 = vmatprep.mubr.bf16.mxu0 0
        %2432 = vmatmul.mubr.bf16.gmra.mrb[0].mxu0 %v1085
        %v2433 = vpop.f32.mrb[0].mxu0
        %v2434 = vadd.f32 0.0, %v2433
        %v2435 = vpop.f32.mrb[0].mxu0
        %v2436 = vpop.f32.mrb[0].mxu0
        %v2437 = vadd.f32 0.0, %v2436
        %v2438 = vpop.f32.mrb[0].mxu0
        %2439 = vmatprep.mubr.bf16.mxu0 0
        %2440 = vmatmul.mubr.bf16.gmra.mrb[0].mxu0 %v1088
        %v2441 = vpop.f32.mrb[0].mxu0
        %v2442 = vadd.f32 0.0, %v2441
        %v2443 = vpop.f32.mrb[0].mxu0
        %v2444 = vpop.f32.mrb[0].mxu0
        %v2445 = vadd.f32 0.0, %v2444
        %v2446 = vpop.f32.mrb[0].mxu0
        %2447 = vmatprep.mubr.bf16.mxu0 0
        %2448 = vmatmul.mubr.bf16.gmra.mrb[0].mxu0 %v1091
        %v2449 = vpop.f32.mrb[0].mxu0
        %v2450 = vadd.f32 0.0, %v2449
        %v2451 = vpop.f32.mrb[0].mxu0
        %v2452 = vpop.f32.mrb[0].mxu0
        %v2453 = vadd.f32 0.0, %v2452
        %v2454 = vpop.f32.mrb[0].mxu0
        %2455 = vmatprep.mubr.bf16.mxu0 0
        %2456 = vmatmul.mubr.bf16.gmra.mrb[0].mxu0 %v1094
        %v2457 = vpop.f32.mrb[0].mxu0
        %v2458 = vadd.f32 0.0, %v2457
        %v2459 = vpop.f32.mrb[0].mxu0
        %v2460 = vpop.f32.mrb[0].mxu0
        %v2461 = vadd.f32 0.0, %v2460
        %v2462 = vpop.f32.mrb[0].mxu0
        %2463 = vmatprep.mubr.bf16.mxu0 0
        %2464 = vmatmul.mubr.bf16.gmra.mrb[0].mxu0 %v1097
        %v2465 = vpop.f32.mrb[0].mxu0
        %v2466 = vadd.f32 0.0, %v2465
        %v2467 = vpop.f32.mrb[0].mxu0
        %v2468 = vpop.f32.mrb[0].mxu0
        %v2469 = vadd.f32 0.0, %v2468
        %v2470 = vpop.f32.mrb[0].mxu0
        %2471 = vmatprep.mubr.bf16.mxu0 0
        %2472 = vmatmul.mubr.bf16.gmra.mrb[0].mxu0 %v1100
        %v2473 = vpop.f32.mrb[0].mxu0
        %v2474 = vadd.f32 0.0, %v2473
        %v2475 = vpop.f32.mrb[0].mxu0
        %v2476 = vpop.f32.mrb[0].mxu0
        %v2477 = vadd.f32 0.0, %v2476
        %v2478 = vpop.f32.mrb[0].mxu0
        %2479 = vmatprep.mubr.bf16.mxu0 0
        %2480 = vmatmul.mubr.bf16.gmra.mrb[0].mxu0 %v1103
        %v2481 = vpop.f32.mrb[0].mxu0
        %v2482 = vadd.f32 0.0, %v2481
        %v2483 = vpop.f32.mrb[0].mxu0
        %v2484 = vpop.f32.mrb[0].mxu0
        %v2485 = vadd.f32 0.0, %v2484
        %v2486 = vpop.f32.mrb[0].mxu0
        %2487 = vmatprep.mubr.bf16.mxu0 0
        %2488 = vmatmul.mubr.bf16.gmra.mrb[0].mxu0 %v1106
        %v2489 = vpop.f32.mrb[0].mxu0
        %v2490 = vadd.f32 0.0, %v2489
        %v2491 = vpop.f32.mrb[0].mxu0
        %v2492 = vpop.f32.mrb[0].mxu0
        %v2493 = vadd.f32 0.0, %v2492
        %v2494 = vpop.f32.mrb[0].mxu0
        %2495 = vmatprep.mubr.bf16.mxu0 0
        %2496 = vmatmul.mubr.bf16.gmra.mrb[0].mxu0 %v1109
        %v2497 = vpop.f32.mrb[0].mxu0
        %v2498 = vadd.f32 0.0, %v2497
        %v2499 = vpop.f32.mrb[0].mxu0
        %v2500 = vpop.f32.mrb[0].mxu0
        %v2501 = vadd.f32 0.0, %v2500
        %v2502 = vpop.f32.mrb[0].mxu0
        %2503 = vmatprep.mubr.bf16.mxu0 0
        %2504 = vmatmul.mubr.bf16.gmra.mrb[0].mxu0 %v1708
        %v2505 = vpop.f32.mrb[0].mxu0
        %v2506 = vadd.f32 0.0, %v2505
        %v2507 = vpop.f32.mrb[0].mxu0
        %v2508 = vpop.f32.mrb[0].mxu0
        %v2509 = vadd.f32 0.0, %v2508
        %v2510 = vpop.f32.mrb[0].mxu0
        %2511 = vmatprep.mubr.bf16.mxu0 0
        %2512 = vmatmul.mubr.bf16.gmra.mrb[0].mxu0 %v2354
        %v2513 = vpop.f32.mrb[0].mxu0
        %v2514 = vadd.f32 0.0, %v2513
        %v2515 = vpop.f32.mrb[0].mxu0
        %v2516 = vpop.f32.mrb[0].mxu0
        %v2517 = vadd.f32 0.0, %v2516
        %v2518 = vpop.f32.mrb[0].mxu0
        %2519 = vdwg.mxu0
        %v2520 = vadd.f32 %v2314, %v2394
        %v2521 = vadd.f32 %v2315, %v2397
        %v2522 = vadd.f32 %v2316, %v2402
        %v2523 = vadd.f32 %v2317, %v2405
        %v2524 = vadd.f32 %v2318, %v2410
        %v2525 = vadd.f32 %v2319, %v2413
        %v2526 = vadd.f32 %v2320, %v2418
        %v2527 = vadd.f32 %v2321, %v2421
        %v2528 = vadd.f32 %v2322, %v2426
        %v2529 = vadd.f32 %v2323, %v2429
        %v2530 = vadd.f32 %v2324, %v2434
        %v2531 = vadd.f32 %v2325, %v2437
        %v2532 = vadd.f32 %v2326, %v2442
        %v2533 = vadd.f32 %v2327, %v2445
        %v2534 = vadd.f32 %v2328, %v2450
        %v2535 = vadd.f32 %v2329, %v2453
        %v2536 = vadd.f32 %v2330, %v2458
        %v2537 = vadd.f32 %v2331, %v2461
        %v2538 = vadd.f32 %v2332, %v2466
        %v2539 = vadd.f32 %v2333, %v2469
        %v2540 = vadd.f32 %v2334, %v2474
        %v2541 = vadd.f32 %v2335, %v2477
        %v2542 = vadd.f32 %v2336, %v2482
        %v2543 = vadd.f32 %v2337, %v2485
        %v2544 = vadd.f32 %v2338, %v2490
        %v2545 = vadd.f32 %v2339, %v2493
        %v2546 = vadd.f32 %v2340, %v2498
        %v2547 = vadd.f32 %v2341, %v2501
        %v2548 = vadd.f32 %v2342, %v2506
        %v2549 = vadd.f32 %v2343, %v2509
        %v2550 = vadd.f32 %v2344, %v2514
        %v2551 = vadd.f32 %v2345, %v2517
        %v2553 = vshrl.u32 %v328, 16
        %v2555 = vrot.slane %v2553, 4
        %v2556 = vshll.u32 %v328, 16
        %v2558 = vrot.slane %v2556, 5
        %v2559 = vor.u32 %v2555, %v2558
        %v2560 = vrot.slane %v2559, 4
        %v2562 = vshll.u32 %v329, 16
        %v2564 = vrot.slane %v2562, 5
        %v2565 = vsel %vm334, %v2560, %v2564
        %v2566 = vshrl.u32 %v329, 16
        %v2568 = vrot.slane %v2566, 4
        %v2569 = vor.u32 %v2568, %v2564
        %v2570 = vrot.slane %v2569, 4
        %v2572 = vshll.u32 %v330, 16
        %v2574 = vrot.slane %v2572, 5
        %v2575 = vsel %vm334, %v2570, %v2574
        %s2576 = scalar_lea.vmem %s2, 14
        %v2577 = vld [vmem:[%s2576] sm:$0x3]
        %v2578 = vunpack.c.l.b16 %v2565
        %v2579 = vunpack.c.l.b16 %v2575
        %v2580 = vpack.c.b16 %v2579, %v2578
        %v2582 = vsel %vm769, %v2580, 0
        %v2585 = vsel %vm818, %v2577, 0
        %2587 = vmatprep.subr.bf16.mxu0 0
        %2588 = vmatpush1.bf16.msra.mxu0 %v2585
        %2589 = vmatprep.subr.bf16.mxu0 0
        %2590 = vmatpush1.bf16.msra.mxu0 0
        %2591 = vmatprep.subr.bf16.mxu0 0
        %2592 = vmatpush1.bf16.msra.mxu0 0
        %2593 = vmatprep.subr.bf16.mxu0 0
        %2594 = vmatpush1.bf16.msra.mxu0 0
        %2595 = vmatprep.subr.bf16.mxu0 0
        %2596 = vmatpush1.bf16.msra.mxu0 0
        %2597 = vmatprep.subr.bf16.mxu0 0
        %2598 = vmatpush1.bf16.msra.mxu0 0
        %2599 = vmatprep.subr.bf16.mxu0 0
        %2600 = vmatpush1.bf16.msra.mxu0 0
        %2601 = vmatprep.subr.bf16.mxu0 0
        %2602 = vmatpush1.bf16.msra.mxu0 0
        %2603 = vmatprep.subr.bf16.mxu0 0
        %2604 = vmatpush1.bf16.msra.mxu0 0
        %2605 = vmatprep.subr.bf16.mxu0 0
        %2606 = vmatpush1.bf16.msra.mxu0 0
        %2607 = vmatprep.subr.bf16.mxu0 0
        %2608 = vmatpush1.bf16.msra.mxu0 0
        %2609 = vmatprep.subr.bf16.mxu0 0
        %2610 = vmatpush1.bf16.msra.mxu0 0
        %2611 = vmatprep.subr.bf16.mxu0 0
        %2612 = vmatpush1.bf16.msra.mxu0 0
        %2613 = vmatprep.subr.bf16.mxu0 0
        %2614 = vmatpush1.bf16.msra.mxu0 0
        %2615 = vmatprep.subr.bf16.mxu0 0
        %2616 = vmatpush1.bf16.msra.mxu0 0
        %2617 = vmatprep.subr.bf16.mxu0 0
        %2618 = vmatpush1.bf16.msra.mxu0 0
        %2619 = vmatprep.mubr.bf16.mxu0 0
        %2620 = vmatmul.mubr.bf16.gmra.mrb[0].mxu0 %v777
        %v2621 = vpop.f32.mrb[0].mxu0
        %v2622 = vadd.f32 0.0, %v2621
        %v2623 = vpop.f32.mrb[0].mxu0
        %v2624 = vpop.f32.mrb[0].mxu0
        %v2625 = vadd.f32 0.0, %v2624
        %v2626 = vpop.f32.mrb[0].mxu0
        %2627 = vmatprep.mubr.bf16.mxu0 0
        %2628 = vmatmul.mubr.bf16.gmra.mrb[0].mxu0 %v780
        %v2629 = vpop.f32.mrb[0].mxu0
        %v2630 = vadd.f32 0.0, %v2629
        %v2631 = vpop.f32.mrb[0].mxu0
        %v2632 = vpop.f32.mrb[0].mxu0
        %v2633 = vadd.f32 0.0, %v2632
        %v2634 = vpop.f32.mrb[0].mxu0
        %2635 = vmatprep.mubr.bf16.mxu0 0
        %2636 = vmatmul.mubr.bf16.gmra.mrb[0].mxu0 %v783
        %v2637 = vpop.f32.mrb[0].mxu0
        %v2638 = vadd.f32 0.0, %v2637
        %v2639 = vpop.f32.mrb[0].mxu0
        %v2640 = vpop.f32.mrb[0].mxu0
        %v2641 = vadd.f32 0.0, %v2640
        %v2642 = vpop.f32.mrb[0].mxu0
        %2643 = vmatprep.mubr.bf16.mxu0 0
        %2644 = vmatmul.mubr.bf16.gmra.mrb[0].mxu0 %v786
        %v2645 = vpop.f32.mrb[0].mxu0
        %v2646 = vadd.f32 0.0, %v2645
        %v2647 = vpop.f32.mrb[0].mxu0
        %v2648 = vpop.f32.mrb[0].mxu0
        %v2649 = vadd.f32 0.0, %v2648
        %v2650 = vpop.f32.mrb[0].mxu0
        %2651 = vmatprep.mubr.bf16.mxu0 0
        %2652 = vmatmul.mubr.bf16.gmra.mrb[0].mxu0 %v789
        %v2653 = vpop.f32.mrb[0].mxu0
        %v2654 = vadd.f32 0.0, %v2653
        %v2655 = vpop.f32.mrb[0].mxu0
        %v2656 = vpop.f32.mrb[0].mxu0
        %v2657 = vadd.f32 0.0, %v2656
        %v2658 = vpop.f32.mrb[0].mxu0
        %2659 = vmatprep.mubr.bf16.mxu0 0
        %2660 = vmatmul.mubr.bf16.gmra.mrb[0].mxu0 %v792
        %v2661 = vpop.f32.mrb[0].mxu0
        %v2662 = vadd.f32 0.0, %v2661
        %v2663 = vpop.f32.mrb[0].mxu0
        %v2664 = vpop.f32.mrb[0].mxu0
        %v2665 = vadd.f32 0.0, %v2664
        %v2666 = vpop.f32.mrb[0].mxu0
        %2667 = vmatprep.mubr.bf16.mxu0 0
        %2668 = vmatmul.mubr.bf16.gmra.mrb[0].mxu0 %v795
        %v2669 = vpop.f32.mrb[0].mxu0
        %v2670 = vadd.f32 0.0, %v2669
        %v2671 = vpop.f32.mrb[0].mxu0
        %v2672 = vpop.f32.mrb[0].mxu0
        %v2673 = vadd.f32 0.0, %v2672
        %v2674 = vpop.f32.mrb[0].mxu0
        %2675 = vmatprep.mubr.bf16.mxu0 0
        %2676 = vmatmul.mubr.bf16.gmra.mrb[0].mxu0 %v798
        %v2677 = vpop.f32.mrb[0].mxu0
        %v2678 = vadd.f32 0.0, %v2677
        %v2679 = vpop.f32.mrb[0].mxu0
        %v2680 = vpop.f32.mrb[0].mxu0
        %v2681 = vadd.f32 0.0, %v2680
        %v2682 = vpop.f32.mrb[0].mxu0
        %2683 = vmatprep.mubr.bf16.mxu0 0
        %2684 = vmatmul.mubr.bf16.gmra.mrb[0].mxu0 %v801
        %v2685 = vpop.f32.mrb[0].mxu0
        %v2686 = vadd.f32 0.0, %v2685
        %v2687 = vpop.f32.mrb[0].mxu0
        %v2688 = vpop.f32.mrb[0].mxu0
        %v2689 = vadd.f32 0.0, %v2688
        %v2690 = vpop.f32.mrb[0].mxu0
        %2691 = vmatprep.mubr.bf16.mxu0 0
        %2692 = vmatmul.mubr.bf16.gmra.mrb[0].mxu0 %v804
        %v2693 = vpop.f32.mrb[0].mxu0
        %v2694 = vadd.f32 0.0, %v2693
        %v2695 = vpop.f32.mrb[0].mxu0
        %v2696 = vpop.f32.mrb[0].mxu0
        %v2697 = vadd.f32 0.0, %v2696
        %v2698 = vpop.f32.mrb[0].mxu0
        %2699 = vmatprep.mubr.bf16.mxu0 0
        %2700 = vmatmul.mubr.bf16.gmra.mrb[0].mxu0 %v807
        %v2701 = vpop.f32.mrb[0].mxu0
        %v2702 = vadd.f32 0.0, %v2701
        %v2703 = vpop.f32.mrb[0].mxu0
        %v2704 = vpop.f32.mrb[0].mxu0
        %v2705 = vadd.f32 0.0, %v2704
        %v2706 = vpop.f32.mrb[0].mxu0
        %2707 = vmatprep.mubr.bf16.mxu0 0
        %2708 = vmatmul.mubr.bf16.gmra.mrb[0].mxu0 %v810
        %v2709 = vpop.f32.mrb[0].mxu0
        %v2710 = vadd.f32 0.0, %v2709
        %v2711 = vpop.f32.mrb[0].mxu0
        %v2712 = vpop.f32.mrb[0].mxu0
        %v2713 = vadd.f32 0.0, %v2712
        %v2714 = vpop.f32.mrb[0].mxu0
        %2715 = vmatprep.mubr.bf16.mxu0 0
        %2716 = vmatmul.mubr.bf16.gmra.mrb[0].mxu0 %v813
        %v2717 = vpop.f32.mrb[0].mxu0
        %v2718 = vadd.f32 0.0, %v2717
        %v2719 = vpop.f32.mrb[0].mxu0
        %v2720 = vpop.f32.mrb[0].mxu0
        %v2721 = vadd.f32 0.0, %v2720
        %v2722 = vpop.f32.mrb[0].mxu0
        %2723 = vmatprep.mubr.bf16.mxu0 0
        %2724 = vmatmul.mubr.bf16.gmra.mrb[0].mxu0 %v816
        %v2725 = vpop.f32.mrb[0].mxu0
        %v2726 = vadd.f32 0.0, %v2725
        %v2727 = vpop.f32.mrb[0].mxu0
        %v2728 = vpop.f32.mrb[0].mxu0
        %v2729 = vadd.f32 0.0, %v2728
        %v2730 = vpop.f32.mrb[0].mxu0
        %2731 = vmatprep.mubr.bf16.mxu0 0
        %2732 = vmatmul.mubr.bf16.gmra.mrb[0].mxu0 %v1936
        %v2733 = vpop.f32.mrb[0].mxu0
        %v2734 = vadd.f32 0.0, %v2733
        %v2735 = vpop.f32.mrb[0].mxu0
        %v2736 = vpop.f32.mrb[0].mxu0
        %v2737 = vadd.f32 0.0, %v2736
        %v2738 = vpop.f32.mrb[0].mxu0
        %2739 = vmatprep.mubr.bf16.mxu0 0
        %2740 = vmatmul.mubr.bf16.gmra.mrb[0].mxu0 %v2582
        %v2741 = vpop.f32.mrb[0].mxu0
        %v2742 = vadd.f32 0.0, %v2741
        %v2743 = vpop.f32.mrb[0].mxu0
        %v2744 = vpop.f32.mrb[0].mxu0
        %v2745 = vadd.f32 0.0, %v2744
        %v2746 = vpop.f32.mrb[0].mxu0
        %2747 = vdwg.mxu0
        %v2748 = vadd.f32 %v2520, %v2622
        %v2749 = vadd.f32 %v2521, %v2625
        %v2750 = vadd.f32 %v2522, %v2630
        %v2751 = vadd.f32 %v2523, %v2633
        %v2752 = vadd.f32 %v2524, %v2638
        %v2753 = vadd.f32 %v2525, %v2641
        %v2754 = vadd.f32 %v2526, %v2646
        %v2755 = vadd.f32 %v2527, %v2649
        %v2756 = vadd.f32 %v2528, %v2654
        %v2757 = vadd.f32 %v2529, %v2657
        %v2758 = vadd.f32 %v2530, %v2662
        %v2759 = vadd.f32 %v2531, %v2665
        %v2760 = vadd.f32 %v2532, %v2670
        %v2761 = vadd.f32 %v2533, %v2673
        %v2762 = vadd.f32 %v2534, %v2678
        %v2763 = vadd.f32 %v2535, %v2681
        %v2764 = vadd.f32 %v2536, %v2686
        %v2765 = vadd.f32 %v2537, %v2689
        %v2766 = vadd.f32 %v2538, %v2694
        %v2767 = vadd.f32 %v2539, %v2697
        %v2768 = vadd.f32 %v2540, %v2702
        %v2769 = vadd.f32 %v2541, %v2705
        %v2770 = vadd.f32 %v2542, %v2710
        %v2771 = vadd.f32 %v2543, %v2713
        %v2772 = vadd.f32 %v2544, %v2718
        %v2773 = vadd.f32 %v2545, %v2721
        %v2774 = vadd.f32 %v2546, %v2726
        %v2775 = vadd.f32 %v2547, %v2729
        %v2776 = vadd.f32 %v2548, %v2734
        %v2777 = vadd.f32 %v2549, %v2737
        %v2778 = vadd.f32 %v2550, %v2742
        %v2779 = vadd.f32 %v2551, %v2745
        %v2781 = vrot.slane %v328, 5
        %v2782 = vrot.slane %v2781, 4
        %v2783 = vrot.slane %v329, 5
        %v2784 = vsel %vm1293, %v2782, %v2783
        %v2785 = vrot.slane %v2783, 4
        %v2786 = vrot.slane %v330, 5
        %v2787 = vsel %vm1293, %v2785, %v2786
        %s2788 = scalar_lea.vmem %s2, 16
        %v2789 = vld [vmem:[%s2788] sm:$0x3]
        %v2790 = vunpack.c.l.b16 %v2784
        %v2791 = vunpack.c.l.b16 %v2787
        %v2792 = vpack.c.b16 %v2791, %v2790
        %v2794 = vsel %vm769, %v2792, 0
        %v2797 = vsel %vm818, %v2789, 0
        %2799 = vmatprep.subr.bf16.mxu0 0
        %2800 = vmatpush1.bf16.msra.mxu0 %v2797
        %2801 = vmatprep.subr.bf16.mxu0 0
        %2802 = vmatpush1.bf16.msra.mxu0 0
        %2803 = vmatprep.subr.bf16.mxu0 0
        %2804 = vmatpush1.bf16.msra.mxu0 0
        %2805 = vmatprep.subr.bf16.mxu0 0
        %2806 = vmatpush1.bf16.msra.mxu0 0
        %2807 = vmatprep.subr.bf16.mxu0 0
        %2808 = vmatpush1.bf16.msra.mxu0 0
        %2809 = vmatprep.subr.bf16.mxu0 0
        %2810 = vmatpush1.bf16.msra.mxu0 0
        %2811 = vmatprep.subr.bf16.mxu0 0
        %2812 = vmatpush1.bf16.msra.mxu0 0
        %2813 = vmatprep.subr.bf16.mxu0 0
        %2814 = vmatpush1.bf16.msra.mxu0 0
        %2815 = vmatprep.subr.bf16.mxu0 0
        %2816 = vmatpush1.bf16.msra.mxu0 0
        %2817 = vmatprep.subr.bf16.mxu0 0
        %2818 = vmatpush1.bf16.msra.mxu0 0
        %2819 = vmatprep.subr.bf16.mxu0 0
        %2820 = vmatpush1.bf16.msra.mxu0 0
        %2821 = vmatprep.subr.bf16.mxu0 0
        %2822 = vmatpush1.bf16.msra.mxu0 0
        %2823 = vmatprep.subr.bf16.mxu0 0
        %2824 = vmatpush1.bf16.msra.mxu0 0
        %2825 = vmatprep.subr.bf16.mxu0 0
        %2826 = vmatpush1.bf16.msra.mxu0 0
        %2827 = vmatprep.subr.bf16.mxu0 0
        %2828 = vmatpush1.bf16.msra.mxu0 0
        %2829 = vmatprep.subr.bf16.mxu0 0
        %2830 = vmatpush1.bf16.msra.mxu0 0
        %2831 = vmatprep.mubr.bf16.mxu0 0
        %2832 = vmatmul.mubr.bf16.gmra.mrb[0].mxu0 %v1463
        %v2833 = vpop.f32.mrb[0].mxu0
        %v2834 = vadd.f32 0.0, %v2833
        %v2835 = vpop.f32.mrb[0].mxu0
        %v2836 = vpop.f32.mrb[0].mxu0
        %v2837 = vadd.f32 0.0, %v2836
        %v2838 = vpop.f32.mrb[0].mxu0
        %2839 = vmatprep.mubr.bf16.mxu0 0
        %2840 = vmatmul.mubr.bf16.gmra.mrb[0].mxu0 %v1466
        %v2841 = vpop.f32.mrb[0].mxu0
        %v2842 = vadd.f32 0.0, %v2841
        %v2843 = vpop.f32.mrb[0].mxu0
        %v2844 = vpop.f32.mrb[0].mxu0
        %v2845 = vadd.f32 0.0, %v2844
        %v2846 = vpop.f32.mrb[0].mxu0
        %2847 = vmatprep.mubr.bf16.mxu0 0
        %2848 = vmatmul.mubr.bf16.gmra.mrb[0].mxu0 %v1469
        %v2849 = vpop.f32.mrb[0].mxu0
        %v2850 = vadd.f32 0.0, %v2849
        %v2851 = vpop.f32.mrb[0].mxu0
        %v2852 = vpop.f32.mrb[0].mxu0
        %v2853 = vadd.f32 0.0, %v2852
        %v2854 = vpop.f32.mrb[0].mxu0
        %2855 = vmatprep.mubr.bf16.mxu0 0
        %2856 = vmatmul.mubr.bf16.gmra.mrb[0].mxu0 %v1472
        %v2857 = vpop.f32.mrb[0].mxu0
        %v2858 = vadd.f32 0.0, %v2857
        %v2859 = vpop.f32.mrb[0].mxu0
        %v2860 = vpop.f32.mrb[0].mxu0
        %v2861 = vadd.f32 0.0, %v2860
        %v2862 = vpop.f32.mrb[0].mxu0
        %2863 = vmatprep.mubr.bf16.mxu0 0
        %2864 = vmatmul.mubr.bf16.gmra.mrb[0].mxu0 %v1475
        %v2865 = vpop.f32.mrb[0].mxu0
        %v2866 = vadd.f32 0.0, %v2865
        %v2867 = vpop.f32.mrb[0].mxu0
        %v2868 = vpop.f32.mrb[0].mxu0
        %v2869 = vadd.f32 0.0, %v2868
        %v2870 = vpop.f32.mrb[0].mxu0
        %2871 = vmatprep.mubr.bf16.mxu0 0
        %2872 = vmatmul.mubr.bf16.gmra.mrb[0].mxu0 %v1478
        %v2873 = vpop.f32.mrb[0].mxu0
        %v2874 = vadd.f32 0.0, %v2873
        %v2875 = vpop.f32.mrb[0].mxu0
        %v2876 = vpop.f32.mrb[0].mxu0
        %v2877 = vadd.f32 0.0, %v2876
        %v2878 = vpop.f32.mrb[0].mxu0
        %2879 = vmatprep.mubr.bf16.mxu0 0
        %2880 = vmatmul.mubr.bf16.gmra.mrb[0].mxu0 %v1481
        %v2881 = vpop.f32.mrb[0].mxu0
        %v2882 = vadd.f32 0.0, %v2881
        %v2883 = vpop.f32.mrb[0].mxu0
        %v2884 = vpop.f32.mrb[0].mxu0
        %v2885 = vadd.f32 0.0, %v2884
        %v2886 = vpop.f32.mrb[0].mxu0
        %2887 = vmatprep.mubr.bf16.mxu0 0
        %2888 = vmatmul.mubr.bf16.gmra.mrb[0].mxu0 %v1484
        %v2889 = vpop.f32.mrb[0].mxu0
        %v2890 = vadd.f32 0.0, %v2889
        %v2891 = vpop.f32.mrb[0].mxu0
        %v2892 = vpop.f32.mrb[0].mxu0
        %v2893 = vadd.f32 0.0, %v2892
        %v2894 = vpop.f32.mrb[0].mxu0
        %2895 = vmatprep.mubr.bf16.mxu0 0
        %2896 = vmatmul.mubr.bf16.gmra.mrb[0].mxu0 %v1487
        %v2897 = vpop.f32.mrb[0].mxu0
        %v2898 = vadd.f32 0.0, %v2897
        %v2899 = vpop.f32.mrb[0].mxu0
        %v2900 = vpop.f32.mrb[0].mxu0
        %v2901 = vadd.f32 0.0, %v2900
        %v2902 = vpop.f32.mrb[0].mxu0
        %2903 = vmatprep.mubr.bf16.mxu0 0
        %2904 = vmatmul.mubr.bf16.gmra.mrb[0].mxu0 %v1490
        %v2905 = vpop.f32.mrb[0].mxu0
        %v2906 = vadd.f32 0.0, %v2905
        %v2907 = vpop.f32.mrb[0].mxu0
        %v2908 = vpop.f32.mrb[0].mxu0
        %v2909 = vadd.f32 0.0, %v2908
        %v2910 = vpop.f32.mrb[0].mxu0
        %2911 = vmatprep.mubr.bf16.mxu0 0
        %2912 = vmatmul.mubr.bf16.gmra.mrb[0].mxu0 %v1493
        %v2913 = vpop.f32.mrb[0].mxu0
        %v2914 = vadd.f32 0.0, %v2913
        %v2915 = vpop.f32.mrb[0].mxu0
        %v2916 = vpop.f32.mrb[0].mxu0
        %v2917 = vadd.f32 0.0, %v2916
        %v2918 = vpop.f32.mrb[0].mxu0
        %2919 = vmatprep.mubr.bf16.mxu0 0
        %2920 = vmatmul.mubr.bf16.gmra.mrb[0].mxu0 %v1496
        %v2921 = vpop.f32.mrb[0].mxu0
        %v2922 = vadd.f32 0.0, %v2921
        %v2923 = vpop.f32.mrb[0].mxu0
        %v2924 = vpop.f32.mrb[0].mxu0
        %v2925 = vadd.f32 0.0, %v2924
        %v2926 = vpop.f32.mrb[0].mxu0
        %2927 = vmatprep.mubr.bf16.mxu0 0
        %2928 = vmatmul.mubr.bf16.gmra.mrb[0].mxu0 %v1499
        %v2929 = vpop.f32.mrb[0].mxu0
        %v2930 = vadd.f32 0.0, %v2929
        %v2931 = vpop.f32.mrb[0].mxu0
        %v2932 = vpop.f32.mrb[0].mxu0
        %v2933 = vadd.f32 0.0, %v2932
        %v2934 = vpop.f32.mrb[0].mxu0
        %2935 = vmatprep.mubr.bf16.mxu0 0
        %2936 = vmatmul.mubr.bf16.gmra.mrb[0].mxu0 %v1502
        %v2937 = vpop.f32.mrb[0].mxu0
        %v2938 = vadd.f32 0.0, %v2937
        %v2939 = vpop.f32.mrb[0].mxu0
        %v2940 = vpop.f32.mrb[0].mxu0
        %v2941 = vadd.f32 0.0, %v2940
        %v2942 = vpop.f32.mrb[0].mxu0
        %2943 = vmatprep.mubr.bf16.mxu0 0
        %2944 = vmatmul.mubr.bf16.gmra.mrb[0].mxu0 %v2148
        %v2945 = vpop.f32.mrb[0].mxu0
        %v2946 = vadd.f32 0.0, %v2945
        %v2947 = vpop.f32.mrb[0].mxu0
        %v2948 = vpop.f32.mrb[0].mxu0
        %v2949 = vadd.f32 0.0, %v2948
        %v2950 = vpop.f32.mrb[0].mxu0
        %2951 = vmatprep.mubr.bf16.mxu0 0
        %2952 = vmatmul.mubr.bf16.gmra.mrb[0].mxu0 %v2794
        %v2953 = vpop.f32.mrb[0].mxu0
        %v2954 = vadd.f32 0.0, %v2953
        %v2955 = vpop.f32.mrb[0].mxu0
        %v2956 = vpop.f32.mrb[0].mxu0
        %v2957 = vadd.f32 0.0, %v2956
        %v2958 = vpop.f32.mrb[0].mxu0
        %2959 = vdwg.mxu0
        %v2960 = vadd.f32 %v2748, %v2834
        %v2961 = vadd.f32 %v2749, %v2837
        %v2962 = vadd.f32 %v2750, %v2842
        %v2963 = vadd.f32 %v2751, %v2845
        %v2964 = vadd.f32 %v2752, %v2850
        %v2965 = vadd.f32 %v2753, %v2853
        %v2966 = vadd.f32 %v2754, %v2858
        %v2967 = vadd.f32 %v2755, %v2861
        %v2968 = vadd.f32 %v2756, %v2866
        %v2969 = vadd.f32 %v2757, %v2869
        %v2970 = vadd.f32 %v2758, %v2874
        %v2971 = vadd.f32 %v2759, %v2877
        %v2972 = vadd.f32 %v2760, %v2882
        %v2973 = vadd.f32 %v2761, %v2885
        %v2974 = vadd.f32 %v2762, %v2890
        %v2975 = vadd.f32 %v2763, %v2893
        %v2976 = vadd.f32 %v2764, %v2898
        %v2977 = vadd.f32 %v2765, %v2901
        %v2978 = vadd.f32 %v2766, %v2906
        %v2979 = vadd.f32 %v2767, %v2909
        %v2980 = vadd.f32 %v2768, %v2914
        %v2981 = vadd.f32 %v2769, %v2917
        %v2982 = vadd.f32 %v2770, %v2922
        %v2983 = vadd.f32 %v2771, %v2925
        %v2984 = vadd.f32 %v2772, %v2930
        %v2985 = vadd.f32 %v2773, %v2933
        %v2986 = vadd.f32 %v2774, %v2938
        %v2987 = vadd.f32 %v2775, %v2941
        %v2988 = vadd.f32 %v2776, %v2946
        %v2989 = vadd.f32 %v2777, %v2949
        %v2990 = vadd.f32 %v2778, %v2954
        %v2991 = vadd.f32 %v2779, %v2957
        %v2992 = vld [vmem:[%s3] sm:$0x1]
        %v2994 = vlaneseq
        %v2995 = vshrl.u32 %v2994, 7
        %v2996 = vsub.s32 0, %v2995
        %v2997 = vrot.slane %v2992, %v2996
        %v2999 = vadd.f32 %v2960, %v2997
        %v3000 = vadd.f32 %v2961, %v2997
        %v3001 = vadd.f32 %v2962, %v2997
        %v3002 = vadd.f32 %v2963, %v2997
        %v3003 = vadd.f32 %v2964, %v2997
        %v3004 = vadd.f32 %v2965, %v2997
        %v3005 = vadd.f32 %v2966, %v2997
        %v3006 = vadd.f32 %v2967, %v2997
        %v3007 = vadd.f32 %v2968, %v2997
        %v3008 = vadd.f32 %v2969, %v2997
        %v3009 = vadd.f32 %v2970, %v2997
        %v3010 = vadd.f32 %v2971, %v2997
        %v3011 = vadd.f32 %v2972, %v2997
        %v3012 = vadd.f32 %v2973, %v2997
        %v3013 = vadd.f32 %v2974, %v2997
        %v3014 = vadd.f32 %v2975, %v2997
        %v3015 = vadd.f32 %v2976, %v2997
        %v3016 = vadd.f32 %v2977, %v2997
        %v3017 = vadd.f32 %v2978, %v2997
        %v3018 = vadd.f32 %v2979, %v2997
        %v3019 = vadd.f32 %v2980, %v2997
        %v3020 = vadd.f32 %v2981, %v2997
        %v3021 = vadd.f32 %v2982, %v2997
        %v3022 = vadd.f32 %v2983, %v2997
        %v3023 = vadd.f32 %v2984, %v2997
        %v3024 = vadd.f32 %v2985, %v2997
        %v3025 = vadd.f32 %v2986, %v2997
        %v3026 = vadd.f32 %v2987, %v2997
        %v3027 = vadd.f32 %v2988, %v2997
        %v3028 = vadd.f32 %v2989, %v2997
        %v3029 = vadd.f32 %v2990, %v2997
        %v3030 = vadd.f32 %v2991, %v2997
        %v3031 = vxor.u32 %v2999, 2147483648
        %v3032 = vxor.u32 %v3000, 2147483648
        %v3033 = vxor.u32 %v3001, 2147483648
        %v3034 = vxor.u32 %v3002, 2147483648
        %v3035 = vxor.u32 %v3003, 2147483648
        %v3036 = vxor.u32 %v3004, 2147483648
        %v3037 = vxor.u32 %v3005, 2147483648
        %v3038 = vxor.u32 %v3006, 2147483648
        %v3039 = vxor.u32 %v3007, 2147483648
        %v3040 = vxor.u32 %v3008, 2147483648
        %v3041 = vxor.u32 %v3009, 2147483648
        %v3042 = vxor.u32 %v3010, 2147483648
        %v3043 = vxor.u32 %v3011, 2147483648
        %v3044 = vxor.u32 %v3012, 2147483648
        %v3045 = vxor.u32 %v3013, 2147483648
        %v3046 = vxor.u32 %v3014, 2147483648
        %v3047 = vxor.u32 %v3015, 2147483648
        %v3048 = vxor.u32 %v3016, 2147483648
        %v3049 = vxor.u32 %v3017, 2147483648
        %v3050 = vxor.u32 %v3018, 2147483648
        %v3051 = vxor.u32 %v3019, 2147483648
        %v3052 = vxor.u32 %v3020, 2147483648
        %v3053 = vxor.u32 %v3021, 2147483648
        %v3054 = vxor.u32 %v3022, 2147483648
        %v3055 = vxor.u32 %v3023, 2147483648
        %v3056 = vxor.u32 %v3024, 2147483648
        %v3057 = vxor.u32 %v3025, 2147483648
        %v3058 = vxor.u32 %v3026, 2147483648
        %v3059 = vxor.u32 %v3027, 2147483648
        %v3060 = vxor.u32 %v3028, 2147483648
        %v3061 = vxor.u32 %v3029, 2147483648
        %v3062 = vxor.u32 %v3030, 2147483648
        %v3063 = vmul.f32 %v3031, 1.442695
        %v3064 = vpow.pop %v3063
        %v3065 = vmul.f32 %v3032, 1.442695
        %v3066 = vpow.pop %v3065
        %v3067 = vmul.f32 %v3033, 1.442695
        %v3068 = vpow.pop %v3067
        %v3069 = vmul.f32 %v3034, 1.442695
        %v3070 = vpow.pop %v3069
        %v3071 = vmul.f32 %v3035, 1.442695
        %v3072 = vpow.pop %v3071
        %v3073 = vmul.f32 %v3036, 1.442695
        %v3074 = vpow.pop %v3073
        %v3075 = vmul.f32 %v3037, 1.442695
        %v3076 = vpow.pop %v3075
        %v3077 = vmul.f32 %v3038, 1.442695
        %v3078 = vpow.pop %v3077
        %v3079 = vmul.f32 %v3039, 1.442695
        %v3080 = vpow.pop %v3079
        %v3081 = vmul.f32 %v3040, 1.442695
        %v3082 = vpow.pop %v3081
        %v3083 = vmul.f32 %v3041, 1.442695
        %v3084 = vpow.pop %v3083
        %v3085 = vmul.f32 %v3042, 1.442695
        %v3086 = vpow.pop %v3085
        %v3087 = vmul.f32 %v3043, 1.442695
        %v3088 = vpow.pop %v3087
        %v3089 = vmul.f32 %v3044, 1.442695
        %v3090 = vpow.pop %v3089
        %v3091 = vmul.f32 %v3045, 1.442695
        %v3092 = vpow.pop %v3091
        %v3093 = vmul.f32 %v3046, 1.442695
        %v3094 = vpow.pop %v3093
        %v3095 = vmul.f32 %v3047, 1.442695
        %v3096 = vpow.pop %v3095
        %v3097 = vmul.f32 %v3048, 1.442695
        %v3098 = vpow.pop %v3097
        %v3099 = vmul.f32 %v3049, 1.442695
        %v3100 = vpow.pop %v3099
        %v3101 = vmul.f32 %v3050, 1.442695
        %v3102 = vpow.pop %v3101
        %v3103 = vmul.f32 %v3051, 1.442695
        %v3104 = vpow.pop %v3103
        %v3105 = vmul.f32 %v3052, 1.442695
        %v3106 = vpow.pop %v3105
        %v3107 = vmul.f32 %v3053, 1.442695
        %v3108 = vpow.pop %v3107
        %v3109 = vmul.f32 %v3054, 1.442695
        %v3110 = vpow.pop %v3109
        %v3111 = vmul.f32 %v3055, 1.442695
        %v3112 = vpow.pop %v3111
        %v3113 = vmul.f32 %v3056, 1.442695
        %v3114 = vpow.pop %v3113
        %v3115 = vmul.f32 %v3057, 1.442695
        %v3116 = vpow.pop %v3115
        %v3117 = vmul.f32 %v3058, 1.442695
        %v3118 = vpow.pop %v3117
        %v3119 = vmul.f32 %v3059, 1.442695
        %v3120 = vpow.pop %v3119
        %v3121 = vmul.f32 %v3060, 1.442695
        %v3122 = vpow.pop %v3121
        %v3123 = vmul.f32 %v3061, 1.442695
        %v3124 = vpow.pop %v3123
        %v3125 = vmul.f32 %v3062, 1.442695
        %v3126 = vpow.pop %v3125
        %v3127 = vadd.f32 %v3064, 1.0
        %v3128 = vadd.f32 %v3066, 1.0
        %v3129 = vadd.f32 %v3068, 1.0
        %v3130 = vadd.f32 %v3070, 1.0
        %v3131 = vadd.f32 %v3072, 1.0
        %v3132 = vadd.f32 %v3074, 1.0
        %v3133 = vadd.f32 %v3076, 1.0
        %v3134 = vadd.f32 %v3078, 1.0
        %v3135 = vadd.f32 %v3080, 1.0
        %v3136 = vadd.f32 %v3082, 1.0
        %v3137 = vadd.f32 %v3084, 1.0
        %v3138 = vadd.f32 %v3086, 1.0
        %v3139 = vadd.f32 %v3088, 1.0
        %v3140 = vadd.f32 %v3090, 1.0
        %v3141 = vadd.f32 %v3092, 1.0
        %v3142 = vadd.f32 %v3094, 1.0
        %v3143 = vadd.f32 %v3096, 1.0
        %v3144 = vadd.f32 %v3098, 1.0
        %v3145 = vadd.f32 %v3100, 1.0
        %v3146 = vadd.f32 %v3102, 1.0
        %v3147 = vadd.f32 %v3104, 1.0
        %v3148 = vadd.f32 %v3106, 1.0
        %v3149 = vadd.f32 %v3108, 1.0
        %v3150 = vadd.f32 %v3110, 1.0
        %v3151 = vadd.f32 %v3112, 1.0
        %v3152 = vadd.f32 %v3114, 1.0
        %v3153 = vadd.f32 %v3116, 1.0
        %v3154 = vadd.f32 %v3118, 1.0
        %v3155 = vadd.f32 %v3120, 1.0
        %v3156 = vadd.f32 %v3122, 1.0
        %v3157 = vadd.f32 %v3124, 1.0
        %v3158 = vadd.f32 %v3126, 1.0
        %v3159 = vrcp.pop %v3127
        %v3160 = vmul.f32 1.0, %v3159
        %v3161 = vrcp.pop %v3128
        %v3162 = vmul.f32 1.0, %v3161
        %v3163 = vrcp.pop %v3129
        %v3164 = vmul.f32 1.0, %v3163
        %v3165 = vrcp.pop %v3130
        %v3166 = vmul.f32 1.0, %v3165
        %v3167 = vrcp.pop %v3131
        %v3168 = vmul.f32 1.0, %v3167
        %v3169 = vrcp.pop %v3132
        %v3170 = vmul.f32 1.0, %v3169
        %v3171 = vrcp.pop %v3133
        %v3172 = vmul.f32 1.0, %v3171
        %v3173 = vrcp.pop %v3134
        %v3174 = vmul.f32 1.0, %v3173
        %v3175 = vrcp.pop %v3135
        %v3176 = vmul.f32 1.0, %v3175
        %v3177 = vrcp.pop %v3136
        %v3178 = vmul.f32 1.0, %v3177
        %v3179 = vrcp.pop %v3137
        %v3180 = vmul.f32 1.0, %v3179
        %v3181 = vrcp.pop %v3138
        %v3182 = vmul.f32 1.0, %v3181
        %v3183 = vrcp.pop %v3139
        %v3184 = vmul.f32 1.0, %v3183
        %v3185 = vrcp.pop %v3140
        %v3186 = vmul.f32 1.0, %v3185
        %v3187 = vrcp.pop %v3141
        %v3188 = vmul.f32 1.0, %v3187
        %v3189 = vrcp.pop %v3142
        %v3190 = vmul.f32 1.0, %v3189
        %v3191 = vrcp.pop %v3143
        %v3192 = vmul.f32 1.0, %v3191
        %v3193 = vrcp.pop %v3144
        %v3194 = vmul.f32 1.0, %v3193
        %v3195 = vrcp.pop %v3145
        %v3196 = vmul.f32 1.0, %v3195
        %v3197 = vrcp.pop %v3146
        %v3198 = vmul.f32 1.0, %v3197
        %v3199 = vrcp.pop %v3147
        %v3200 = vmul.f32 1.0, %v3199
        %v3201 = vrcp.pop %v3148
        %v3202 = vmul.f32 1.0, %v3201
        %v3203 = vrcp.pop %v3149
        %v3204 = vmul.f32 1.0, %v3203
        %v3205 = vrcp.pop %v3150
        %v3206 = vmul.f32 1.0, %v3205
        %v3207 = vrcp.pop %v3151
        %v3208 = vmul.f32 1.0, %v3207
        %v3209 = vrcp.pop %v3152
        %v3210 = vmul.f32 1.0, %v3209
        %v3211 = vrcp.pop %v3153
        %v3212 = vmul.f32 1.0, %v3211
        %v3213 = vrcp.pop %v3154
        %v3214 = vmul.f32 1.0, %v3213
        %v3215 = vrcp.pop %v3155
        %v3216 = vmul.f32 1.0, %v3215
        %v3217 = vrcp.pop %v3156
        %v3218 = vmul.f32 1.0, %v3217
        %v3219 = vrcp.pop %v3157
        %v3220 = vmul.f32 1.0, %v3219
        %v3221 = vrcp.pop %v3158
        %v3222 = vmul.f32 1.0, %v3221
        %v3223 = vmul.f32 %v2999, %v3160
        %v3224 = vmul.f32 %v3000, %v3162
        %v3225 = vmul.f32 %v3001, %v3164
        %v3226 = vmul.f32 %v3002, %v3166
        %v3227 = vmul.f32 %v3003, %v3168
        %v3228 = vmul.f32 %v3004, %v3170
        %v3229 = vmul.f32 %v3005, %v3172
        %v3230 = vmul.f32 %v3006, %v3174
        %v3231 = vmul.f32 %v3007, %v3176
        %v3232 = vmul.f32 %v3008, %v3178
        %v3233 = vmul.f32 %v3009, %v3180
        %v3234 = vmul.f32 %v3010, %v3182
        %v3235 = vmul.f32 %v3011, %v3184
        %v3236 = vmul.f32 %v3012, %v3186
        %v3237 = vmul.f32 %v3013, %v3188
        %v3238 = vmul.f32 %v3014, %v3190
        %v3239 = vmul.f32 %v3015, %v3192
        %v3240 = vmul.f32 %v3016, %v3194
        %v3241 = vmul.f32 %v3017, %v3196
        %v3242 = vmul.f32 %v3018, %v3198
        %v3243 = vmul.f32 %v3019, %v3200
        %v3244 = vmul.f32 %v3020, %v3202
        %v3245 = vmul.f32 %v3021, %v3204
        %v3246 = vmul.f32 %v3022, %v3206
        %v3247 = vmul.f32 %v3023, %v3208
        %v3248 = vmul.f32 %v3024, %v3210
        %v3249 = vmul.f32 %v3025, %v3212
        %v3250 = vmul.f32 %v3026, %v3214
        %v3251 = vmul.f32 %v3027, %v3216
        %v3252 = vmul.f32 %v3028, %v3218
        %v3253 = vmul.f32 %v3029, %v3220
        %v3254 = vmul.f32 %v3030, %v3222
        %v3255 = vpack.c.bf16 %v3224, %v3223
        %v3256 = vpack.c.bf16 %v3226, %v3225
        %v3257 = vpack.c.bf16 %v3228, %v3227
        %v3258 = vpack.c.bf16 %v3230, %v3229
        %v3259 = vpack.c.bf16 %v3232, %v3231
        %v3260 = vpack.c.bf16 %v3234, %v3233
        %v3261 = vpack.c.bf16 %v3236, %v3235
        %v3262 = vpack.c.bf16 %v3238, %v3237
        %v3263 = vpack.c.bf16 %v3240, %v3239
        %v3264 = vpack.c.bf16 %v3242, %v3241
        %v3265 = vpack.c.bf16 %v3244, %v3243
        %v3266 = vpack.c.bf16 %v3246, %v3245
        %v3267 = vpack.c.bf16 %v3248, %v3247
        %v3268 = vpack.c.bf16 %v3250, %v3249
        %v3269 = vpack.c.bf16 %v3252, %v3251
        %v3270 = vpack.c.bf16 %v3254, %v3253
        %v3287 = vunpack.c.l.b16 %v3255
        %v3288 = vunpack.c.h.b16 %v3255
        %v3289 = vunpack.c.l.b16 %v3256
        %v3290 = vunpack.c.h.b16 %v3256
        %v3291 = vunpack.c.l.b16 %v3257
        %v3292 = vunpack.c.h.b16 %v3257
        %v3293 = vunpack.c.l.b16 %v3258
        %v3294 = vunpack.c.h.b16 %v3258
        %v3295 = vunpack.c.l.b16 %v3259
        %v3296 = vunpack.c.h.b16 %v3259
        %v3297 = vunpack.c.l.b16 %v3260
        %v3298 = vunpack.c.h.b16 %v3260
        %v3299 = vunpack.c.l.b16 %v3261
        %v3300 = vunpack.c.h.b16 %v3261
        %v3301 = vunpack.c.l.b16 %v3262
        %v3302 = vunpack.c.h.b16 %v3262
        %v3303 = vunpack.c.l.b16 %v3263
        %v3304 = vunpack.c.h.b16 %v3263
        %v3305 = vunpack.c.l.b16 %v3264
        %v3306 = vunpack.c.h.b16 %v3264
        %v3307 = vunpack.c.l.b16 %v3265
        %v3308 = vunpack.c.h.b16 %v3265
        %v3309 = vunpack.c.l.b16 %v3266
        %v3310 = vunpack.c.h.b16 %v3266
        %v3311 = vunpack.c.l.b16 %v3267
        %v3312 = vunpack.c.h.b16 %v3267
        %v3313 = vunpack.c.l.b16 %v3268
        %v3314 = vunpack.c.h.b16 %v3268
        %v3315 = vunpack.c.l.b16 %v3269
        %v3316 = vunpack.c.h.b16 %v3269
        %v3317 = vunpack.c.l.b16 %v3270
        %v3318 = vunpack.c.h.b16 %v3270
        %v3319 = vpack.c.b16 %v3287, %v3287
        %v3320 = vpack.c.b16 %v3288, %v3288
        %v3321 = vpack.c.b16 %v3289, %v3289
        %v3322 = vpack.c.b16 %v3290, %v3290
        %v3323 = vpack.c.b16 %v3291, %v3291
        %v3324 = vpack.c.b16 %v3292, %v3292
        %v3325 = vpack.c.b16 %v3293, %v3293
        %v3326 = vpack.c.b16 %v3294, %v3294
        %v3327 = vpack.c.b16 %v3295, %v3295
        %v3328 = vpack.c.b16 %v3296, %v3296
        %v3329 = vpack.c.b16 %v3297, %v3297
        %v3330 = vpack.c.b16 %v3298, %v3298
        %v3331 = vpack.c.b16 %v3299, %v3299
        %v3332 = vpack.c.b16 %v3300, %v3300
        %v3333 = vpack.c.b16 %v3301, %v3301
        %v3334 = vpack.c.b16 %v3302, %v3302
        %v3335 = vpack.c.b16 %v3303, %v3303
        %v3336 = vpack.c.b16 %v3304, %v3304
        %v3337 = vpack.c.b16 %v3305, %v3305
        %v3338 = vpack.c.b16 %v3306, %v3306
        %v3339 = vpack.c.b16 %v3307, %v3307
        %v3340 = vpack.c.b16 %v3308, %v3308
        %v3341 = vpack.c.b16 %v3309, %v3309
        %v3342 = vpack.c.b16 %v3310, %v3310
        %v3343 = vpack.c.b16 %v3311, %v3311
        %v3344 = vpack.c.b16 %v3312, %v3312
        %v3345 = vpack.c.b16 %v3313, %v3313
        %v3346 = vpack.c.b16 %v3314, %v3314
        %v3347 = vpack.c.b16 %v3315, %v3315
        %v3348 = vpack.c.b16 %v3316, %v3316
        %v3349 = vpack.c.b16 %v3317, %v3317
        %v3350 = vpack.c.b16 %v3318, %v3318
        %3383 = vst [vmem:[%s250] sm:$0xf] %v3319
        %3384 = vst [vmem:[%s250 + $0x4] sm:$0xf] %v3320
        %3385 = vst [vmem:[%s250 + $0x8] sm:$0xf] %v3321
        %3386 = vst [vmem:[%s250 + $0xc] sm:$0xf] %v3322
        %3387 = vst [vmem:[%s250 + $0x10] sm:$0xf] %v3323
        %3388 = vst [vmem:[%s250 + $0x14] sm:$0xf] %v3324
        %3389 = vst [vmem:[%s250 + $0x18] sm:$0xf] %v3325
        %3390 = vst [vmem:[%s250 + $0x1c] sm:$0xf] %v3326
        %3391 = vst [vmem:[%s250 + $0x20] sm:$0xf] %v3327
        %3392 = vst [vmem:[%s250 + $0x24] sm:$0xf] %v3328
        %3393 = vst [vmem:[%s250 + $0x28] sm:$0xf] %v3329
        %3394 = vst [vmem:[%s250 + $0x2c] sm:$0xf] %v3330
        %3395 = vst [vmem:[%s250 + $0x30] sm:$0xf] %v3331
        %3396 = vst [vmem:[%s250 + $0x34] sm:$0xf] %v3332
        %3397 = vst [vmem:[%s250 + $0x38] sm:$0xf] %v3333
        %3398 = vst [vmem:[%s250 + $0x3c] sm:$0xf] %v3334
        %3399 = vst [vmem:[%s250 + $0x40] sm:$0xf] %v3335
        %3400 = vst [vmem:[%s250 + $0x44] sm:$0xf] %v3336
        %3401 = vst [vmem:[%s250 + $0x48] sm:$0xf] %v3337
        %3402 = vst [vmem:[%s250 + $0x4c] sm:$0xf] %v3338
        %3403 = vst [vmem:[%s250 + $0x50] sm:$0xf] %v3339
        %3404 = vst [vmem:[%s250 + $0x54] sm:$0xf] %v3340
        %3405 = vst [vmem:[%s250 + $0x58] sm:$0xf] %v3341
        %3406 = vst [vmem:[%s250 + $0x5c] sm:$0xf] %v3342
        %3407 = vst [vmem:[%s250 + $0x60] sm:$0xf] %v3343
        %3408 = vst [vmem:[%s250 + $0x64] sm:$0xf] %v3344
        %3409 = vst [vmem:[%s250 + $0x68] sm:$0xf] %v3345
        %3410 = vst [vmem:[%s250 + $0x6c] sm:$0xf] %v3346
        %3411 = vst [vmem:[%s250 + $0x70] sm:$0xf] %v3347
        %3412 = vst [vmem:[%s250 + $0x74] sm:$0xf] %v3348
        %3413 = vst [vmem:[%s250 + $0x78] sm:$0xf] %v3349
        %3414 = vst [vmem:[%s250 + $0x7c] sm:$0xf] %v3350
        %s3415 = sand.u32 %s140, 1
        %s3416 = scalar_lea.sflag [#allocation3], %s3415
        %s3417 = sand.u32 %s140, 1
        %s3418 = smul.addr %s3417, 128
        %s3419 = scalar_lea.vmem [#allocation2], %s3418
        // Predicated region
        $region37: #{tpu_custom_call.1} parent=35 // pred_check
          %p3420 = pneg %p150
        $region38: #{tpu_custom_call.1} parent=35 // pred_check_branch
          %3422 = sbr.rel (%p3420) target = $region40
        $region39: #{tpu_custom_call.1} parent=35 // pred_region
          %s3423 = smul.u32 16, %s23
          %s3425 = ssub.s32 2048, 2048
          %3426 = vsyncadd %s3416, %s3425
          %s3427 = smul.addr %s3423, 2
          %s3428 = smul.addr %s22, 32
          %s3429 = sadd.s32 %s3427, %s3428
          %s3430 = smul.addr %s3429, 64
          %s3431 = scalar_lea.hbm %s4, %s3430
          %s3432 = sshll.u32 %s3419, 4
          %s3433 = int_to_ptr.vmem [resolvable:$true] %s3432
          %3438 = dma.vmem_to_hbm [thread:$0]  %s3433, 2048, %s3431, %s3416, 64, 64, 4
        $region40: #{tpu_custom_call.1} parent=35 // pred_fallthru
          _
      $region36: #{tpu_custom_call.1} parent=5 // pred_fallthru
        _
      %p3439 = scmp.le.s32.totalorder 2, %s13
      // Predicated region
      $region41: #{tpu_custom_call.1} parent=5 // pred_check
        %p3440 = pneg %p3439
      $region42: #{tpu_custom_call.1} parent=5 // pred_check_branch
        %3442 = sbr.rel (%p3440) target = $region44
      $region43: #{tpu_custom_call.1} parent=5 // pred_region
        %s3443 = ssub.s32 %s13, 2
        // Predicated region
        $region45: #{tpu_custom_call.1} parent=43 // pred_check
          %p3444 = pneg %p156
        $region46: #{tpu_custom_call.1} parent=43 // pred_check_branch
          %3446 = sbr.rel (%p3444) target = $region48
        $region47: #{tpu_custom_call.1} parent=43 // pred_region
          %s3447 = sand.u32 %s141, 1
          %s3448 = scalar_lea.sflag [#allocation3], %s3447
          %s3449 = sand.u32 %s141, 1
          %s3450 = smul.addr %s3449, 128
          %s3451 = scalar_lea.vmem [#allocation2], %s3450
          %3452 = dma.done %s3448, 2048
        $region48: #{tpu_custom_call.1} parent=43 // pred_fallthru
          _
      $region44: #{tpu_custom_call.1} parent=5 // pred_fallthru
        _
    $region6: #{tpu_custom_call.1} parent=1 // loop_footer
      %s17 = sadd.s32 1, %s13
    $region7: #{tpu_custom_call.1} parent=1 // loop_footer_branch
      %12 = sbr.rel target = $region3
    $region8: #{tpu_custom_call.1} parent=1 // loop_exit
      _
    %3453 = vsyncpa [#allocation3], 1
    %s3454 = scalar_lea.sflag [#allocation3], 1
    %3455 = vsyncpa %s3454, 1

</llo_original>
